<compile_context>
chip_gen: v7x
topology: tpu7x:2x2x1
jax: 0.10.0
libtpu: 0.0.40
codegen_flags: <defaults>
</compile_context>

<pallas_src>
import functools

import jax
import jax.numpy as jnp
from jax.experimental import pallas as pl
from jax.experimental.pallas import tpu as pltpu

_EPS = 1e-5
_LANE = 128


def _round_up(x, m):
    return ((x + m - 1) // m) * m


# --------------------------------------------------------------------------- #
# Fused kernel: trunk at grid step 0 (h -> VMEM scratch), fc tile every step  #
# --------------------------------------------------------------------------- #
def _decoder_kernel(x_ref, proj_w_ref, proj_b_ref, conv_w_ref, conv_b_ref,
                    bn_g_ref, bn_b_ref, fc_w_ref, fc_b_ref,
                    out_ref, h_ref, *, L):
    j = pl.program_id(0)

    @pl.when(j == 0)
    def _trunk():
        BL = x_ref.shape[0]
        Hp = proj_w_ref.shape[1]
        num_blocks = conv_w_ref.shape[0]

        x = x_ref[...]                                         # (BL, Ep) bf16

        # ---- proj: Conv1d(E->H, k=1) == pointwise matmul (bf16 in, f32 acc) ----
        h = jnp.dot(x, proj_w_ref[...],
                    preferred_element_type=jnp.float32) + proj_b_ref[...]   # (BL, Hp) f32

        # ---- boundary masks for the k=3 conv: materialized ONCE, reused 6x ----
        lidx = jax.lax.broadcasted_iota(jnp.int32, (BL, 1), 0) % L
        m_prev = jnp.broadcast_to(lidx >= 1, (BL, Hp)).astype(jnp.float32)
        m_next = jnp.broadcast_to(lidx <= (L - 2), (BL, Hp)).astype(jnp.float32)

        def conv_k3(xin, w_bf16, b):
            # fused taps [x[l-1], x[l], x[l+1]] on channels -> one (BL, 3Hp)@(3Hp, Hp) matmul
            xp = pltpu.roll(xin, shift=1, axis=0) * m_prev
            xn = pltpu.roll(xin, shift=BL - 1, axis=0) * m_next
            xs = jnp.concatenate([xp, xin, xn], axis=-1).astype(jnp.bfloat16)
            return jnp.dot(xs, w_bf16, preferred_element_type=jnp.float32) + b

        def batchnorm(xin, gamma, beta):
            # training-mode BN, two-pass (x-mean)^2 variance (no cancellation)
            mean = jnp.mean(xin, axis=0, keepdims=True)
            centered = xin - mean
            var = jnp.mean(centered * centered, axis=0, keepdims=True)
            scale = gamma * jax.lax.rsqrt(var + _EPS)
            return centered * scale + beta

        # ---- residual blocks (num_blocks is a trace-time constant) ----
        for i in range(num_blocks):
            identity = h
            y = conv_k3(h, conv_w_ref[i, 0], conv_b_ref[i, 0])
            y = jnp.maximum(batchnorm(y, bn_g_ref[i, 0], bn_b_ref[i, 0]), 0.0)
            y = conv_k3(y, conv_w_ref[i, 1], conv_b_ref[i, 1])
            y = batchnorm(y, bn_g_ref[i, 1], bn_b_ref[i, 1])
            h = jnp.maximum(y + identity, 0.0)

        h_ref[...] = h.astype(h_ref.dtype)                     # persists across grid steps

    # ---- fc Linear tile: h (bf16, VMEM-resident) @ fc_w[:, tile] ----
    out_ref[...] = (jnp.dot(h_ref[...], fc_w_ref[...],
                            preferred_element_type=jnp.float32)
                    + fc_b_ref[...]).astype(out_ref.dtype)


# --------------------------------------------------------------------------- #
# Wrapper                                                                     #
# --------------------------------------------------------------------------- #
def resnet_decoder_forward(ids, emb, proj_w, proj_b, conv_w, conv_b,
                           bn_g, bn_b, fc_w, fc_b):
    B, L = ids.shape
    V, E = emb.shape
    H = proj_w.shape[1]
    NB = conv_w.shape[0]
    BL = B * L                       # NOTE: BL is never row-padded -> BN stats stay exact.

    Ep = _round_up(E, _LANE)
    Hp = _round_up(H, _LANE)
    Vp = _round_up(V, _LANE)
    TILE_V = min(2048, Vp)
    Vp = _round_up(Vp, TILE_V)
    n_vt = Vp // TILE_V

    def pad_to(x, shape):
        return jnp.pad(x, [(0, s - d) for d, s in zip(x.shape, shape)])

    # ---- embedding gather in the wrapper (no vocab-sized table in VMEM) ----
    ids_flat = ids.reshape(BL).astype(jnp.int32)
    emb_p = pad_to(emb, (V, Ep)).astype(jnp.bfloat16)
    x_gath = jnp.take(emb_p, ids_flat, axis=0)                 # (BL, Ep) bf16

    # ---- pad / reshape / cast parameters (lane-dense, bf16 MXU operands) ----
    proj_w_p = pad_to(proj_w, (Ep, Hp)).astype(jnp.bfloat16)
    proj_b_p = pad_to(proj_b, (1, Hp)).astype(jnp.float32)
    # conv_w: (NB, 2, 3, H, H) [k, cin, cout] -> fused-tap layout (NB, 2, 3*Hp, Hp)
    conv_w_p = pad_to(conv_w, (NB, 2, 3, Hp, Hp)).reshape(NB, 2, 3 * Hp, Hp)
    conv_w_p = conv_w_p.astype(jnp.bfloat16)
    conv_b_p = pad_to(conv_b.reshape(NB, 2, 1, H), (NB, 2, 1, Hp)).astype(jnp.float32)
    bn_g_p   = pad_to(bn_g.reshape(NB, 2, 1, H), (NB, 2, 1, Hp)).astype(jnp.float32)
    bn_b_p   = pad_to(bn_b.reshape(NB, 2, 1, H), (NB, 2, 1, Hp)).astype(jnp.float32)
    fc_w_p   = pad_to(fc_w, (Hp, Vp)).astype(jnp.bfloat16)
    fc_b_p   = pad_to(fc_b, (1, Vp)).astype(jnp.float32)

    # ---- VMEM budget from actual block footprint (not default scoped limit) ----
    bytes_const = (BL * Ep * 2 + Ep * Hp * 2 + 8 * Hp * 4
                   + NB * 2 * 3 * Hp * Hp * 2 + 3 * NB * 2 * 8 * Hp * 4)
    bytes_tiled = 2 * (Hp * TILE_V * 2 + 8 * TILE_V * 4 + BL * TILE_V * 4)
    bytes_live = BL * Hp * 2 + 6 * BL * Hp * 4 + 2 * BL * 3 * Hp * 4
    vmem_limit = int(min(64 * 2**20,
                         max(32 * 2**20, 2 * (bytes_const + bytes_tiled + bytes_live))))

    cost = pl.CostEstimate(
        flops=2 * BL * (Ep * Hp + NB * 2 * 3 * Hp * Hp + Hp * Vp),
        transcendentals=NB * 2 * Hp,
        bytes_accessed=(BL * Ep * 2 + Ep * Hp * 2
                        + NB * 2 * (3 * Hp * Hp * 2 + 3 * Hp * 4)
                        + Hp * Vp * 2 + Vp * 4 + BL * Vp * 4),
    )

    def _run(use_single_buffer):
        pm = pl.Buffered(buffer_count=1) if use_single_buffer else None

        def const_spec(shape):
            nd = len(shape)
            idx = lambda j, nd=nd: (0,) * nd
            if pm is None:
                return pl.BlockSpec(shape, idx)
            return pl.BlockSpec(shape, idx, pipeline_mode=pm)

        call = pl.pallas_call(
            functools.partial(_decoder_kernel, L=L),
            out_shape=jax.ShapeDtypeStruct((BL, Vp), jnp.float32),
            grid_spec=pltpu.PrefetchScalarGridSpec(
                num_scalar_prefetch=0,
                grid=(n_vt,),
                in_specs=[const_spec((BL, Ep)),
                          const_spec((Ep, Hp)),
                          const_spec((1, Hp)),
                          const_spec((NB, 2, 3 * Hp, Hp)),
                          const_spec((NB, 2, 1, Hp)),
                          const_spec((NB, 2, 1, Hp)),
                          const_spec((NB, 2, 1, Hp)),
                          pl.BlockSpec((Hp, TILE_V), lambda j: (0, j)),
                          pl.BlockSpec((1, TILE_V), lambda j: (0, j))],
                out_specs=pl.BlockSpec((BL, TILE_V), lambda j: (0, j)),
                scratch_shapes=[pltpu.VMEM((BL, Hp), jnp.bfloat16)]),
            compiler_params=pltpu.CompilerParams(
                dimension_semantics=("arbitrary",),   # step 0 produces h used by later steps
                vmem_limit_bytes=vmem_limit),
            cost_estimate=cost,
        )
        out = call(x_gath, proj_w_p, proj_b_p, conv_w_p, conv_b_p,
                   bn_g_p, bn_b_p, fc_w_p, fc_b_p)
        return jax.block_until_ready(out)

    try:
        logits_flat = _run(True)
    except Exception:
        # pipeline_mode=pl.Buffered(1) unsupported on this jax build -> default buffering.
        logits_flat = _run(False)

    return logits_flat.reshape(B, L, Vp)[:, :, :V]


if __name__ == "__main__":
    # small shapes consistent with the module: embed_dim=64, hidden_dim=64, 3 blocks
    B, L = 2, 8
    V, E, H, NB = 50, 64, 64, 3

    key = jax.random.PRNGKey(0)
    ks = jax.random.split(key, 10)

    ids = jax.random.randint(ks[0], (B, L), 0, V, dtype=jnp.int32)

    # parameter shapes follow the PyTorch __init__:
    #   Embedding(V,E), Conv1d(E,H,1), 3x[Conv1d(H,H,3,p=1)+BN]x2, Linear(H,V)
    # conv weights stored as (k, cin, cout) = PyTorch weight[co, ci, k] transposed.
    emb    = 0.1 * jax.random.normal(ks[1], (V, E), jnp.float32)
    proj_w = 0.1 * jax.random.normal(ks[2], (E, H), jnp.float32)
    proj_b = 0.1 * jax.random.normal(ks[3], (1, H), jnp.float32)
    conv_w = 0.1 * jax.random.normal(ks[4], (NB, 2, 3, H, H), jnp.float32)
    conv_b = 0.1 * jax.random.normal(ks[5], (NB, 2, H), jnp.float32)
    bn_g   = 1.0 + 0.1 * jax.random.normal(ks[6], (NB, 2, H), jnp.float32)
    bn_b   = 0.1 * jax.random.normal(ks[7], (NB, 2, H), jnp.float32)
    fc_w   = 0.1 * jax.random.normal(ks[8], (H, V), jnp.float32)
    fc_b   = 0.1 * jax.random.normal(ks[9], (1, V), jnp.float32)

    logits = resnet_decoder_forward(ids, emb, proj_w, proj_b, conv_w, conv_b,
                                    bn_g, bn_b, fc_w, fc_b)
    jax.block_until_ready(logits)
    assert logits.shape == (B, L, V) and logits.dtype == jnp.float32
    assert bool(jnp.isfinite(logits).all())
    print("KERNEL_OK")
</pallas_src>

<mosaic_0001>
module attributes {stable_mosaic.version = 11 : i64} {
  func.func @_decoder_kernel(%arg0: i32, %arg1: memref<16x128xbf16, #tpu.memory_space<vmem>>, %arg2: memref<128x128xbf16, #tpu.memory_space<vmem>>, %arg3: memref<1x128xf32, #tpu.memory_space<vmem>>, %arg4: memref<3x2x384x128xbf16, #tpu.memory_space<vmem>>, %arg5: memref<3x2x1x128xf32, #tpu.memory_space<vmem>>, %arg6: memref<3x2x1x128xf32, #tpu.memory_space<vmem>>, %arg7: memref<3x2x1x128xf32, #tpu.memory_space<vmem>>, %arg8: memref<128x128xbf16, #tpu.memory_space<vmem>>, %arg9: memref<1x128xf32, #tpu.memory_space<vmem>>, %arg10: memref<16x128xf32, #tpu.memory_space<vmem>>, %arg11: memref<16x128xbf16, #tpu.memory_space<vmem>>) attributes {dimension_semantics = [#tpu.dimension_semantics<arbitrary>], iteration_bounds = array<i64: 1>, scalar_prefetch = 0 : i64, scratch_operands = 1 : i64, tpu.core_type = #tpu.core_type<tc>, window_params = [{pipeline_mode = #tpu.pipeline_mode<synchronous>, transform_indices = @transform_0, window_bounds = array<i64: 16, 128>}, {pipeline_mode = #tpu.pipeline_mode<synchronous>, transform_indices = @transform_1, window_bounds = array<i64: 128, 128>}, {pipeline_mode = #tpu.pipeline_mode<synchronous>, transform_indices = @transform_2, window_bounds = array<i64: 1, 128>}, {pipeline_mode = #tpu.pipeline_mode<synchronous>, transform_indices = @transform_3, window_bounds = array<i64: 3, 2, 384, 128>}, {pipeline_mode = #tpu.pipeline_mode<synchronous>, transform_indices = @transform_4, window_bounds = array<i64: 3, 2, 1, 128>}, {pipeline_mode = #tpu.pipeline_mode<synchronous>, transform_indices = @transform_5, window_bounds = array<i64: 3, 2, 1, 128>}, {pipeline_mode = #tpu.pipeline_mode<synchronous>, transform_indices = @transform_6, window_bounds = array<i64: 3, 2, 1, 128>}, {transform_indices = @transform_7, window_bounds = array<i64: 128, 128>}, {transform_indices = @transform_8, window_bounds = array<i64: 1, 128>}, {transform_indices = @transform_9, window_bounds = array<i64: 16, 128>}]} {
    %c0_i32 = arith.constant 0 : i32
    %0 = arith.cmpi eq, %arg0, %c0_i32 : i32
    %1 = arith.extui %0 : i1 to i32
    %c0_i32_0 = arith.constant 0 : i32
    %2 = arith.cmpi ne, %1, %c0_i32_0 : i32
    scf.if %2 {
      %c0_8 = arith.constant 0 : index
      %c0_9 = arith.constant 0 : index
      %10 = vector.load %arg1[%c0_8, %c0_9] : memref<16x128xbf16, #tpu.memory_space<vmem>>, vector<16x128xbf16>
      %c0_10 = arith.constant 0 : index
      %c0_11 = arith.constant 0 : index
      %11 = vector.load %arg2[%c0_10, %c0_11] : memref<128x128xbf16, #tpu.memory_space<vmem>>, vector<128x128xbf16>
      %cst_12 = arith.constant dense<0.000000e+00> : vector<16x128xf32>
      %12 = tpu.matmul %10, %11, %cst_12 {dimension_numbers = #tpu.dot_dimension_numbers<[1], [0], [0], [1], [0, 0, 1, 1], [], []>} : vector<16x128xbf16>, vector<128x128xbf16>, vector<16x128xf32> -> vector<16x128xf32>
      %c0_13 = arith.constant 0 : index
      %c0_14 = arith.constant 0 : index
      %13 = vector.load %arg3[%c0_13, %c0_14] : memref<1x128xf32, #tpu.memory_space<vmem>>, vector<1x128xf32>
      %14 = vector.broadcast %13 : vector<1x128xf32> to vector<16x128xf32>
      %15 = arith.addf %12, %14 : vector<16x128xf32>
      %16 = tpu.iota {dimensions = array<i32: 0>} : vector<16x1xi32>
      %c8_i32 = arith.constant 8 : i32
      %c0_i32_15 = arith.constant 0 : i32
      %17 = arith.cmpi eq, %c8_i32, %c0_i32_15 : i32
      %c1_i32 = arith.constant 1 : i32
      %18 = arith.select %17, %c1_i32, %c8_i32 : i32
      %19 = vector.broadcast %18 : i32 to vector<16x1xi32>
      %20 = arith.remsi %16, %19 : vector<16x1xi32>
      %c0_i32_16 = arith.constant 0 : i32
      %21 = vector.broadcast %c0_i32_16 : i32 to vector<16x1xi32>
      %22 = arith.cmpi ne, %20, %21 : vector<16x1xi32>
      %c0_i32_17 = arith.constant 0 : i32
      %23 = vector.broadcast %c0_i32_17 : i32 to vector<16x1xi32>
      %24 = arith.cmpi slt, %20, %23 : vector<16x1xi32>
      %c0_i32_18 = arith.constant 0 : i32
      %25 = arith.cmpi slt, %18, %c0_i32_18 : i32
      %26 = vector.broadcast %25 : i1 to vector<16x1xi1>
      %27 = vector.broadcast %26 : vector<16x1xi1> to vector<16x1xi1>
      %28 = arith.xori %24, %27 : vector<16x1xi1>
      %29 = arith.andi %28, %22 : vector<16x1xi1>
      %30 = vector.broadcast %18 : i32 to vector<16x1xi32>
      %31 = arith.addi %20, %30 : vector<16x1xi32>
      %32 = arith.select %29, %31, %20 : vector<16x1xi1>, vector<16x1xi32>
      %c1_i32_19 = arith.constant 1 : i32
      %33 = vector.broadcast %c1_i32_19 : i32 to vector<16x1xi32>
      %34 = arith.cmpi sge, %32, %33 : vector<16x1xi32>
      %35 = vector.shape_cast %34 : vector<16x1xi1> to vector<16x1xi1>
      %36 = vector.broadcast %35 : vector<16x1xi1> to vector<16x128xi1>
      %37 = arith.extui %36 : vector<16x128xi1> to vector<16x128xi32>
      %38 = arith.sitofp %37 : vector<16x128xi32> to vector<16x128xf32>
      %c6_i32 = arith.constant 6 : i32
      %39 = vector.broadcast %c6_i32 : i32 to vector<16x1xi32>
      %40 = arith.cmpi sle, %32, %39 : vector<16x1xi32>
      %41 = vector.shape_cast %40 : vector<16x1xi1> to vector<16x1xi1>
      %42 = vector.broadcast %41 : vector<16x1xi1> to vector<16x128xi1>
      %43 = arith.extui %42 : vector<16x128xi1> to vector<16x128xi32>
      %44 = arith.sitofp %43 : vector<16x128xi32> to vector<16x128xf32>
      %c0_20 = arith.constant 0 : index
      %c0_21 = arith.constant 0 : index
      %c0_22 = arith.constant 0 : index
      %c0_23 = arith.constant 0 : index
      %45 = vector.load %arg4[%c0_20, %c0_21, %c0_22, %c0_23] : memref<3x2x384x128xbf16, #tpu.memory_space<vmem>>, vector<1x1x384x128xbf16>
      %46 = vector.shape_cast %45 : vector<1x1x384x128xbf16> to vector<384x128xbf16>
      %c0_24 = arith.constant 0 : index
      %c0_25 = arith.constant 0 : index
      %c0_26 = arith.constant 0 : index
      %c0_27 = arith.constant 0 : index
      %47 = vector.load %arg5[%c0_24, %c0_25, %c0_26, %c0_27] : memref<3x2x1x128xf32, #tpu.memory_space<vmem>>, vector<1x1x1x128xf32>
      %48 = vector.shape_cast %47 : vector<1x1x1x128xf32> to vector<1x128xf32>
      %c1_i32_28 = arith.constant 1 : i32
      %49 = tpu.dynamic_rotate %15 by %c1_i32_28 dim 0 : vector<16x128xf32>, i32 -> vector<16x128xf32>
      %50 = arith.mulf %49, %38 : vector<16x128xf32>
      %c15_i32 = arith.constant 15 : i32
      %51 = tpu.dynamic_rotate %15 by %c15_i32 dim 0 : vector<16x128xf32>, i32 -> vector<16x128xf32>
      %52 = arith.mulf %51, %44 : vector<16x128xf32>
      %53 = tpu.concatenate %50, %15, %52 in 1 : vector<16x128xf32>, vector<16x128xf32>, vector<16x128xf32> -> vector<16x384xf32>
      %54 = arith.truncf %53 : vector<16x384xf32> to vector<16x384xbf16>
      %cst_29 = arith.constant dense<0.000000e+00> : vector<16x128xf32>
      %55 = tpu.matmul %54, %46, %cst_29 {dimension_numbers = #tpu.dot_dimension_numbers<[1], [0], [0], [1], [0, 0, 1, 1], [], []>} : vector<16x384xbf16>, vector<384x128xbf16>, vector<16x128xf32> -> vector<16x128xf32>
      %56 = vector.broadcast %48 : vector<1x128xf32> to vector<16x128xf32>
      %57 = arith.addf %55, %56 : vector<16x128xf32>
      %c0_30 = arith.constant 0 : index
      %c0_31 = arith.constant 0 : index
      %c0_32 = arith.constant 0 : index
      %c0_33 = arith.constant 0 : index
      %58 = vector.load %arg6[%c0_30, %c0_31, %c0_32, %c0_33] : memref<3x2x1x128xf32, #tpu.memory_space<vmem>>, vector<1x1x1x128xf32>
      %59 = vector.shape_cast %58 : vector<1x1x1x128xf32> to vector<1x128xf32>
      %c0_34 = arith.constant 0 : index
      %c0_35 = arith.constant 0 : index
      %c0_36 = arith.constant 0 : index
      %c0_37 = arith.constant 0 : index
      %60 = vector.load %arg7[%c0_34, %c0_35, %c0_36, %c0_37] : memref<3x2x1x128xf32, #tpu.memory_space<vmem>>, vector<1x1x1x128xf32>
      %61 = vector.shape_cast %60 : vector<1x1x1x128xf32> to vector<1x128xf32>
      %cst_38 = arith.constant dense<0.000000e+00> : vector<128xf32>
      %62 = vector.multi_reduction <add>, %57, %cst_38 [0] : vector<16x128xf32> to vector<128xf32>
      %63 = vector.shape_cast %62 : vector<128xf32> to vector<1x128xf32>
      %cst_39 = arith.constant 1.600000e+01 : f32
      %64 = vector.broadcast %cst_39 : f32 to vector<1x128xf32>
      %65 = arith.divf %63, %64 : vector<1x128xf32>
      %66 = vector.broadcast %65 : vector<1x128xf32> to vector<16x128xf32>
      %67 = arith.subf %57, %66 : vector<16x128xf32>
      %68 = arith.mulf %67, %67 : vector<16x128xf32>
      %cst_40 = arith.constant dense<0.000000e+00> : vector<128xf32>
      %69 = vector.multi_reduction <add>, %68, %cst_40 [0] : vector<16x128xf32> to vector<128xf32>
      %70 = vector.shape_cast %69 : vector<128xf32> to vector<1x128xf32>
      %cst_41 = arith.constant 1.600000e+01 : f32
      %71 = vector.broadcast %cst_41 : f32 to vector<1x128xf32>
      %72 = arith.divf %70, %71 : vector<1x128xf32>
      %cst_42 = arith.constant 9.99999974E-6 : f32
      %73 = vector.broadcast %cst_42 : f32 to vector<1x128xf32>
      %74 = arith.addf %72, %73 : vector<1x128xf32>
      %75 = math.rsqrt %74 : vector<1x128xf32>
      %76 = arith.mulf %59, %75 : vector<1x128xf32>
      %77 = vector.broadcast %76 : vector<1x128xf32> to vector<16x128xf32>
      %78 = arith.mulf %67, %77 : vector<16x128xf32>
      %79 = vector.broadcast %61 : vector<1x128xf32> to vector<16x128xf32>
      %80 = arith.addf %78, %79 : vector<16x128xf32>
      %cst_43 = arith.constant 0.000000e+00 : f32
      %81 = vector.broadcast %cst_43 : f32 to vector<16x128xf32>
      %82 = arith.maximumf %80, %81 : vector<16x128xf32>
      %c0_44 = arith.constant 0 : index
      %c1 = arith.constant 1 : index
      %c0_45 = arith.constant 0 : index
      %c0_46 = arith.constant 0 : index
      %83 = vector.load %arg4[%c0_44, %c1, %c0_45, %c0_46] : memref<3x2x384x128xbf16, #tpu.memory_space<vmem>>, vector<1x1x384x128xbf16>
      %84 = vector.shape_cast %83 : vector<1x1x384x128xbf16> to vector<384x128xbf16>
      %c0_47 = arith.constant 0 : index
      %c1_48 = arith.constant 1 : index
      %c0_49 = arith.constant 0 : index
      %c0_50 = arith.constant 0 : index
      %85 = vector.load %arg5[%c0_47, %c1_48, %c0_49, %c0_50] : memref<3x2x1x128xf32, #tpu.memory_space<vmem>>, vector<1x1x1x128xf32>
      %86 = vector.shape_cast %85 : vector<1x1x1x128xf32> to vector<1x128xf32>
      %c1_i32_51 = arith.constant 1 : i32
      %87 = tpu.dynamic_rotate %82 by %c1_i32_51 dim 0 : vector<16x128xf32>, i32 -> vector<16x128xf32>
      %88 = arith.mulf %87, %38 : vector<16x128xf32>
      %c15_i32_52 = arith.constant 15 : i32
      %89 = tpu.dynamic_rotate %82 by %c15_i32_52 dim 0 : vector<16x128xf32>, i32 -> vector<16x128xf32>
      %90 = arith.mulf %89, %44 : vector<16x128xf32>
      %91 = tpu.concatenate %88, %82, %90 in 1 : vector<16x128xf32>, vector<16x128xf32>, vector<16x128xf32> -> vector<16x384xf32>
      %92 = arith.truncf %91 : vector<16x384xf32> to vector<16x384xbf16>
      %cst_53 = arith.constant dense<0.000000e+00> : vector<16x128xf32>
      %93 = tpu.matmul %92, %84, %cst_53 {dimension_numbers = #tpu.dot_dimension_numbers<[1], [0], [0], [1], [0, 0, 1, 1], [], []>} : vector<16x384xbf16>, vector<384x128xbf16>, vector<16x128xf32> -> vector<16x128xf32>
      %94 = vector.broadcast %86 : vector<1x128xf32> to vector<16x128xf32>
      %95 = arith.addf %93, %94 : vector<16x128xf32>
      %c0_54 = arith.constant 0 : index
      %c1_55 = arith.constant 1 : index
      %c0_56 = arith.constant 0 : index
      %c0_57 = arith.constant 0 : index
      %96 = vector.load %arg6[%c0_54, %c1_55, %c0_56, %c0_57] : memref<3x2x1x128xf32, #tpu.memory_space<vmem>>, vector<1x1x1x128xf32>
      %97 = vector.shape_cast %96 : vector<1x1x1x128xf32> to vector<1x128xf32>
      %c0_58 = arith.constant 0 : index
      %c1_59 = arith.constant 1 : index
      %c0_60 = arith.constant 0 : index
      %c0_61 = arith.constant 0 : index
      %98 = vector.load %arg7[%c0_58, %c1_59, %c0_60, %c0_61] : memref<3x2x1x128xf32, #tpu.memory_space<vmem>>, vector<1x1x1x128xf32>
      %99 = vector.shape_cast %98 : vector<1x1x1x128xf32> to vector<1x128xf32>
      %cst_62 = arith.constant dense<0.000000e+00> : vector<128xf32>
      %100 = vector.multi_reduction <add>, %95, %cst_62 [0] : vector<16x128xf32> to vector<128xf32>
      %101 = vector.shape_cast %100 : vector<128xf32> to vector<1x128xf32>
      %cst_63 = arith.constant 1.600000e+01 : f32
      %102 = vector.broadcast %cst_63 : f32 to vector<1x128xf32>
      %103 = arith.divf %101, %102 : vector<1x128xf32>
      %104 = vector.broadcast %103 : vector<1x128xf32> to vector<16x128xf32>
      %105 = arith.subf %95, %104 : vector<16x128xf32>
      %106 = arith.mulf %105, %105 : vector<16x128xf32>
      %cst_64 = arith.constant dense<0.000000e+00> : vector<128xf32>
      %107 = vector.multi_reduction <add>, %106, %cst_64 [0] : vector<16x128xf32> to vector<128xf32>
      %108 = vector.shape_cast %107 : vector<128xf32> to vector<1x128xf32>
      %cst_65 = arith.constant 1.600000e+01 : f32
      %109 = vector.broadcast %cst_65 : f32 to vector<1x128xf32>
      %110 = arith.divf %108, %109 : vector<1x128xf32>
      %cst_66 = arith.constant 9.99999974E-6 : f32
      %111 = vector.broadcast %cst_66 : f32 to vector<1x128xf32>
      %112 = arith.addf %110, %111 : vector<1x128xf32>
      %113 = math.rsqrt %112 : vector<1x128xf32>
      %114 = arith.mulf %97, %113 : vector<1x128xf32>
      %115 = vector.broadcast %114 : vector<1x128xf32> to vector<16x128xf32>
      %116 = arith.mulf %105, %115 : vector<16x128xf32>
      %117 = vector.broadcast %99 : vector<1x128xf32> to vector<16x128xf32>
      %118 = arith.addf %116, %117 : vector<16x128xf32>
      %119 = arith.addf %118, %15 : vector<16x128xf32>
      %cst_67 = arith.constant 0.000000e+00 : f32
      %120 = vector.broadcast %cst_67 : f32 to vector<16x128xf32>
      %121 = arith.maximumf %119, %120 : vector<16x128xf32>
      %c1_68 = arith.constant 1 : index
      %c0_69 = arith.constant 0 : index
      %c0_70 = arith.constant 0 : index
      %c0_71 = arith.constant 0 : index
      %122 = vector.load %arg4[%c1_68, %c0_69, %c0_70, %c0_71] : memref<3x2x384x128xbf16, #tpu.memory_space<vmem>>, vector<1x1x384x128xbf16>
      %123 = vector.shape_cast %122 : vector<1x1x384x128xbf16> to vector<384x128xbf16>
      %c1_72 = arith.constant 1 : index
      %c0_73 = arith.constant 0 : index
      %c0_74 = arith.constant 0 : index
      %c0_75 = arith.constant 0 : index
      %124 = vector.load %arg5[%c1_72, %c0_73, %c0_74, %c0_75] : memref<3x2x1x128xf32, #tpu.memory_space<vmem>>, vector<1x1x1x128xf32>
      %125 = vector.shape_cast %124 : vector<1x1x1x128xf32> to vector<1x128xf32>
      %c1_i32_76 = arith.constant 1 : i32
      %126 = tpu.dynamic_rotate %121 by %c1_i32_76 dim 0 : vector<16x128xf32>, i32 -> vector<16x128xf32>
      %127 = arith.mulf %126, %38 : vector<16x128xf32>
      %c15_i32_77 = arith.constant 15 : i32
      %128 = tpu.dynamic_rotate %121 by %c15_i32_77 dim 0 : vector<16x128xf32>, i32 -> vector<16x128xf32>
      %129 = arith.mulf %128, %44 : vector<16x128xf32>
      %130 = tpu.concatenate %127, %121, %129 in 1 : vector<16x128xf32>, vector<16x128xf32>, vector<16x128xf32> -> vector<16x384xf32>
      %131 = arith.truncf %130 : vector<16x384xf32> to vector<16x384xbf16>
      %cst_78 = arith.constant dense<0.000000e+00> : vector<16x128xf32>
      %132 = tpu.matmul %131, %123, %cst_78 {dimension_numbers = #tpu.dot_dimension_numbers<[1], [0], [0], [1], [0, 0, 1, 1], [], []>} : vector<16x384xbf16>, vector<384x128xbf16>, vector<16x128xf32> -> vector<16x128xf32>
      %133 = vector.broadcast %125 : vector<1x128xf32> to vector<16x128xf32>
      %134 = arith.addf %132, %133 : vector<16x128xf32>
      %c1_79 = arith.constant 1 : index
      %c0_80 = arith.constant 0 : index
      %c0_81 = arith.constant 0 : index
      %c0_82 = arith.constant 0 : index
      %135 = vector.load %arg6[%c1_79, %c0_80, %c0_81, %c0_82] : memref<3x2x1x128xf32, #tpu.memory_space<vmem>>, vector<1x1x1x128xf32>
      %136 = vector.shape_cast %135 : vector<1x1x1x128xf32> to vector<1x128xf32>
      %c1_83 = arith.constant 1 : index
      %c0_84 = arith.constant 0 : index
      %c0_85 = arith.constant 0 : index
      %c0_86 = arith.constant 0 : index
      %137 = vector.load %arg7[%c1_83, %c0_84, %c0_85, %c0_86] : memref<3x2x1x128xf32, #tpu.memory_space<vmem>>, vector<1x1x1x128xf32>
      %138 = vector.shape_cast %137 : vector<1x1x1x128xf32> to vector<1x128xf32>
      %cst_87 = arith.constant dense<0.000000e+00> : vector<128xf32>
      %139 = vector.multi_reduction <add>, %134, %cst_87 [0] : vector<16x128xf32> to vector<128xf32>
      %140 = vector.shape_cast %139 : vector<128xf32> to vector<1x128xf32>
      %cst_88 = arith.constant 1.600000e+01 : f32
      %141 = vector.broadcast %cst_88 : f32 to vector<1x128xf32>
      %142 = arith.divf %140, %141 : vector<1x128xf32>
      %143 = vector.broadcast %142 : vector<1x128xf32> to vector<16x128xf32>
      %144 = arith.subf %134, %143 : vector<16x128xf32>
      %145 = arith.mulf %144, %144 : vector<16x128xf32>
      %cst_89 = arith.constant dense<0.000000e+00> : vector<128xf32>
      %146 = vector.multi_reduction <add>, %145, %cst_89 [0] : vector<16x128xf32> to vector<128xf32>
      %147 = vector.shape_cast %146 : vector<128xf32> to vector<1x128xf32>
      %cst_90 = arith.constant 1.600000e+01 : f32
      %148 = vector.broadcast %cst_90 : f32 to vector<1x128xf32>
      %149 = arith.divf %147, %148 : vector<1x128xf32>
      %cst_91 = arith.constant 9.99999974E-6 : f32
      %150 = vector.broadcast %cst_91 : f32 to vector<1x128xf32>
      %151 = arith.addf %149, %150 : vector<1x128xf32>
      %152 = math.rsqrt %151 : vector<1x128xf32>
      %153 = arith.mulf %136, %152 : vector<1x128xf32>
      %154 = vector.broadcast %153 : vector<1x128xf32> to vector<16x128xf32>
      %155 = arith.mulf %144, %154 : vector<16x128xf32>
      %156 = vector.broadcast %138 : vector<1x128xf32> to vector<16x128xf32>
      %157 = arith.addf %155, %156 : vector<16x128xf32>
      %cst_92 = arith.constant 0.000000e+00 : f32
      %158 = vector.broadcast %cst_92 : f32 to vector<16x128xf32>
      %159 = arith.maximumf %157, %158 : vector<16x128xf32>
      %c1_93 = arith.constant 1 : index
      %c1_94 = arith.constant 1 : index
      %c0_95 = arith.constant 0 : index
      %c0_96 = arith.constant 0 : index
      %160 = vector.load %arg4[%c1_93, %c1_94, %c0_95, %c0_96] : memref<3x2x384x128xbf16, #tpu.memory_space<vmem>>, vector<1x1x384x128xbf16>
      %161 = vector.shape_cast %160 : vector<1x1x384x128xbf16> to vector<384x128xbf16>
      %c1_97 = arith.constant 1 : index
      %c1_98 = arith.constant 1 : index
      %c0_99 = arith.constant 0 : index
      %c0_100 = arith.constant 0 : index
      %162 = vector.load %arg5[%c1_97, %c1_98, %c0_99, %c0_100] : memref<3x2x1x128xf32, #tpu.memory_space<vmem>>, vector<1x1x1x128xf32>
      %163 = vector.shape_cast %162 : vector<1x1x1x128xf32> to vector<1x128xf32>
      %c1_i32_101 = arith.constant 1 : i32
      %164 = tpu.dynamic_rotate %159 by %c1_i32_101 dim 0 : vector<16x128xf32>, i32 -> vector<16x128xf32>
      %165 = arith.mulf %164, %38 : vector<16x128xf32>
      %c15_i32_102 = arith.constant 15 : i32
      %166 = tpu.dynamic_rotate %159 by %c15_i32_102 dim 0 : vector<16x128xf32>, i32 -> vector<16x128xf32>
      %167 = arith.mulf %166, %44 : vector<16x128xf32>
      %168 = tpu.concatenate %165, %159, %167 in 1 : vector<16x128xf32>, vector<16x128xf32>, vector<16x128xf32> -> vector<16x384xf32>
      %169 = arith.truncf %168 : vector<16x384xf32> to vector<16x384xbf16>
      %cst_103 = arith.constant dense<0.000000e+00> : vector<16x128xf32>
      %170 = tpu.matmul %169, %161, %cst_103 {dimension_numbers = #tpu.dot_dimension_numbers<[1], [0], [0], [1], [0, 0, 1, 1], [], []>} : vector<16x384xbf16>, vector<384x128xbf16>, vector<16x128xf32> -> vector<16x128xf32>
      %171 = vector.broadcast %163 : vector<1x128xf32> to vector<16x128xf32>
      %172 = arith.addf %170, %171 : vector<16x128xf32>
      %c1_104 = arith.constant 1 : index
      %c1_105 = arith.constant 1 : index
      %c0_106 = arith.constant 0 : index
      %c0_107 = arith.constant 0 : index
      %173 = vector.load %arg6[%c1_104, %c1_105, %c0_106, %c0_107] : memref<3x2x1x128xf32, #tpu.memory_space<vmem>>, vector<1x1x1x128xf32>
      %174 = vector.shape_cast %173 : vector<1x1x1x128xf32> to vector<1x128xf32>
      %c1_108 = arith.constant 1 : index
      %c1_109 = arith.constant 1 : index
      %c0_110 = arith.constant 0 : index
      %c0_111 = arith.constant 0 : index
      %175 = vector.load %arg7[%c1_108, %c1_109, %c0_110, %c0_111] : memref<3x2x1x128xf32, #tpu.memory_space<vmem>>, vector<1x1x1x128xf32>
      %176 = vector.shape_cast %175 : vector<1x1x1x128xf32> to vector<1x128xf32>
      %cst_112 = arith.constant dense<0.000000e+00> : vector<128xf32>
      %177 = vector.multi_reduction <add>, %172, %cst_112 [0] : vector<16x128xf32> to vector<128xf32>
      %178 = vector.shape_cast %177 : vector<128xf32> to vector<1x128xf32>
      %cst_113 = arith.constant 1.600000e+01 : f32
      %179 = vector.broadcast %cst_113 : f32 to vector<1x128xf32>
      %180 = arith.divf %178, %179 : vector<1x128xf32>
      %181 = vector.broadcast %180 : vector<1x128xf32> to vector<16x128xf32>
      %182 = arith.subf %172, %181 : vector<16x128xf32>
      %183 = arith.mulf %182, %182 : vector<16x128xf32>
      %cst_114 = arith.constant dense<0.000000e+00> : vector<128xf32>
      %184 = vector.multi_reduction <add>, %183, %cst_114 [0] : vector<16x128xf32> to vector<128xf32>
      %185 = vector.shape_cast %184 : vector<128xf32> to vector<1x128xf32>
      %cst_115 = arith.constant 1.600000e+01 : f32
      %186 = vector.broadcast %cst_115 : f32 to vector<1x128xf32>
      %187 = arith.divf %185, %186 : vector<1x128xf32>
      %cst_116 = arith.constant 9.99999974E-6 : f32
      %188 = vector.broadcast %cst_116 : f32 to vector<1x128xf32>
      %189 = arith.addf %187, %188 : vector<1x128xf32>
      %190 = math.rsqrt %189 : vector<1x128xf32>
      %191 = arith.mulf %174, %190 : vector<1x128xf32>
      %192 = vector.broadcast %191 : vector<1x128xf32> to vector<16x128xf32>
      %193 = arith.mulf %182, %192 : vector<16x128xf32>
      %194 = vector.broadcast %176 : vector<1x128xf32> to vector<16x128xf32>
      %195 = arith.addf %193, %194 : vector<16x128xf32>
      %196 = arith.addf %195, %121 : vector<16x128xf32>
      %cst_117 = arith.constant 0.000000e+00 : f32
      %197 = vector.broadcast %cst_117 : f32 to vector<16x128xf32>
      %198 = arith.maximumf %196, %197 : vector<16x128xf32>
      %c2 = arith.constant 2 : index
      %c0_118 = arith.constant 0 : index
      %c0_119 = arith.constant 0 : index
      %c0_120 = arith.constant 0 : index
      %199 = vector.load %arg4[%c2, %c0_118, %c0_119, %c0_120] : memref<3x2x384x128xbf16, #tpu.memory_space<vmem>>, vector<1x1x384x128xbf16>
      %200 = vector.shape_cast %199 : vector<1x1x384x128xbf16> to vector<384x128xbf16>
      %c2_121 = arith.constant 2 : index
      %c0_122 = arith.constant 0 : index
      %c0_123 = arith.constant 0 : index
      %c0_124 = arith.constant 0 : index
      %201 = vector.load %arg5[%c2_121, %c0_122, %c0_123, %c0_124] : memref<3x2x1x128xf32, #tpu.memory_space<vmem>>, vector<1x1x1x128xf32>
      %202 = vector.shape_cast %201 : vector<1x1x1x128xf32> to vector<1x128xf32>
      %c1_i32_125 = arith.constant 1 : i32
      %203 = tpu.dynamic_rotate %198 by %c1_i32_125 dim 0 : vector<16x128xf32>, i32 -> vector<16x128xf32>
      %204 = arith.mulf %203, %38 : vector<16x128xf32>
      %c15_i32_126 = arith.constant 15 : i32
      %205 = tpu.dynamic_rotate %198 by %c15_i32_126 dim 0 : vector<16x128xf32>, i32 -> vector<16x128xf32>
      %206 = arith.mulf %205, %44 : vector<16x128xf32>
      %207 = tpu.concatenate %204, %198, %206 in 1 : vector<16x128xf32>, vector<16x128xf32>, vector<16x128xf32> -> vector<16x384xf32>
      %208 = arith.truncf %207 : vector<16x384xf32> to vector<16x384xbf16>
      %cst_127 = arith.constant dense<0.000000e+00> : vector<16x128xf32>
      %209 = tpu.matmul %208, %200, %cst_127 {dimension_numbers = #tpu.dot_dimension_numbers<[1], [0], [0], [1], [0, 0, 1, 1], [], []>} : vector<16x384xbf16>, vector<384x128xbf16>, vector<16x128xf32> -> vector<16x128xf32>
      %210 = vector.broadcast %202 : vector<1x128xf32> to vector<16x128xf32>
      %211 = arith.addf %209, %210 : vector<16x128xf32>
      %c2_128 = arith.constant 2 : index
      %c0_129 = arith.constant 0 : index
      %c0_130 = arith.constant 0 : index
      %c0_131 = arith.constant 0 : index
      %212 = vector.load %arg6[%c2_128, %c0_129, %c0_130, %c0_131] : memref<3x2x1x128xf32, #tpu.memory_space<vmem>>, vector<1x1x1x128xf32>
      %213 = vector.shape_cast %212 : vector<1x1x1x128xf32> to vector<1x128xf32>
      %c2_132 = arith.constant 2 : index
      %c0_133 = arith.constant 0 : index
      %c0_134 = arith.constant 0 : index
      %c0_135 = arith.constant 0 : index
      %214 = vector.load %arg7[%c2_132, %c0_133, %c0_134, %c0_135] : memref<3x2x1x128xf32, #tpu.memory_space<vmem>>, vector<1x1x1x128xf32>
      %215 = vector.shape_cast %214 : vector<1x1x1x128xf32> to vector<1x128xf32>
      %cst_136 = arith.constant dense<0.000000e+00> : vector<128xf32>
      %216 = vector.multi_reduction <add>, %211, %cst_136 [0] : vector<16x128xf32> to vector<128xf32>
      %217 = vector.shape_cast %216 : vector<128xf32> to vector<1x128xf32>
      %cst_137 = arith.constant 1.600000e+01 : f32
      %218 = vector.broadcast %cst_137 : f32 to vector<1x128xf32>
      %219 = arith.divf %217, %218 : vector<1x128xf32>
      %220 = vector.broadcast %219 : vector<1x128xf32> to vector<16x128xf32>
      %221 = arith.subf %211, %220 : vector<16x128xf32>
      %222 = arith.mulf %221, %221 : vector<16x128xf32>
      %cst_138 = arith.constant dense<0.000000e+00> : vector<128xf32>
      %223 = vector.multi_reduction <add>, %222, %cst_138 [0] : vector<16x128xf32> to vector<128xf32>
      %224 = vector.shape_cast %223 : vector<128xf32> to vector<1x128xf32>
      %cst_139 = arith.constant 1.600000e+01 : f32
      %225 = vector.broadcast %cst_139 : f32 to vector<1x128xf32>
      %226 = arith.divf %224, %225 : vector<1x128xf32>
      %cst_140 = arith.constant 9.99999974E-6 : f32
      %227 = vector.broadcast %cst_140 : f32 to vector<1x128xf32>
      %228 = arith.addf %226, %227 : vector<1x128xf32>
      %229 = math.rsqrt %228 : vector<1x128xf32>
      %230 = arith.mulf %213, %229 : vector<1x128xf32>
      %231 = vector.broadcast %230 : vector<1x128xf32> to vector<16x128xf32>
      %232 = arith.mulf %221, %231 : vector<16x128xf32>
      %233 = vector.broadcast %215 : vector<1x128xf32> to vector<16x128xf32>
      %234 = arith.addf %232, %233 : vector<16x128xf32>
      %cst_141 = arith.constant 0.000000e+00 : f32
      %235 = vector.broadcast %cst_141 : f32 to vector<16x128xf32>
      %236 = arith.maximumf %234, %235 : vector<16x128xf32>
      %c2_142 = arith.constant 2 : index
      %c1_143 = arith.constant 1 : index
      %c0_144 = arith.constant 0 : index
      %c0_145 = arith.constant 0 : index
      %237 = vector.load %arg4[%c2_142, %c1_143, %c0_144, %c0_145] : memref<3x2x384x128xbf16, #tpu.memory_space<vmem>>, vector<1x1x384x128xbf16>
      %238 = vector.shape_cast %237 : vector<1x1x384x128xbf16> to vector<384x128xbf16>
      %c2_146 = arith.constant 2 : index
      %c1_147 = arith.constant 1 : index
      %c0_148 = arith.constant 0 : index
      %c0_149 = arith.constant 0 : index
      %239 = vector.load %arg5[%c2_146, %c1_147, %c0_148, %c0_149] : memref<3x2x1x128xf32, #tpu.memory_space<vmem>>, vector<1x1x1x128xf32>
      %240 = vector.shape_cast %239 : vector<1x1x1x128xf32> to vector<1x128xf32>
      %c1_i32_150 = arith.constant 1 : i32
      %241 = tpu.dynamic_rotate %236 by %c1_i32_150 dim 0 : vector<16x128xf32>, i32 -> vector<16x128xf32>
      %242 = arith.mulf %241, %38 : vector<16x128xf32>
      %c15_i32_151 = arith.constant 15 : i32
      %243 = tpu.dynamic_rotate %236 by %c15_i32_151 dim 0 : vector<16x128xf32>, i32 -> vector<16x128xf32>
      %244 = arith.mulf %243, %44 : vector<16x128xf32>
      %245 = tpu.concatenate %242, %236, %244 in 1 : vector<16x128xf32>, vector<16x128xf32>, vector<16x128xf32> -> vector<16x384xf32>
      %246 = arith.truncf %245 : vector<16x384xf32> to vector<16x384xbf16>
      %cst_152 = arith.constant dense<0.000000e+00> : vector<16x128xf32>
      %247 = tpu.matmul %246, %238, %cst_152 {dimension_numbers = #tpu.dot_dimension_numbers<[1], [0], [0], [1], [0, 0, 1, 1], [], []>} : vector<16x384xbf16>, vector<384x128xbf16>, vector<16x128xf32> -> vector<16x128xf32>
      %248 = vector.broadcast %240 : vector<1x128xf32> to vector<16x128xf32>
      %249 = arith.addf %247, %248 : vector<16x128xf32>
      %c2_153 = arith.constant 2 : index
      %c1_154 = arith.constant 1 : index
      %c0_155 = arith.constant 0 : index
      %c0_156 = arith.constant 0 : index
      %250 = vector.load %arg6[%c2_153, %c1_154, %c0_155, %c0_156] : memref<3x2x1x128xf32, #tpu.memory_space<vmem>>, vector<1x1x1x128xf32>
      %251 = vector.shape_cast %250 : vector<1x1x1x128xf32> to vector<1x128xf32>
      %c2_157 = arith.constant 2 : index
      %c1_158 = arith.constant 1 : index
      %c0_159 = arith.constant 0 : index
      %c0_160 = arith.constant 0 : index
      %252 = vector.load %arg7[%c2_157, %c1_158, %c0_159, %c0_160] : memref<3x2x1x128xf32, #tpu.memory_space<vmem>>, vector<1x1x1x128xf32>
      %253 = vector.shape_cast %252 : vector<1x1x1x128xf32> to vector<1x128xf32>
      %cst_161 = arith.constant dense<0.000000e+00> : vector<128xf32>
      %254 = vector.multi_reduction <add>, %249, %cst_161 [0] : vector<16x128xf32> to vector<128xf32>
      %255 = vector.shape_cast %254 : vector<128xf32> to vector<1x128xf32>
      %cst_162 = arith.constant 1.600000e+01 : f32
      %256 = vector.broadcast %cst_162 : f32 to vector<1x128xf32>
      %257 = arith.divf %255, %256 : vector<1x128xf32>
      %258 = vector.broadcast %257 : vector<1x128xf32> to vector<16x128xf32>
      %259 = arith.subf %249, %258 : vector<16x128xf32>
      %260 = arith.mulf %259, %259 : vector<16x128xf32>
      %cst_163 = arith.constant dense<0.000000e+00> : vector<128xf32>
      %261 = vector.multi_reduction <add>, %260, %cst_163 [0] : vector<16x128xf32> to vector<128xf32>
      %262 = vector.shape_cast %261 : vector<128xf32> to vector<1x128xf32>
      %cst_164 = arith.constant 1.600000e+01 : f32
      %263 = vector.broadcast %cst_164 : f32 to vector<1x128xf32>
      %264 = arith.divf %262, %263 : vector<1x128xf32>
      %cst_165 = arith.constant 9.99999974E-6 : f32
      %265 = vector.broadcast %cst_165 : f32 to vector<1x128xf32>
      %266 = arith.addf %264, %265 : vector<1x128xf32>
      %267 = math.rsqrt %266 : vector<1x128xf32>
      %268 = arith.mulf %251, %267 : vector<1x128xf32>
      %269 = vector.broadcast %268 : vector<1x128xf32> to vector<16x128xf32>
      %270 = arith.mulf %259, %269 : vector<16x128xf32>
      %271 = vector.broadcast %253 : vector<1x128xf32> to vector<16x128xf32>
      %272 = arith.addf %270, %271 : vector<16x128xf32>
      %273 = arith.addf %272, %198 : vector<16x128xf32>
      %cst_166 = arith.constant 0.000000e+00 : f32
      %274 = vector.broadcast %cst_166 : f32 to vector<16x128xf32>
      %275 = arith.maximumf %273, %274 : vector<16x128xf32>
      %276 = arith.truncf %275 : vector<16x128xf32> to vector<16x128xbf16>
      %c0_167 = arith.constant 0 : index
      %c0_168 = arith.constant 0 : index
      %277 = vector.load %arg11[%c0_167, %c0_168] : memref<16x128xbf16, #tpu.memory_space<vmem>>, vector<16x128xbf16>
      tpu.vector_store %arg11[%c0_167, %c0_168], %276 {strides = array<i32>} : memref<16x128xbf16, #tpu.memory_space<vmem>>, vector<16x128xbf16>,
    } else {
    }
    %c0 = arith.constant 0 : index
    %c0_1 = arith.constant 0 : index
    %3 = vector.load %arg11[%c0, %c0_1] : memref<16x128xbf16, #tpu.memory_space<vmem>>, vector<16x128xbf16>
    %c0_2 = arith.constant 0 : index
    %c0_3 = arith.constant 0 : index
    %4 = vector.load %arg8[%c0_2, %c0_3] : memref<128x128xbf16, #tpu.memory_space<vmem>>, vector<128x128xbf16>
    %cst = arith.constant dense<0.000000e+00> : vector<16x128xf32>
    %5 = tpu.matmul %3, %4, %cst {dimension_numbers = #tpu.dot_dimension_numbers<[1], [0], [0], [1], [0, 0, 1, 1], [], []>} : vector<16x128xbf16>, vector<128x128xbf16>, vector<16x128xf32> -> vector<16x128xf32>
    %c0_4 = arith.constant 0 : index
    %c0_5 = arith.constant 0 : index
    %6 = vector.load %arg9[%c0_4, %c0_5] : memref<1x128xf32, #tpu.memory_space<vmem>>, vector<1x128xf32>
    %7 = vector.broadcast %6 : vector<1x128xf32> to vector<16x128xf32>
    %8 = arith.addf %5, %7 : vector<16x128xf32>
    %c0_6 = arith.constant 0 : index
    %c0_7 = arith.constant 0 : index
    %9 = vector.load %arg10[%c0_6, %c0_7] : memref<16x128xf32, #tpu.memory_space<vmem>>, vector<16x128xf32>
    tpu.vector_store %arg10[%c0_6, %c0_7], %8 {strides = array<i32>} : memref<16x128xf32, #tpu.memory_space<vmem>>, vector<16x128xf32>,
    return
  }
  func.func @transform_0(%arg0: i32) -> (i32, i32) {
    %c0_i32 = arith.constant 0 : i32
    %c0_i32_0 = arith.constant 0 : i32
    %c0_i32_1 = arith.constant 0 : i32
    return %c0_i32, %c0_i32_0 : i32, i32
  }
  func.func @transform_1(%arg0: i32) -> (i32, i32) {
    %c0_i32 = arith.constant 0 : i32
    %c0_i32_0 = arith.constant 0 : i32
    %c0_i32_1 = arith.constant 0 : i32
    return %c0_i32, %c0_i32_0 : i32, i32
  }
  func.func @transform_2(%arg0: i32) -> (i32, i32) {
    %c0_i32 = arith.constant 0 : i32
    %c0_i32_0 = arith.constant 0 : i32
    %c0_i32_1 = arith.constant 0 : i32
    return %c0_i32, %c0_i32_0 : i32, i32
  }
  func.func @transform_3(%arg0: i32) -> (i32, i32, i32, i32) {
    %c0_i32 = arith.constant 0 : i32
    %c0_i32_0 = arith.constant 0 : i32
    %c0_i32_1 = arith.constant 0 : i32
    %c0_i32_2 = arith.constant 0 : i32
    %c0_i32_3 = arith.constant 0 : i32
    return %c0_i32, %c0_i32_0, %c0_i32_1, %c0_i32_2 : i32, i32, i32, i32
  }
  func.func @transform_4(%arg0: i32) -> (i32, i32, i32, i32) {
    %c0_i32 = arith.constant 0 : i32
    %c0_i32_0 = arith.constant 0 : i32
    %c0_i32_1 = arith.constant 0 : i32
    %c0_i32_2 = arith.constant 0 : i32
    %c0_i32_3 = arith.constant 0 : i32
    return %c0_i32, %c0_i32_0, %c0_i32_1, %c0_i32_2 : i32, i32, i32, i32
  }
  func.func @transform_5(%arg0: i32) -> (i32, i32, i32, i32) {
    %c0_i32 = arith.constant 0 : i32
    %c0_i32_0 = arith.constant 0 : i32
    %c0_i32_1 = arith.constant 0 : i32
    %c0_i32_2 = arith.constant 0 : i32
    %c0_i32_3 = arith.constant 0 : i32
    return %c0_i32, %c0_i32_0, %c0_i32_1, %c0_i32_2 : i32, i32, i32, i32
  }
  func.func @transform_6(%arg0: i32) -> (i32, i32, i32, i32) {
    %c0_i32 = arith.constant 0 : i32
    %c0_i32_0 = arith.constant 0 : i32
    %c0_i32_1 = arith.constant 0 : i32
    %c0_i32_2 = arith.constant 0 : i32
    %c0_i32_3 = arith.constant 0 : i32
    return %c0_i32, %c0_i32_0, %c0_i32_1, %c0_i32_2 : i32, i32, i32, i32
  }
  func.func @transform_7(%arg0: i32) -> (i32, i32) {
    %c0_i32 = arith.constant 0 : i32
    %c0_i32_0 = arith.constant 0 : i32
    return %c0_i32, %arg0 : i32, i32
  }
  func.func @transform_8(%arg0: i32) -> (i32, i32) {
    %c0_i32 = arith.constant 0 : i32
    %c0_i32_0 = arith.constant 0 : i32
    return %c0_i32, %arg0 : i32, i32
  }
  func.func @transform_9(%arg0: i32) -> (i32, i32) {
    %c0_i32 = arith.constant 0 : i32
    %c0_i32_0 = arith.constant 0 : i32
    return %c0_i32, %arg0 : i32, i32
  }
}

module attributes {stable_mosaic.version = 11 : i64} {
  func.func @_decoder_kernel(%arg0: i32, %arg1: memref<16x128xbf16, #tpu.memory_space<vmem>>, %arg2: memref<128x128xbf16, #tpu.memory_space<vmem>>, %arg3: memref<1x128xf32, #tpu.memory_space<vmem>>, %arg4: memref<3x2x384x128xbf16, #tpu.memory_space<vmem>>, %arg5: memref<3x2x1x128xf32, #tpu.memory_space<vmem>>, %arg6: memref<3x2x1x128xf32, #tpu.memory_space<vmem>>, %arg7: memref<3x2x1x128xf32, #tpu.memory_space<vmem>>, %arg8: memref<128x128xbf16, #tpu.memory_space<vmem>>, %arg9: memref<1x128xf32, #tpu.memory_space<vmem>>, %arg10: memref<16x128xf32, #tpu.memory_space<vmem>>, %arg11: memref<16x128xbf16, #tpu.memory_space<vmem>>) attributes {dimension_semantics = [#tpu.dimension_semantics<arbitrary>], iteration_bounds = array<i64: 1>, scalar_prefetch = 0 : i64, scratch_operands = 1 : i64, tpu.core_type = #tpu.core_type<tc>, window_params = [{pipeline_mode = #tpu.pipeline_mode<synchronous>, transform_indices = @transform_0, window_bounds = array<i64: 16, 128>}, {pipeline_mode = #tpu.pipeline_mode<synchronous>, transform_indices = @transform_1, window_bounds = array<i64: 128, 128>}, {pipeline_mode = #tpu.pipeline_mode<synchronous>, transform_indices = @transform_2, window_bounds = array<i64: 1, 128>}, {pipeline_mode = #tpu.pipeline_mode<synchronous>, transform_indices = @transform_3, window_bounds = array<i64: 3, 2, 384, 128>}, {pipeline_mode = #tpu.pipeline_mode<synchronous>, transform_indices = @transform_4, window_bounds = array<i64: 3, 2, 1, 128>}, {pipeline_mode = #tpu.pipeline_mode<synchronous>, transform_indices = @transform_5, window_bounds = array<i64: 3, 2, 1, 128>}, {pipeline_mode = #tpu.pipeline_mode<synchronous>, transform_indices = @transform_6, window_bounds = array<i64: 3, 2, 1, 128>}, {transform_indices = @transform_7, window_bounds = array<i64: 128, 128>}, {transform_indices = @transform_8, window_bounds = array<i64: 1, 128>}, {transform_indices = @transform_9, window_bounds = array<i64: 16, 128>}]} {
    %c0_i32 = arith.constant 0 : i32
    %0 = arith.cmpi eq, %arg0, %c0_i32 : i32
    %1 = arith.extui %0 : i1 to i32
    %c0_i32_0 = arith.constant 0 : i32
    %2 = arith.cmpi ne, %1, %c0_i32_0 : i32
    scf.if %2 {
      %c0_8 = arith.constant 0 : index
      %c0_9 = arith.constant 0 : index
      %10 = vector.load %arg1[%c0_8, %c0_9] : memref<16x128xbf16, #tpu.memory_space<vmem>>, vector<16x128xbf16>
      %c0_10 = arith.constant 0 : index
      %c0_11 = arith.constant 0 : index
      %11 = vector.load %arg2[%c0_10, %c0_11] : memref<128x128xbf16, #tpu.memory_space<vmem>>, vector<128x128xbf16>
      %cst_12 = arith.constant dense<0.000000e+00> : vector<16x128xf32>
      %12 = tpu.matmul %10, %11, %cst_12 {dimension_numbers = #tpu.dot_dimension_numbers<[1], [0], [0], [1], [0, 0, 1, 1], [], []>} : vector<16x128xbf16>, vector<128x128xbf16>, vector<16x128xf32> -> vector<16x128xf32>
      %c0_13 = arith.constant 0 : index
      %c0_14 = arith.constant 0 : index
      %13 = vector.load %arg3[%c0_13, %c0_14] : memref<1x128xf32, #tpu.memory_space<vmem>>, vector<1x128xf32>
      %14 = vector.broadcast %13 : vector<1x128xf32> to vector<16x128xf32>
      %15 = arith.addf %12, %14 : vector<16x128xf32>
      %16 = tpu.iota {dimensions = array<i32: 0>} : vector<16x1xi32>
      %c8_i32 = arith.constant 8 : i32
      %c0_i32_15 = arith.constant 0 : i32
      %17 = arith.cmpi eq, %c8_i32, %c0_i32_15 : i32
      %c1_i32 = arith.constant 1 : i32
      %18 = arith.select %17, %c1_i32, %c8_i32 : i32
      %19 = vector.broadcast %18 : i32 to vector<16x1xi32>
      %20 = arith.remsi %16, %19 : vector<16x1xi32>
      %c0_i32_16 = arith.constant 0 : i32
      %21 = vector.broadcast %c0_i32_16 : i32 to vector<16x1xi32>
      %22 = arith.cmpi ne, %20, %21 : vector<16x1xi32>
      %c0_i32_17 = arith.constant 0 : i32
      %23 = vector.broadcast %c0_i32_17 : i32 to vector<16x1xi32>
      %24 = arith.cmpi slt, %20, %23 : vector<16x1xi32>
      %c0_i32_18 = arith.constant 0 : i32
      %25 = arith.cmpi slt, %18, %c0_i32_18 : i32
      %26 = vector.broadcast %25 : i1 to vector<16x1xi1>
      %27 = vector.broadcast %26 : vector<16x1xi1> to vector<16x1xi1>
      %28 = arith.xori %24, %27 : vector<16x1xi1>
      %29 = arith.andi %28, %22 : vector<16x1xi1>
      %30 = vector.broadcast %18 : i32 to vector<16x1xi32>
      %31 = arith.addi %20, %30 : vector<16x1xi32>
      %32 = arith.select %29, %31, %20 : vector<16x1xi1>, vector<16x1xi32>
      %c1_i32_19 = arith.constant 1 : i32
      %33 = vector.broadcast %c1_i32_19 : i32 to vector<16x1xi32>
      %34 = arith.cmpi sge, %32, %33 : vector<16x1xi32>
      %35 = vector.shape_cast %34 : vector<16x1xi1> to vector<16x1xi1>
      %36 = vector.broadcast %35 : vector<16x1xi1> to vector<16x128xi1>
      %37 = arith.extui %36 : vector<16x128xi1> to vector<16x128xi32>
      %38 = arith.sitofp %37 : vector<16x128xi32> to vector<16x128xf32>
      %c6_i32 = arith.constant 6 : i32
      %39 = vector.broadcast %c6_i32 : i32 to vector<16x1xi32>
      %40 = arith.cmpi sle, %32, %39 : vector<16x1xi32>
      %41 = vector.shape_cast %40 : vector<16x1xi1> to vector<16x1xi1>
      %42 = vector.broadcast %41 : vector<16x1xi1> to vector<16x128xi1>
      %43 = arith.extui %42 : vector<16x128xi1> to vector<16x128xi32>
      %44 = arith.sitofp %43 : vector<16x128xi32> to vector<16x128xf32>
      %c0_20 = arith.constant 0 : index
      %c0_21 = arith.constant 0 : index
      %c0_22 = arith.constant 0 : index
      %c0_23 = arith.constant 0 : index
      %45 = vector.load %arg4[%c0_20, %c0_21, %c0_22, %c0_23] : memref<3x2x384x128xbf16, #tpu.memory_space<vmem>>, vector<1x1x384x128xbf16>
      %46 = vector.shape_cast %45 : vector<1x1x384x128xbf16> to vector<384x128xbf16>
      %c0_24 = arith.constant 0 : index
      %c0_25 = arith.constant 0 : index
      %c0_26 = arith.constant 0 : index
      %c0_27 = arith.constant 0 : index
      %47 = vector.load %arg5[%c0_24, %c0_25, %c0_26, %c0_27] : memref<3x2x1x128xf32, #tpu.memory_space<vmem>>, vector<1x1x1x128xf32>
      %48 = vector.shape_cast %47 : vector<1x1x1x128xf32> to vector<1x128xf32>
      %c1_i32_28 = arith.constant 1 : i32
      %49 = tpu.dynamic_rotate %15 by %c1_i32_28 dim 0 : vector<16x128xf32>, i32 -> vector<16x128xf32>
      %50 = arith.mulf %49, %38 : vector<16x128xf32>
      %c15_i32 = arith.constant 15 : i32
      %51 = tpu.dynamic_rotate %15 by %c15_i32 dim 0 : vector<16x128xf32>, i32 -> vector<16x128xf32>
      %52 = arith.mulf %51, %44 : vector<16x128xf32>
      %53 = tpu.concatenate %50, %15, %52 in 1 : vector<16x128xf32>, vector<16x128xf32>, vector<16x128xf32> -> vector<16x384xf32>
      %54 = arith.truncf %53 : vector<16x384xf32> to vector<16x384xbf16>
      %cst_29 = arith.constant dense<0.000000e+00> : vector<16x128xf32>
      %55 = tpu.matmul %54, %46, %cst_29 {dimension_numbers = #tpu.dot_dimension_numbers<[1], [0], [0], [1], [0, 0, 1, 1], [], []>} : vector<16x384xbf16>, vector<384x128xbf16>, vector<16x128xf32> -> vector<16x128xf32>
      %56 = vector.broadcast %48 : vector<1x128xf32> to vector<16x128xf32>
      %57 = arith.addf %55, %56 : vector<16x128xf32>
      %c0_30 = arith.constant 0 : index
      %c0_31 = arith.constant 0 : index
      %c0_32 = arith.constant 0 : index
      %c0_33 = arith.constant 0 : index
      %58 = vector.load %arg6[%c0_30, %c0_31, %c0_32, %c0_33] : memref<3x2x1x128xf32, #tpu.memory_space<vmem>>, vector<1x1x1x128xf32>
      %59 = vector.shape_cast %58 : vector<1x1x1x128xf32> to vector<1x128xf32>
      %c0_34 = arith.constant 0 : index
      %c0_35 = arith.constant 0 : index
      %c0_36 = arith.constant 0 : index
      %c0_37 = arith.constant 0 : index
      %60 = vector.load %arg7[%c0_34, %c0_35, %c0_36, %c0_37] : memref<3x2x1x128xf32, #tpu.memory_space<vmem>>, vector<1x1x1x128xf32>
      %61 = vector.shape_cast %60 : vector<1x1x1x128xf32> to vector<1x128xf32>
      %cst_38 = arith.constant dense<0.000000e+00> : vector<128xf32>
      %62 = vector.multi_reduction <add>, %57, %cst_38 [0] : vector<16x128xf32> to vector<128xf32>
      %63 = vector.shape_cast %62 : vector<128xf32> to vector<1x128xf32>
      %cst_39 = arith.constant 1.600000e+01 : f32
      %64 = vector.broadcast %cst_39 : f32 to vector<1x128xf32>
      %65 = arith.divf %63, %64 : vector<1x128xf32>
      %66 = vector.broadcast %65 : vector<1x128xf32> to vector<16x128xf32>
      %67 = arith.subf %57, %66 : vector<16x128xf32>
      %68 = arith.mulf %67, %67 : vector<16x128xf32>
      %cst_40 = arith.constant dense<0.000000e+00> : vector<128xf32>
      %69 = vector.multi_reduction <add>, %68, %cst_40 [0] : vector<16x128xf32> to vector<128xf32>
      %70 = vector.shape_cast %69 : vector<128xf32> to vector<1x128xf32>
      %cst_41 = arith.constant 1.600000e+01 : f32
      %71 = vector.broadcast %cst_41 : f32 to vector<1x128xf32>
      %72 = arith.divf %70, %71 : vector<1x128xf32>
      %cst_42 = arith.constant 9.99999974E-6 : f32
      %73 = vector.broadcast %cst_42 : f32 to vector<1x128xf32>
      %74 = arith.addf %72, %73 : vector<1x128xf32>
      %75 = math.rsqrt %74 : vector<1x128xf32>
      %76 = arith.mulf %59, %75 : vector<1x128xf32>
      %77 = vector.broadcast %76 : vector<1x128xf32> to vector<16x128xf32>
      %78 = arith.mulf %67, %77 : vector<16x128xf32>
      %79 = vector.broadcast %61 : vector<1x128xf32> to vector<16x128xf32>
      %80 = arith.addf %78, %79 : vector<16x128xf32>
      %cst_43 = arith.constant 0.000000e+00 : f32
      %81 = vector.broadcast %cst_43 : f32 to vector<16x128xf32>
      %82 = arith.maximumf %80, %81 : vector<16x128xf32>
      %c0_44 = arith.constant 0 : index
      %c1 = arith.constant 1 : index
      %c0_45 = arith.constant 0 : index
      %c0_46 = arith.constant 0 : index
      %83 = vector.load %arg4[%c0_44, %c1, %c0_45, %c0_46] : memref<3x2x384x128xbf16, #tpu.memory_space<vmem>>, vector<1x1x384x128xbf16>
      %84 = vector.shape_cast %83 : vector<1x1x384x128xbf16> to vector<384x128xbf16>
      %c0_47 = arith.constant 0 : index
      %c1_48 = arith.constant 1 : index
      %c0_49 = arith.constant 0 : index
      %c0_50 = arith.constant 0 : index
      %85 = vector.load %arg5[%c0_47, %c1_48, %c0_49, %c0_50] : memref<3x2x1x128xf32, #tpu.memory_space<vmem>>, vector<1x1x1x128xf32>
      %86 = vector.shape_cast %85 : vector<1x1x1x128xf32> to vector<1x128xf32>
      %c1_i32_51 = arith.constant 1 : i32
      %87 = tpu.dynamic_rotate %82 by %c1_i32_51 dim 0 : vector<16x128xf32>, i32 -> vector<16x128xf32>
      %88 = arith.mulf %87, %38 : vector<16x128xf32>
      %c15_i32_52 = arith.constant 15 : i32
      %89 = tpu.dynamic_rotate %82 by %c15_i32_52 dim 0 : vector<16x128xf32>, i32 -> vector<16x128xf32>
      %90 = arith.mulf %89, %44 : vector<16x128xf32>
      %91 = tpu.concatenate %88, %82, %90 in 1 : vector<16x128xf32>, vector<16x128xf32>, vector<16x128xf32> -> vector<16x384xf32>
      %92 = arith.truncf %91 : vector<16x384xf32> to vector<16x384xbf16>
      %cst_53 = arith.constant dense<0.000000e+00> : vector<16x128xf32>
      %93 = tpu.matmul %92, %84, %cst_53 {dimension_numbers = #tpu.dot_dimension_numbers<[1], [0], [0], [1], [0, 0, 1, 1], [], []>} : vector<16x384xbf16>, vector<384x128xbf16>, vector<16x128xf32> -> vector<16x128xf32>
      %94 = vector.broadcast %86 : vector<1x128xf32> to vector<16x128xf32>
      %95 = arith.addf %93, %94 : vector<16x128xf32>
      %c0_54 = arith.constant 0 : index
      %c1_55 = arith.constant 1 : index
      %c0_56 = arith.constant 0 : index
      %c0_57 = arith.constant 0 : index
      %96 = vector.load %arg6[%c0_54, %c1_55, %c0_56, %c0_57] : memref<3x2x1x128xf32, #tpu.memory_space<vmem>>, vector<1x1x1x128xf32>
      %97 = vector.shape_cast %96 : vector<1x1x1x128xf32> to vector<1x128xf32>
      %c0_58 = arith.constant 0 : index
      %c1_59 = arith.constant 1 : index
      %c0_60 = arith.constant 0 : index
      %c0_61 = arith.constant 0 : index
      %98 = vector.load %arg7[%c0_58, %c1_59, %c0_60, %c0_61] : memref<3x2x1x128xf32, #tpu.memory_space<vmem>>, vector<1x1x1x128xf32>
      %99 = vector.shape_cast %98 : vector<1x1x1x128xf32> to vector<1x128xf32>
      %cst_62 = arith.constant dense<0.000000e+00> : vector<128xf32>
      %100 = vector.multi_reduction <add>, %95, %cst_62 [0] : vector<16x128xf32> to vector<128xf32>
      %101 = vector.shape_cast %100 : vector<128xf32> to vector<1x128xf32>
      %cst_63 = arith.constant 1.600000e+01 : f32
      %102 = vector.broadcast %cst_63 : f32 to vector<1x128xf32>
      %103 = arith.divf %101, %102 : vector<1x128xf32>
      %104 = vector.broadcast %103 : vector<1x128xf32> to vector<16x128xf32>
      %105 = arith.subf %95, %104 : vector<16x128xf32>
      %106 = arith.mulf %105, %105 : vector<16x128xf32>
      %cst_64 = arith.constant dense<0.000000e+00> : vector<128xf32>
      %107 = vector.multi_reduction <add>, %106, %cst_64 [0] : vector<16x128xf32> to vector<128xf32>
      %108 = vector.shape_cast %107 : vector<128xf32> to vector<1x128xf32>
      %cst_65 = arith.constant 1.600000e+01 : f32
      %109 = vector.broadcast %cst_65 : f32 to vector<1x128xf32>
      %110 = arith.divf %108, %109 : vector<1x128xf32>
      %cst_66 = arith.constant 9.99999974E-6 : f32
      %111 = vector.broadcast %cst_66 : f32 to vector<1x128xf32>
      %112 = arith.addf %110, %111 : vector<1x128xf32>
      %113 = math.rsqrt %112 : vector<1x128xf32>
      %114 = arith.mulf %97, %113 : vector<1x128xf32>
      %115 = vector.broadcast %114 : vector<1x128xf32> to vector<16x128xf32>
      %116 = arith.mulf %105, %115 : vector<16x128xf32>
      %117 = vector.broadcast %99 : vector<1x128xf32> to vector<16x128xf32>
      %118 = arith.addf %116, %117 : vector<16x128xf32>
      %119 = arith.addf %118, %15 : vector<16x128xf32>
      %cst_67 = arith.constant 0.000000e+00 : f32
      %120 = vector.broadcast %cst_67 : f32 to vector<16x128xf32>
      %121 = arith.maximumf %119, %120 : vector<16x128xf32>
      %c1_68 = arith.constant 1 : index
      %c0_69 = arith.constant 0 : index
      %c0_70 = arith.constant 0 : index
      %c0_71 = arith.constant 0 : index
      %122 = vector.load %arg4[%c1_68, %c0_69, %c0_70, %c0_71] : memref<3x2x384x128xbf16, #tpu.memory_space<vmem>>, vector<1x1x384x128xbf16>
      %123 = vector.shape_cast %122 : vector<1x1x384x128xbf16> to vector<384x128xbf16>
      %c1_72 = arith.constant 1 : index
      %c0_73 = arith.constant 0 : index
      %c0_74 = arith.constant 0 : index
      %c0_75 = arith.constant 0 : index
      %124 = vector.load %arg5[%c1_72, %c0_73, %c0_74, %c0_75] : memref<3x2x1x128xf32, #tpu.memory_space<vmem>>, vector<1x1x1x128xf32>
      %125 = vector.shape_cast %124 : vector<1x1x1x128xf32> to vector<1x128xf32>
      %c1_i32_76 = arith.constant 1 : i32
      %126 = tpu.dynamic_rotate %121 by %c1_i32_76 dim 0 : vector<16x128xf32>, i32 -> vector<16x128xf32>
      %127 = arith.mulf %126, %38 : vector<16x128xf32>
      %c15_i32_77 = arith.constant 15 : i32
      %128 = tpu.dynamic_rotate %121 by %c15_i32_77 dim 0 : vector<16x128xf32>, i32 -> vector<16x128xf32>
      %129 = arith.mulf %128, %44 : vector<16x128xf32>
      %130 = tpu.concatenate %127, %121, %129 in 1 : vector<16x128xf32>, vector<16x128xf32>, vector<16x128xf32> -> vector<16x384xf32>
      %131 = arith.truncf %130 : vector<16x384xf32> to vector<16x384xbf16>
      %cst_78 = arith.constant dense<0.000000e+00> : vector<16x128xf32>
      %132 = tpu.matmul %131, %123, %cst_78 {dimension_numbers = #tpu.dot_dimension_numbers<[1], [0], [0], [1], [0, 0, 1, 1], [], []>} : vector<16x384xbf16>, vector<384x128xbf16>, vector<16x128xf32> -> vector<16x128xf32>
      %133 = vector.broadcast %125 : vector<1x128xf32> to vector<16x128xf32>
      %134 = arith.addf %132, %133 : vector<16x128xf32>
      %c1_79 = arith.constant 1 : index
      %c0_80 = arith.constant 0 : index
      %c0_81 = arith.constant 0 : index
      %c0_82 = arith.constant 0 : index
      %135 = vector.load %arg6[%c1_79, %c0_80, %c0_81, %c0_82] : memref<3x2x1x128xf32, #tpu.memory_space<vmem>>, vector<1x1x1x128xf32>
      %136 = vector.shape_cast %135 : vector<1x1x1x128xf32> to vector<1x128xf32>
      %c1_83 = arith.constant 1 : index
      %c0_84 = arith.constant 0 : index
      %c0_85 = arith.constant 0 : index
      %c0_86 = arith.constant 0 : index
      %137 = vector.load %arg7[%c1_83, %c0_84, %c0_85, %c0_86] : memref<3x2x1x128xf32, #tpu.memory_space<vmem>>, vector<1x1x1x128xf32>
      %138 = vector.shape_cast %137 : vector<1x1x1x128xf32> to vector<1x128xf32>
      %cst_87 = arith.constant dense<0.000000e+00> : vector<128xf32>
      %139 = vector.multi_reduction <add>, %134, %cst_87 [0] : vector<16x128xf32> to vector<128xf32>
      %140 = vector.shape_cast %139 : vector<128xf32> to vector<1x128xf32>
      %cst_88 = arith.constant 1.600000e+01 : f32
      %141 = vector.broadcast %cst_88 : f32 to vector<1x128xf32>
      %142 = arith.divf %140, %141 : vector<1x128xf32>
      %143 = vector.broadcast %142 : vector<1x128xf32> to vector<16x128xf32>
      %144 = arith.subf %134, %143 : vector<16x128xf32>
      %145 = arith.mulf %144, %144 : vector<16x128xf32>
      %cst_89 = arith.constant dense<0.000000e+00> : vector<128xf32>
      %146 = vector.multi_reduction <add>, %145, %cst_89 [0] : vector<16x128xf32> to vector<128xf32>
      %147 = vector.shape_cast %146 : vector<128xf32> to vector<1x128xf32>
      %cst_90 = arith.constant 1.600000e+01 : f32
      %148 = vector.broadcast %cst_90 : f32 to vector<1x128xf32>
      %149 = arith.divf %147, %148 : vector<1x128xf32>
      %cst_91 = arith.constant 9.99999974E-6 : f32
      %150 = vector.broadcast %cst_91 : f32 to vector<1x128xf32>
      %151 = arith.addf %149, %150 : vector<1x128xf32>
      %152 = math.rsqrt %151 : vector<1x128xf32>
      %153 = arith.mulf %136, %152 : vector<1x128xf32>
      %154 = vector.broadcast %153 : vector<1x128xf32> to vector<16x128xf32>
      %155 = arith.mulf %144, %154 : vector<16x128xf32>
      %156 = vector.broadcast %138 : vector<1x128xf32> to vector<16x128xf32>
      %157 = arith.addf %155, %156 : vector<16x128xf32>
      %cst_92 = arith.constant 0.000000e+00 : f32
      %158 = vector.broadcast %cst_92 : f32 to vector<16x128xf32>
      %159 = arith.maximumf %157, %158 : vector<16x128xf32>
      %c1_93 = arith.constant 1 : index
      %c1_94 = arith.constant 1 : index
      %c0_95 = arith.constant 0 : index
      %c0_96 = arith.constant 0 : index
      %160 = vector.load %arg4[%c1_93, %c1_94, %c0_95, %c0_96] : memref<3x2x384x128xbf16, #tpu.memory_space<vmem>>, vector<1x1x384x128xbf16>
      %161 = vector.shape_cast %160 : vector<1x1x384x128xbf16> to vector<384x128xbf16>
      %c1_97 = arith.constant 1 : index
      %c1_98 = arith.constant 1 : index
      %c0_99 = arith.constant 0 : index
      %c0_100 = arith.constant 0 : index
      %162 = vector.load %arg5[%c1_97, %c1_98, %c0_99, %c0_100] : memref<3x2x1x128xf32, #tpu.memory_space<vmem>>, vector<1x1x1x128xf32>
      %163 = vector.shape_cast %162 : vector<1x1x1x128xf32> to vector<1x128xf32>
      %c1_i32_101 = arith.constant 1 : i32
      %164 = tpu.dynamic_rotate %159 by %c1_i32_101 dim 0 : vector<16x128xf32>, i32 -> vector<16x128xf32>
      %165 = arith.mulf %164, %38 : vector<16x128xf32>
      %c15_i32_102 = arith.constant 15 : i32
      %166 = tpu.dynamic_rotate %159 by %c15_i32_102 dim 0 : vector<16x128xf32>, i32 -> vector<16x128xf32>
      %167 = arith.mulf %166, %44 : vector<16x128xf32>
      %168 = tpu.concatenate %165, %159, %167 in 1 : vector<16x128xf32>, vector<16x128xf32>, vector<16x128xf32> -> vector<16x384xf32>
      %169 = arith.truncf %168 : vector<16x384xf32> to vector<16x384xbf16>
      %cst_103 = arith.constant dense<0.000000e+00> : vector<16x128xf32>
      %170 = tpu.matmul %169, %161, %cst_103 {dimension_numbers = #tpu.dot_dimension_numbers<[1], [0], [0], [1], [0, 0, 1, 1], [], []>} : vector<16x384xbf16>, vector<384x128xbf16>, vector<16x128xf32> -> vector<16x128xf32>
      %171 = vector.broadcast %163 : vector<1x128xf32> to vector<16x128xf32>
      %172 = arith.addf %170, %171 : vector<16x128xf32>
      %c1_104 = arith.constant 1 : index
      %c1_105 = arith.constant 1 : index
      %c0_106 = arith.constant 0 : index
      %c0_107 = arith.constant 0 : index
      %173 = vector.load %arg6[%c1_104, %c1_105, %c0_106, %c0_107] : memref<3x2x1x128xf32, #tpu.memory_space<vmem>>, vector<1x1x1x128xf32>
      %174 = vector.shape_cast %173 : vector<1x1x1x128xf32> to vector<1x128xf32>
      %c1_108 = arith.constant 1 : index
      %c1_109 = arith.constant 1 : index
      %c0_110 = arith.constant 0 : index
      %c0_111 = arith.constant 0 : index
      %175 = vector.load %arg7[%c1_108, %c1_109, %c0_110, %c0_111] : memref<3x2x1x128xf32, #tpu.memory_space<vmem>>, vector<1x1x1x128xf32>
      %176 = vector.shape_cast %175 : vector<1x1x1x128xf32> to vector<1x128xf32>
      %cst_112 = arith.constant dense<0.000000e+00> : vector<128xf32>
      %177 = vector.multi_reduction <add>, %172, %cst_112 [0] : vector<16x128xf32> to vector<128xf32>
      %178 = vector.shape_cast %177 : vector<128xf32> to vector<1x128xf32>
      %cst_113 = arith.constant 1.600000e+01 : f32
      %179 = vector.broadcast %cst_113 : f32 to vector<1x128xf32>
      %180 = arith.divf %178, %179 : vector<1x128xf32>
      %181 = vector.broadcast %180 : vector<1x128xf32> to vector<16x128xf32>
      %182 = arith.subf %172, %181 : vector<16x128xf32>
      %183 = arith.mulf %182, %182 : vector<16x128xf32>
      %cst_114 = arith.constant dense<0.000000e+00> : vector<128xf32>
      %184 = vector.multi_reduction <add>, %183, %cst_114 [0] : vector<16x128xf32> to vector<128xf32>
      %185 = vector.shape_cast %184 : vector<128xf32> to vector<1x128xf32>
      %cst_115 = arith.constant 1.600000e+01 : f32
      %186 = vector.broadcast %cst_115 : f32 to vector<1x128xf32>
      %187 = arith.divf %185, %186 : vector<1x128xf32>
      %cst_116 = arith.constant 9.99999974E-6 : f32
      %188 = vector.broadcast %cst_116 : f32 to vector<1x128xf32>
      %189 = arith.addf %187, %188 : vector<1x128xf32>
      %190 = math.rsqrt %189 : vector<1x128xf32>
      %191 = arith.mulf %174, %190 : vector<1x128xf32>
      %192 = vector.broadcast %191 : vector<1x128xf32> to vector<16x128xf32>
      %193 = arith.mulf %182, %192 : vector<16x128xf32>
      %194 = vector.broadcast %176 : vector<1x128xf32> to vector<16x128xf32>
      %195 = arith.addf %193, %194 : vector<16x128xf32>
      %196 = arith.addf %195, %121 : vector<16x128xf32>
      %cst_117 = arith.constant 0.000000e+00 : f32
      %197 = vector.broadcast %cst_117 : f32 to vector<16x128xf32>
      %198 = arith.maximumf %196, %197 : vector<16x128xf32>
      %c2 = arith.constant 2 : index
      %c0_118 = arith.constant 0 : index
      %c0_119 = arith.constant 0 : index
      %c0_120 = arith.constant 0 : index
      %199 = vector.load %arg4[%c2, %c0_118, %c0_119, %c0_120] : memref<3x2x384x128xbf16, #tpu.memory_space<vmem>>, vector<1x1x384x128xbf16>
      %200 = vector.shape_cast %199 : vector<1x1x384x128xbf16> to vector<384x128xbf16>
      %c2_121 = arith.constant 2 : index
      %c0_122 = arith.constant 0 : index
      %c0_123 = arith.constant 0 : index
      %c0_124 = arith.constant 0 : index
      %201 = vector.load %arg5[%c2_121, %c0_122, %c0_123, %c0_124] : memref<3x2x1x128xf32, #tpu.memory_space<vmem>>, vector<1x1x1x128xf32>
      %202 = vector.shape_cast %201 : vector<1x1x1x128xf32> to vector<1x128xf32>
      %c1_i32_125 = arith.constant 1 : i32
      %203 = tpu.dynamic_rotate %198 by %c1_i32_125 dim 0 : vector<16x128xf32>, i32 -> vector<16x128xf32>
      %204 = arith.mulf %203, %38 : vector<16x128xf32>
      %c15_i32_126 = arith.constant 15 : i32
      %205 = tpu.dynamic_rotate %198 by %c15_i32_126 dim 0 : vector<16x128xf32>, i32 -> vector<16x128xf32>
      %206 = arith.mulf %205, %44 : vector<16x128xf32>
      %207 = tpu.concatenate %204, %198, %206 in 1 : vector<16x128xf32>, vector<16x128xf32>, vector<16x128xf32> -> vector<16x384xf32>
      %208 = arith.truncf %207 : vector<16x384xf32> to vector<16x384xbf16>
      %cst_127 = arith.constant dense<0.000000e+00> : vector<16x128xf32>
      %209 = tpu.matmul %208, %200, %cst_127 {dimension_numbers = #tpu.dot_dimension_numbers<[1], [0], [0], [1], [0, 0, 1, 1], [], []>} : vector<16x384xbf16>, vector<384x128xbf16>, vector<16x128xf32> -> vector<16x128xf32>
      %210 = vector.broadcast %202 : vector<1x128xf32> to vector<16x128xf32>
      %211 = arith.addf %209, %210 : vector<16x128xf32>
      %c2_128 = arith.constant 2 : index
      %c0_129 = arith.constant 0 : index
      %c0_130 = arith.constant 0 : index
      %c0_131 = arith.constant 0 : index
      %212 = vector.load %arg6[%c2_128, %c0_129, %c0_130, %c0_131] : memref<3x2x1x128xf32, #tpu.memory_space<vmem>>, vector<1x1x1x128xf32>
      %213 = vector.shape_cast %212 : vector<1x1x1x128xf32> to vector<1x128xf32>
      %c2_132 = arith.constant 2 : index
      %c0_133 = arith.constant 0 : index
      %c0_134 = arith.constant 0 : index
      %c0_135 = arith.constant 0 : index
      %214 = vector.load %arg7[%c2_132, %c0_133, %c0_134, %c0_135] : memref<3x2x1x128xf32, #tpu.memory_space<vmem>>, vector<1x1x1x128xf32>
      %215 = vector.shape_cast %214 : vector<1x1x1x128xf32> to vector<1x128xf32>
      %cst_136 = arith.constant dense<0.000000e+00> : vector<128xf32>
      %216 = vector.multi_reduction <add>, %211, %cst_136 [0] : vector<16x128xf32> to vector<128xf32>
      %217 = vector.shape_cast %216 : vector<128xf32> to vector<1x128xf32>
      %cst_137 = arith.constant 1.600000e+01 : f32
      %218 = vector.broadcast %cst_137 : f32 to vector<1x128xf32>
      %219 = arith.divf %217, %218 : vector<1x128xf32>
      %220 = vector.broadcast %219 : vector<1x128xf32> to vector<16x128xf32>
      %221 = arith.subf %211, %220 : vector<16x128xf32>
      %222 = arith.mulf %221, %221 : vector<16x128xf32>
      %cst_138 = arith.constant dense<0.000000e+00> : vector<128xf32>
      %223 = vector.multi_reduction <add>, %222, %cst_138 [0] : vector<16x128xf32> to vector<128xf32>
      %224 = vector.shape_cast %223 : vector<128xf32> to vector<1x128xf32>
      %cst_139 = arith.constant 1.600000e+01 : f32
      %225 = vector.broadcast %cst_139 : f32 to vector<1x128xf32>
      %226 = arith.divf %224, %225 : vector<1x128xf32>
      %cst_140 = arith.constant 9.99999974E-6 : f32
      %227 = vector.broadcast %cst_140 : f32 to vector<1x128xf32>
      %228 = arith.addf %226, %227 : vector<1x128xf32>
      %229 = math.rsqrt %228 : vector<1x128xf32>
      %230 = arith.mulf %213, %229 : vector<1x128xf32>
      %231 = vector.broadcast %230 : vector<1x128xf32> to vector<16x128xf32>
      %232 = arith.mulf %221, %231 : vector<16x128xf32>
      %233 = vector.broadcast %215 : vector<1x128xf32> to vector<16x128xf32>
      %234 = arith.addf %232, %233 : vector<16x128xf32>
      %cst_141 = arith.constant 0.000000e+00 : f32
      %235 = vector.broadcast %cst_141 : f32 to vector<16x128xf32>
      %236 = arith.maximumf %234, %235 : vector<16x128xf32>
      %c2_142 = arith.constant 2 : index
      %c1_143 = arith.constant 1 : index
      %c0_144 = arith.constant 0 : index
      %c0_145 = arith.constant 0 : index
      %237 = vector.load %arg4[%c2_142, %c1_143, %c0_144, %c0_145] : memref<3x2x384x128xbf16, #tpu.memory_space<vmem>>, vector<1x1x384x128xbf16>
      %238 = vector.shape_cast %237 : vector<1x1x384x128xbf16> to vector<384x128xbf16>
      %c2_146 = arith.constant 2 : index
      %c1_147 = arith.constant 1 : index
      %c0_148 = arith.constant 0 : index
      %c0_149 = arith.constant 0 : index
      %239 = vector.load %arg5[%c2_146, %c1_147, %c0_148, %c0_149] : memref<3x2x1x128xf32, #tpu.memory_space<vmem>>, vector<1x1x1x128xf32>
      %240 = vector.shape_cast %239 : vector<1x1x1x128xf32> to vector<1x128xf32>
      %c1_i32_150 = arith.constant 1 : i32
      %241 = tpu.dynamic_rotate %236 by %c1_i32_150 dim 0 : vector<16x128xf32>, i32 -> vector<16x128xf32>
      %242 = arith.mulf %241, %38 : vector<16x128xf32>
      %c15_i32_151 = arith.constant 15 : i32
      %243 = tpu.dynamic_rotate %236 by %c15_i32_151 dim 0 : vector<16x128xf32>, i32 -> vector<16x128xf32>
      %244 = arith.mulf %243, %44 : vector<16x128xf32>
      %245 = tpu.concatenate %242, %236, %244 in 1 : vector<16x128xf32>, vector<16x128xf32>, vector<16x128xf32> -> vector<16x384xf32>
      %246 = arith.truncf %245 : vector<16x384xf32> to vector<16x384xbf16>
      %cst_152 = arith.constant dense<0.000000e+00> : vector<16x128xf32>
      %247 = tpu.matmul %246, %238, %cst_152 {dimension_numbers = #tpu.dot_dimension_numbers<[1], [0], [0], [1], [0, 0, 1, 1], [], []>} : vector<16x384xbf16>, vector<384x128xbf16>, vector<16x128xf32> -> vector<16x128xf32>
      %248 = vector.broadcast %240 : vector<1x128xf32> to vector<16x128xf32>
      %249 = arith.addf %247, %248 : vector<16x128xf32>
      %c2_153 = arith.constant 2 : index
      %c1_154 = arith.constant 1 : index
      %c0_155 = arith.constant 0 : index
      %c0_156 = arith.constant 0 : index
      %250 = vector.load %arg6[%c2_153, %c1_154, %c0_155, %c0_156] : memref<3x2x1x128xf32, #tpu.memory_space<vmem>>, vector<1x1x1x128xf32>
      %251 = vector.shape_cast %250 : vector<1x1x1x128xf32> to vector<1x128xf32>
      %c2_157 = arith.constant 2 : index
      %c1_158 = arith.constant 1 : index
      %c0_159 = arith.constant 0 : index
      %c0_160 = arith.constant 0 : index
      %252 = vector.load %arg7[%c2_157, %c1_158, %c0_159, %c0_160] : memref<3x2x1x128xf32, #tpu.memory_space<vmem>>, vector<1x1x1x128xf32>
      %253 = vector.shape_cast %252 : vector<1x1x1x128xf32> to vector<1x128xf32>
      %cst_161 = arith.constant dense<0.000000e+00> : vector<128xf32>
      %254 = vector.multi_reduction <add>, %249, %cst_161 [0] : vector<16x128xf32> to vector<128xf32>
      %255 = vector.shape_cast %254 : vector<128xf32> to vector<1x128xf32>
      %cst_162 = arith.constant 1.600000e+01 : f32
      %256 = vector.broadcast %cst_162 : f32 to vector<1x128xf32>
      %257 = arith.divf %255, %256 : vector<1x128xf32>
      %258 = vector.broadcast %257 : vector<1x128xf32> to vector<16x128xf32>
      %259 = arith.subf %249, %258 : vector<16x128xf32>
      %260 = arith.mulf %259, %259 : vector<16x128xf32>
      %cst_163 = arith.constant dense<0.000000e+00> : vector<128xf32>
      %261 = vector.multi_reduction <add>, %260, %cst_163 [0] : vector<16x128xf32> to vector<128xf32>
      %262 = vector.shape_cast %261 : vector<128xf32> to vector<1x128xf32>
      %cst_164 = arith.constant 1.600000e+01 : f32
      %263 = vector.broadcast %cst_164 : f32 to vector<1x128xf32>
      %264 = arith.divf %262, %263 : vector<1x128xf32>
      %cst_165 = arith.constant 9.99999974E-6 : f32
      %265 = vector.broadcast %cst_165 : f32 to vector<1x128xf32>
      %266 = arith.addf %264, %265 : vector<1x128xf32>
      %267 = math.rsqrt %266 : vector<1x128xf32>
      %268 = arith.mulf %251, %267 : vector<1x128xf32>
      %269 = vector.broadcast %268 : vector<1x128xf32> to vector<16x128xf32>
      %270 = arith.mulf %259, %269 : vector<16x128xf32>
      %271 = vector.broadcast %253 : vector<1x128xf32> to vector<16x128xf32>
      %272 = arith.addf %270, %271 : vector<16x128xf32>
      %273 = arith.addf %272, %198 : vector<16x128xf32>
      %cst_166 = arith.constant 0.000000e+00 : f32
      %274 = vector.broadcast %cst_166 : f32 to vector<16x128xf32>
      %275 = arith.maximumf %273, %274 : vector<16x128xf32>
      %276 = arith.truncf %275 : vector<16x128xf32> to vector<16x128xbf16>
      %c0_167 = arith.constant 0 : index
      %c0_168 = arith.constant 0 : index
      %277 = vector.load %arg11[%c0_167, %c0_168] : memref<16x128xbf16, #tpu.memory_space<vmem>>, vector<16x128xbf16>
      tpu.vector_store %arg11[%c0_167, %c0_168], %276 {strides = array<i32>} : memref<16x128xbf16, #tpu.memory_space<vmem>>, vector<16x128xbf16>,
    } else {
    }
    %c0 = arith.constant 0 : index
    %c0_1 = arith.constant 0 : index
    %3 = vector.load %arg11[%c0, %c0_1] : memref<16x128xbf16, #tpu.memory_space<vmem>>, vector<16x128xbf16>
    %c0_2 = arith.constant 0 : index
    %c0_3 = arith.constant 0 : index
    %4 = vector.load %arg8[%c0_2, %c0_3] : memref<128x128xbf16, #tpu.memory_space<vmem>>, vector<128x128xbf16>
    %cst = arith.constant dense<0.000000e+00> : vector<16x128xf32>
    %5 = tpu.matmul %3, %4, %cst {dimension_numbers = #tpu.dot_dimension_numbers<[1], [0], [0], [1], [0, 0, 1, 1], [], []>} : vector<16x128xbf16>, vector<128x128xbf16>, vector<16x128xf32> -> vector<16x128xf32>
    %c0_4 = arith.constant 0 : index
    %c0_5 = arith.constant 0 : index
    %6 = vector.load %arg9[%c0_4, %c0_5] : memref<1x128xf32, #tpu.memory_space<vmem>>, vector<1x128xf32>
    %7 = vector.broadcast %6 : vector<1x128xf32> to vector<16x128xf32>
    %8 = arith.addf %5, %7 : vector<16x128xf32>
    %c0_6 = arith.constant 0 : index
    %c0_7 = arith.constant 0 : index
    %9 = vector.load %arg10[%c0_6, %c0_7] : memref<16x128xf32, #tpu.memory_space<vmem>>, vector<16x128xf32>
    tpu.vector_store %arg10[%c0_6, %c0_7], %8 {strides = array<i32>} : memref<16x128xf32, #tpu.memory_space<vmem>>, vector<16x128xf32>,
    return
  }
  func.func @transform_0(%arg0: i32) -> (i32, i32) {
    %c0_i32 = arith.constant 0 : i32
    %c0_i32_0 = arith.constant 0 : i32
    %c0_i32_1 = arith.constant 0 : i32
    return %c0_i32, %c0_i32_0 : i32, i32
  }
  func.func @transform_1(%arg0: i32) -> (i32, i32) {
    %c0_i32 = arith.constant 0 : i32
    %c0_i32_0 = arith.constant 0 : i32
    %c0_i32_1 = arith.constant 0 : i32
    return %c0_i32, %c0_i32_0 : i32, i32
  }
  func.func @transform_2(%arg0: i32) -> (i32, i32) {
    %c0_i32 = arith.constant 0 : i32
    %c0_i32_0 = arith.constant 0 : i32
    %c0_i32_1 = arith.constant 0 : i32
    return %c0_i32, %c0_i32_0 : i32, i32
  }
  func.func @transform_3(%arg0: i32) -> (i32, i32, i32, i32) {
    %c0_i32 = arith.constant 0 : i32
    %c0_i32_0 = arith.constant 0 : i32
    %c0_i32_1 = arith.constant 0 : i32
    %c0_i32_2 = arith.constant 0 : i32
    %c0_i32_3 = arith.constant 0 : i32
    return %c0_i32, %c0_i32_0, %c0_i32_1, %c0_i32_2 : i32, i32, i32, i32
  }
  func.func @transform_4(%arg0: i32) -> (i32, i32, i32, i32) {
    %c0_i32 = arith.constant 0 : i32
    %c0_i32_0 = arith.constant 0 : i32
    %c0_i32_1 = arith.constant 0 : i32
    %c0_i32_2 = arith.constant 0 : i32
    %c0_i32_3 = arith.constant 0 : i32
    return %c0_i32, %c0_i32_0, %c0_i32_1, %c0_i32_2 : i32, i32, i32, i32
  }
  func.func @transform_5(%arg0: i32) -> (i32, i32, i32, i32) {
    %c0_i32 = arith.constant 0 : i32
    %c0_i32_0 = arith.constant 0 : i32
    %c0_i32_1 = arith.constant 0 : i32
    %c0_i32_2 = arith.constant 0 : i32
    %c0_i32_3 = arith.constant 0 : i32
    return %c0_i32, %c0_i32_0, %c0_i32_1, %c0_i32_2 : i32, i32, i32, i32
  }
  func.func @transform_6(%arg0: i32) -> (i32, i32, i32, i32) {
    %c0_i32 = arith.constant 0 : i32
    %c0_i32_0 = arith.constant 0 : i32
    %c0_i32_1 = arith.constant 0 : i32
    %c0_i32_2 = arith.constant 0 : i32
    %c0_i32_3 = arith.constant 0 : i32
    return %c0_i32, %c0_i32_0, %c0_i32_1, %c0_i32_2 : i32, i32, i32, i32
  }
  func.func @transform_7(%arg0: i32) -> (i32, i32) {
    %c0_i32 = arith.constant 0 : i32
    %c0_i32_0 = arith.constant 0 : i32
    return %c0_i32, %arg0 : i32, i32
  }
  func.func @transform_8(%arg0: i32) -> (i32, i32) {
    %c0_i32 = arith.constant 0 : i32
    %c0_i32_0 = arith.constant 0 : i32
    return %c0_i32, %arg0 : i32, i32
  }
  func.func @transform_9(%arg0: i32) -> (i32, i32) {
    %c0_i32 = arith.constant 0 : i32
    %c0_i32_0 = arith.constant 0 : i32
    return %c0_i32, %arg0 : i32, i32
  }
}

</mosaic_0001>

<llo_original>
// kernel: tpu_custom_call.1
$region0: #{tpu_custom_call.1}
  #allocation0 [shape = 'u32[]', space=smem, size = 0x4, offset = 0x4, fixed_abs, tag = 'smem constant byte address 0x4 - core index']
  #allocation1 [shape = 'u32[144,128]{1,0:T(1,128)}', space=vmem, size = 0x12000, scoped, tag = 'internal scratch']
  #allocation2 [shape = 'bf16[16,128]{1,0:T(16,128)(2,1)}', space=vmem, size = 0x1000, scoped, tag = 'scratch operand']
  %s0 = inlined_call_operand.hbm [shape: bf16[16,128], index: 0, kind: input, shape index: {}]
  %s1 = inlined_call_operand.hbm [shape: bf16[128,128], index: 1, kind: input, shape index: {}]
  %s2 = inlined_call_operand.hbm [shape: f32[1,128], index: 2, kind: input, shape index: {}]
  %s3 = inlined_call_operand.hbm [shape: bf16[3,2,384,128], index: 3, kind: input, shape index: {}]
  %s4 = inlined_call_operand.vmem [shape: f32[3,2,1,128], index: 4, kind: input, shape index: {}]
  %s5 = inlined_call_operand.vmem [shape: f32[3,2,1,128], index: 5, kind: input, shape index: {}]
  %s6 = inlined_call_operand.vmem [shape: f32[3,2,1,128], index: 6, kind: input, shape index: {}]
  %s7 = inlined_call_operand.hbm [shape: bf16[128,128], index: 7, kind: input, shape index: {}]
  %s8 = inlined_call_operand.vmem [shape: f32[1,128], index: 8, kind: input, shape index: {}]
  %s9 = inlined_call_operand.hbm [shape: f32[16,128], index: 9, kind: output, shape index: {}]
  %s10 = sld [smem:[#allocation0]]
  $region70: #{tpu_custom_call.1} parent=0
    _
  %s12 = ssub.s32 1, %s10
  %s13 = scalar_select 0, %s12, %s10
  $region1: #{tpu_custom_call.1} parent=0
    #allocation3 [shape = 'u8[4096]{0}', space=vmem, size = 0x1000, scoped, tag = 'input window, operand 0, single buffered']
    #allocation4 [shape = 's32[1]{0}', space=sflag, size = 0x4, scoped, tag = 'scoped memory for tpu_custom_call.1']
    #allocation5 [shape = 's32[1]{0}', space=sflag, size = 0x4, scoped, tag = 'scoped memory for tpu_custom_call.1']
    #allocation6 [shape = 'u8[32768]{0}', space=vmem, size = 0x8000, scoped, tag = 'input window, operand 1, single buffered']
    #allocation7 [shape = 's32[1]{0}', space=sflag, size = 0x4, scoped, tag = 'scoped memory for tpu_custom_call.1']
    #allocation8 [shape = 'u8[512]{0}', space=vmem, size = 0x400, scoped, tag = 'input window, operand 2, single buffered']
    #allocation9 [shape = 'u8[589824]{0}', space=vmem, size = 0x90000, scoped, tag = 'input window, operand 3, single buffered']
    #allocation10 [shape = 's32[1]{0}', space=sflag, size = 0x4, scoped, tag = 'scoped memory for tpu_custom_call.1']
    #allocation11 [shape = 'u8[32768]{0}', space=vmem, size = 0x8000, scoped, tag = 'input window, operand 7, single buffered']
    #allocation12 [shape = 'u8[8192]{0}', space=vmem, size = 0x2000, scoped, tag = 'output window, operand 0, single buffered']
    %14 = vsyncpa [#allocation4], 0
    %15 = vsyncpa [#allocation7], 0
    %16 = vsyncpa [#allocation10], 0
    %17 = vsyncpa [#allocation5], 0
    // Predicated region
    $region2: #{tpu_custom_call.1} parent=1 // pred_check
      _
    $region3: #{tpu_custom_call.1} parent=1 // pred_check_branch
      %19 = sbr.rel (0) target = $region5
    $region4: #{tpu_custom_call.1} parent=1 // pred_region
      %s21 = ssub.s32 128, 128
      %22 = vsyncadd [#allocation4], %s21
      %s23 = sshll.u32 [#allocation3], 4
      %s24 = int_to_ptr.vmem [resolvable:$true] %s23
      %29 = dma.hbm_to_vmem [thread:$0]  %s0, 128, %s24, [#allocation4], 64, 64, 4
    $region5: #{tpu_custom_call.1} parent=1 // pred_fallthru
      _
    // Predicated region
    $region6: #{tpu_custom_call.1} parent=1 // pred_check
      _
    $region7: #{tpu_custom_call.1} parent=1 // pred_check_branch
      %31 = sbr.rel (0) target = $region9
    $region8: #{tpu_custom_call.1} parent=1 // pred_region
      %s33 = ssub.s32 1024, 1024
      %34 = vsyncadd [#allocation7], %s33
      %s35 = sshll.u32 [#allocation6], 4
      %s36 = int_to_ptr.vmem [resolvable:$true] %s35
      %41 = dma.hbm_to_vmem [thread:$0]  %s1, 1024, %s36, [#allocation7], 64, 64, 4
    $region9: #{tpu_custom_call.1} parent=1 // pred_fallthru
      _
    // Predicated region
    $region10: #{tpu_custom_call.1} parent=1 // pred_check
      _
    $region11: #{tpu_custom_call.1} parent=1 // pred_check_branch
      %43 = sbr.rel (0) target = $region13
    $region12: #{tpu_custom_call.1} parent=1 // pred_region
      %s45 = ssub.s32 16, 16
      %46 = vsyncadd [#allocation7], %s45
      %s48 = sshll.u32 [#allocation8], 4
      %s49 = int_to_ptr.vmem [resolvable:$true] %s48
      %51 = dma.hbm_to_vmem [thread:$0]  %s2, 16, %s49, [#allocation7]
    $region13: #{tpu_custom_call.1} parent=1 // pred_fallthru
      _
    // Predicated region
    $region14: #{tpu_custom_call.1} parent=1 // pred_check
      _
    $region15: #{tpu_custom_call.1} parent=1 // pred_check_branch
      %53 = sbr.rel (0) target = $region17
    $region16: #{tpu_custom_call.1} parent=1 // pred_region
      %s55 = ssub.s32 18432, 18432
      %56 = vsyncadd [#allocation10], %s55
      %s57 = sshll.u32 [#allocation9], 4
      %s58 = int_to_ptr.vmem [resolvable:$true] %s57
      %63 = dma.hbm_to_vmem [thread:$0]  %s3, 18432, %s58, [#allocation10], 64, 64, 4
    $region17: #{tpu_custom_call.1} parent=1 // pred_fallthru
      _
    // Predicated region
    $region18: #{tpu_custom_call.1} parent=1 // pred_check
      _
    $region19: #{tpu_custom_call.1} parent=1 // pred_check_branch
      %65 = sbr.rel (0) target = $region21
    $region20: #{tpu_custom_call.1} parent=1 // pred_region
      _
    $region21: #{tpu_custom_call.1} parent=1 // pred_fallthru
      _
    // Predicated region
    $region22: #{tpu_custom_call.1} parent=1 // pred_check
      _
    $region23: #{tpu_custom_call.1} parent=1 // pred_check_branch
      %67 = sbr.rel (0) target = $region25
    $region24: #{tpu_custom_call.1} parent=1 // pred_region
      _
    $region25: #{tpu_custom_call.1} parent=1 // pred_fallthru
      _
    // Predicated region
    $region26: #{tpu_custom_call.1} parent=1 // pred_check
      _
    $region27: #{tpu_custom_call.1} parent=1 // pred_check_branch
      %69 = sbr.rel (0) target = $region29
    $region28: #{tpu_custom_call.1} parent=1 // pred_region
      _
    $region29: #{tpu_custom_call.1} parent=1 // pred_fallthru
      _
    // Predicated region
    $region30: #{tpu_custom_call.1} parent=1 // pred_check
      _
    $region31: #{tpu_custom_call.1} parent=1 // pred_check_branch
      %71 = sbr.rel (0) target = $region33
    $region32: #{tpu_custom_call.1} parent=1 // pred_region
      %s73 = ssub.s32 1024, 1024
      %74 = vsyncadd [#allocation10], %s73
      %s75 = sshll.u32 [#allocation11], 4
      %s76 = int_to_ptr.vmem [resolvable:$true] %s75
      %81 = dma.hbm_to_vmem [thread:$0]  %s7, 1024, %s76, [#allocation10], 64, 64, 4
    $region33: #{tpu_custom_call.1} parent=1 // pred_fallthru
      _
    // Predicated region
    $region34: #{tpu_custom_call.1} parent=1 // pred_check
      _
    $region35: #{tpu_custom_call.1} parent=1 // pred_check_branch
      %83 = sbr.rel (0) target = $region37
    $region36: #{tpu_custom_call.1} parent=1 // pred_region
      _
    $region37: #{tpu_custom_call.1} parent=1 // pred_fallthru
      _
    // Predicated region
    $region38: #{tpu_custom_call.1} parent=1 // pred_check
      _
    $region39: #{tpu_custom_call.1} parent=1 // pred_check_branch
      %85 = sbr.rel (0) target = $region41
    $region40: #{tpu_custom_call.1} parent=1 // pred_region
      %86 = dma.done [#allocation4], 128
    $region41: #{tpu_custom_call.1} parent=1 // pred_fallthru
      _
    // Predicated region
    $region42: #{tpu_custom_call.1} parent=1 // pred_check
      _
    $region43: #{tpu_custom_call.1} parent=1 // pred_check_branch
      %88 = sbr.rel (0) target = $region45
    $region44: #{tpu_custom_call.1} parent=1 // pred_region
      %89 = dma.done [#allocation7], 1024
    $region45: #{tpu_custom_call.1} parent=1 // pred_fallthru
      _
    // Predicated region
    $region46: #{tpu_custom_call.1} parent=1 // pred_check
      _
    $region47: #{tpu_custom_call.1} parent=1 // pred_check_branch
      %91 = sbr.rel (0) target = $region49
    $region48: #{tpu_custom_call.1} parent=1 // pred_region
      %92 = dma.done [#allocation7], 16
    $region49: #{tpu_custom_call.1} parent=1 // pred_fallthru
      _
    // Predicated region
    $region50: #{tpu_custom_call.1} parent=1 // pred_check
      _
    $region51: #{tpu_custom_call.1} parent=1 // pred_check_branch
      %94 = sbr.rel (0) target = $region53
    $region52: #{tpu_custom_call.1} parent=1 // pred_region
      %95 = dma.done [#allocation10], 18432
    $region53: #{tpu_custom_call.1} parent=1 // pred_fallthru
      _
    // Predicated region
    $region54: #{tpu_custom_call.1} parent=1 // pred_check
      _
    $region55: #{tpu_custom_call.1} parent=1 // pred_check_branch
      %97 = sbr.rel (0) target = $region57
    $region56: #{tpu_custom_call.1} parent=1 // pred_region
      %98 = dma.done [#allocation10], 1024
    $region57: #{tpu_custom_call.1} parent=1 // pred_fallthru
      _
    %p100 = scmp.eq.s32.totalorder 0, 0
    // Predicated region
    $region58: #{tpu_custom_call.1} parent=1 // pred_check
      %p101 = pneg %p100
    $region59: #{tpu_custom_call.1} parent=1 // pred_check_branch
      %103 = sbr.rel (%p101) target = $region61
    $region60: #{tpu_custom_call.1} parent=1 // pred_region
      %v104 = vld [vmem:[#allocation3] sm:$0xf]
      %v105 = vld [vmem:[#allocation3 + $0x4] sm:$0xf]
      %v106 = vld [vmem:[#allocation6] sm:$0xf]
      %v107 = vld [vmem:[#allocation6 + $0x4] sm:$0xf]
      %v108 = vld [vmem:[#allocation6 + $0x8] sm:$0xf]
      %v109 = vld [vmem:[#allocation6 + $0xc] sm:$0xf]
      %v110 = vld [vmem:[#allocation6 + $0x10] sm:$0xf]
      %v111 = vld [vmem:[#allocation6 + $0x14] sm:$0xf]
      %v112 = vld [vmem:[#allocation6 + $0x18] sm:$0xf]
      %v113 = vld [vmem:[#allocation6 + $0x1c] sm:$0xf]
      %v114 = vld [vmem:[#allocation6 + $0x20] sm:$0xf]
      %v115 = vld [vmem:[#allocation6 + $0x24] sm:$0xf]
      %v116 = vld [vmem:[#allocation6 + $0x28] sm:$0xf]
      %v117 = vld [vmem:[#allocation6 + $0x2c] sm:$0xf]
      %v118 = vld [vmem:[#allocation6 + $0x30] sm:$0xf]
      %v119 = vld [vmem:[#allocation6 + $0x34] sm:$0xf]
      %v120 = vld [vmem:[#allocation6 + $0x38] sm:$0xf]
      %v121 = vld [vmem:[#allocation6 + $0x3c] sm:$0xf]
      %v122 = vld [vmem:[#allocation8] sm:$0x1]
      %v124 = vlaneseq
      %v125 = vshrl.u32 %v124, 7
      %v126 = vsub.s32 0, %v125
      %v127 = vrot.slane %v122, %v126
      %v131 = vunpack.c.l.b16 %v104
      %v132 = vunpack.c.l.b16 %v105
      %v133 = vpack.c.b16 %v132, %v131
      %v151 = vunpack.c.l.b16 %v106
      %v152 = vunpack.c.l.b16 %v107
      %v153 = vunpack.c.l.b16 %v108
      %v154 = vunpack.c.l.b16 %v109
      %v155 = vunpack.c.l.b16 %v110
      %v156 = vunpack.c.l.b16 %v111
      %v157 = vunpack.c.l.b16 %v112
      %v158 = vunpack.c.l.b16 %v113
      %v159 = vunpack.c.l.b16 %v114
      %v160 = vunpack.c.l.b16 %v115
      %v161 = vunpack.c.l.b16 %v116
      %v162 = vunpack.c.l.b16 %v117
      %v163 = vunpack.c.l.b16 %v118
      %v164 = vunpack.c.l.b16 %v119
      %v165 = vunpack.c.l.b16 %v120
      %v166 = vunpack.c.l.b16 %v121
      %v167 = vpack.c.b16 %v152, %v151
      %v168 = vpack.c.b16 %v154, %v153
      %v169 = vpack.c.b16 %v156, %v155
      %v170 = vpack.c.b16 %v158, %v157
      %v171 = vpack.c.b16 %v160, %v159
      %v172 = vpack.c.b16 %v162, %v161
      %v173 = vpack.c.b16 %v164, %v163
      %v174 = vpack.c.b16 %v166, %v165
      %183 = vmatprep.subr.bf16.mxu0 0
      %184 = vmatpush1.bf16.msra.mxu0 %v167
      %185 = vmatprep.subr.bf16.mxu0 0
      %186 = vmatpush1.bf16.msra.mxu0 %v168
      %187 = vmatprep.subr.bf16.mxu0 0
      %188 = vmatpush1.bf16.msra.mxu0 %v169
      %189 = vmatprep.subr.bf16.mxu0 0
      %190 = vmatpush1.bf16.msra.mxu0 %v170
      %191 = vmatprep.subr.bf16.mxu0 0
      %192 = vmatpush1.bf16.msra.mxu0 %v171
      %193 = vmatprep.subr.bf16.mxu0 0
      %194 = vmatpush1.bf16.msra.mxu0 %v172
      %195 = vmatprep.subr.bf16.mxu0 0
      %196 = vmatpush1.bf16.msra.mxu0 %v173
      %197 = vmatprep.subr.bf16.mxu0 0
      %198 = vmatpush1.bf16.msra.mxu0 %v174
      %199 = vmatprep.subr.bf16.mxu0 0
      %200 = vmatpush1.bf16.msra.mxu0 0
      %201 = vmatprep.subr.bf16.mxu0 0
      %202 = vmatpush1.bf16.msra.mxu0 0
      %203 = vmatprep.subr.bf16.mxu0 0
      %204 = vmatpush1.bf16.msra.mxu0 0
      %205 = vmatprep.subr.bf16.mxu0 0
      %206 = vmatpush1.bf16.msra.mxu0 0
      %207 = vmatprep.subr.bf16.mxu0 0
      %208 = vmatpush1.bf16.msra.mxu0 0
      %209 = vmatprep.subr.bf16.mxu0 0
      %210 = vmatpush1.bf16.msra.mxu0 0
      %211 = vmatprep.subr.bf16.mxu0 0
      %212 = vmatpush1.bf16.msra.mxu0 0
      %213 = vmatprep.subr.bf16.mxu0 0
      %214 = vmatpush1.bf16.msra.mxu0 0
      %215 = vmatprep.mubr.bf16.mxu0 0
      %216 = vmatmul.mubr.bf16.gmra.mrb[0].mxu0 %v133
      %v217 = vpop.f32.mrb[0].mxu0
      %v218 = vadd.f32 %v127, %v217
      %v219 = vpop.f32.mrb[0].mxu0
      %v220 = vpop.f32.mrb[0].mxu0
      %v221 = vadd.f32 %v127, %v220
      %v222 = vpop.f32.mrb[0].mxu0
      %223 = vdwg.mxu0
      %v224 = vlaneseq
      %v225 = vshrl.u32 %v224, 7
      %v226 = vadd.s32 %v225, 8
      %vm227 = vcmp.lt.s32.totalorder %v225, 0
      %v228 = vsub.s32 0, %v225
      %v229 = vsel %vm227, %v228, %v225
      %v230 = vshrl.u32 %v229, 3
      %v231 = vand.u32 %v229, 7
      %v232 = vsub.s32 0, %v231
      %v233 = vsel %vm227, %v232, %v231
      %vm234 = vcmp.lt.s32.totalorder %v226, 0
      %v235 = vsub.s32 0, %v226
      %v236 = vsel %vm234, %v235, %v226
      %v237 = vshrl.u32 %v236, 3
      %v238 = vand.u32 %v236, 7
      %v239 = vsub.s32 0, %v238
      %v240 = vsel %vm234, %v239, %v238
      %vm241 = vcmp.ne.s32.totalorder %v233, 0
      %vm242 = vcmp.ne.s32.totalorder %v240, 0
      %vm243 = vcmp.lt.s32.totalorder %v233, 0
      %vm244 = vcmp.lt.s32.totalorder %v240, 0
      %vm245 = vmand %vm243, %vm241
      %vm246 = vmand %vm244, %vm242
      %v247 = vadd.s32 %v233, 8
      %v248 = vadd.s32 %v240, 8
      %v249 = vsel %vm245, %v247, %v233
      %v250 = vsel %vm246, %v248, %v240
      %vm251 = vcmp.ge.s32.totalorder %v249, 1
      %vm252 = vcmp.ge.s32.totalorder %v250, 1
      %v253 = vsel %vm251, 1, 0
      %v254 = vsel %vm252, 1, 0
      %vm255 = vcmp.eq.s32.totalorder %v253, 1
      %vm256 = vcmp.eq.s32.totalorder %v254, 1
      %v257 = vsel %vm255, 1, 0
      %v258 = vsel %vm256, 1, 0
      %v259 = vcvt.s32.f32 %v257
      %v260 = vcvt.s32.f32 %v258
      %vm261 = vcmp.le.s32.totalorder %v249, 6
      %vm262 = vcmp.le.s32.totalorder %v250, 6
      %v263 = vsel %vm261, 1, 0
      %v264 = vsel %vm262, 1, 0
      %vm265 = vcmp.eq.s32.totalorder %v263, 1
      %vm266 = vcmp.eq.s32.totalorder %v264, 1
      %v267 = vsel %vm265, 1, 0
      %v268 = vsel %vm266, 1, 0
      %v269 = vcvt.s32.f32 %v267
      %v270 = vcvt.s32.f32 %v268
      %v271 = vld [vmem:[#allocation9] sm:$0xf]
      %v272 = vld [vmem:[#allocation9 + $0x4] sm:$0xf]
      %v273 = vld [vmem:[#allocation9 + $0x8] sm:$0xf]
      %v274 = vld [vmem:[#allocation9 + $0xc] sm:$0xf]
      %v275 = vld [vmem:[#allocation9 + $0x10] sm:$0xf]
      %v276 = vld [vmem:[#allocation9 + $0x14] sm:$0xf]
      %v277 = vld [vmem:[#allocation9 + $0x18] sm:$0xf]
      %v278 = vld [vmem:[#allocation9 + $0x1c] sm:$0xf]
      %v279 = vld [vmem:[#allocation9 + $0x20] sm:$0xf]
      %v280 = vld [vmem:[#allocation9 + $0x24] sm:$0xf]
      %v281 = vld [vmem:[#allocation9 + $0x28] sm:$0xf]
      %v282 = vld [vmem:[#allocation9 + $0x2c] sm:$0xf]
      %v283 = vld [vmem:[#allocation9 + $0x30] sm:$0xf]
      %v284 = vld [vmem:[#allocation9 + $0x34] sm:$0xf]
      %v285 = vld [vmem:[#allocation9 + $0x38] sm:$0xf]
      %v286 = vld [vmem:[#allocation9 + $0x3c] sm:$0xf]
      %v287 = vld [vmem:[#allocation9 + $0x40] sm:$0xf]
      %v288 = vld [vmem:[#allocation9 + $0x44] sm:$0xf]
      %v289 = vld [vmem:[#allocation9 + $0x48] sm:$0xf]
      %v290 = vld [vmem:[#allocation9 + $0x4c] sm:$0xf]
      %v291 = vld [vmem:[#allocation9 + $0x50] sm:$0xf]
      %v292 = vld [vmem:[#allocation9 + $0x54] sm:$0xf]
      %v293 = vld [vmem:[#allocation9 + $0x58] sm:$0xf]
      %v294 = vld [vmem:[#allocation9 + $0x5c] sm:$0xf]
      %v295 = vld [vmem:[#allocation9 + $0x60] sm:$0xf]
      %v296 = vld [vmem:[#allocation9 + $0x64] sm:$0xf]
      %v297 = vld [vmem:[#allocation9 + $0x68] sm:$0xf]
      %v298 = vld [vmem:[#allocation9 + $0x6c] sm:$0xf]
      %v299 = vld [vmem:[#allocation9 + $0x70] sm:$0xf]
      %v300 = vld [vmem:[#allocation9 + $0x74] sm:$0xf]
      %v301 = vld [vmem:[#allocation9 + $0x78] sm:$0xf]
      %v302 = vld [vmem:[#allocation9 + $0x7c] sm:$0xf]
      %v303 = vld [vmem:[#allocation9 + $0x80] sm:$0xf]
      %v304 = vld [vmem:[#allocation9 + $0x84] sm:$0xf]
      %v305 = vld [vmem:[#allocation9 + $0x88] sm:$0xf]
      %v306 = vld [vmem:[#allocation9 + $0x8c] sm:$0xf]
      %v307 = vld [vmem:[#allocation9 + $0x90] sm:$0xf]
      %v308 = vld [vmem:[#allocation9 + $0x94] sm:$0xf]
      %v309 = vld [vmem:[#allocation9 + $0x98] sm:$0xf]
      %v310 = vld [vmem:[#allocation9 + $0x9c] sm:$0xf]
      %v311 = vld [vmem:[#allocation9 + $0xa0] sm:$0xf]
      %v312 = vld [vmem:[#allocation9 + $0xa4] sm:$0xf]
      %v313 = vld [vmem:[#allocation9 + $0xa8] sm:$0xf]
      %v314 = vld [vmem:[#allocation9 + $0xac] sm:$0xf]
      %v315 = vld [vmem:[#allocation9 + $0xb0] sm:$0xf]
      %v316 = vld [vmem:[#allocation9 + $0xb4] sm:$0xf]
      %v317 = vld [vmem:[#allocation9 + $0xb8] sm:$0xf]
      %v318 = vld [vmem:[#allocation9 + $0xbc] sm:$0xf]
      %v319 = vld [vmem:[%s4] sm:$0x1]
      %v320 = vrot.slane %v218, 7
      %v321 = vrot.slane %v221, 7
      %vm322 = vcmp.lt.s32.totalorder %v225, 1
      %v323 = vsel %vm322, %v320, %v321
      %v324 = vsel %vm322, %v321, %v320
      %v325 = vmul.f32 %v324, %v259
      %v326 = vmul.f32 %v323, %v260
      %v327 = vrot.slane %v218, 1
      %v328 = vrot.slane %v221, 1
      %vm329 = vcmp.lt.s32.totalorder %v225, 7
      %v330 = vsel %vm329, %v327, %v328
      %v331 = vsel %vm329, %v328, %v327
      %v332 = vmul.f32 %v330, %v269
      %v333 = vmul.f32 %v331, %v270
      %v334 = vpack.c.bf16 %v326, %v325
      %v335 = vpack.c.bf16 %v221, %v218
      %v336 = vpack.c.bf16 %v333, %v332
      %v338 = vlaneseq
      %v339 = vshrl.u32 %v338, 7
      %v340 = vsub.s32 0, %v339
      %v341 = vrot.slane %v319, %v340
      %v391 = vunpack.c.l.b16 %v271
      %v392 = vunpack.c.l.b16 %v272
      %v393 = vunpack.c.l.b16 %v273
      %v394 = vunpack.c.l.b16 %v274
      %v395 = vunpack.c.l.b16 %v275
      %v396 = vunpack.c.l.b16 %v276
      %v397 = vunpack.c.l.b16 %v277
      %v398 = vunpack.c.l.b16 %v278
      %v399 = vunpack.c.l.b16 %v279
      %v400 = vunpack.c.l.b16 %v280
      %v401 = vunpack.c.l.b16 %v281
      %v402 = vunpack.c.l.b16 %v282
      %v403 = vunpack.c.l.b16 %v283
      %v404 = vunpack.c.l.b16 %v284
      %v405 = vunpack.c.l.b16 %v285
      %v406 = vunpack.c.l.b16 %v286
      %v407 = vunpack.c.l.b16 %v287
      %v408 = vunpack.c.l.b16 %v288
      %v409 = vunpack.c.l.b16 %v289
      %v410 = vunpack.c.l.b16 %v290
      %v411 = vunpack.c.l.b16 %v291
      %v412 = vunpack.c.l.b16 %v292
      %v413 = vunpack.c.l.b16 %v293
      %v414 = vunpack.c.l.b16 %v294
      %v415 = vunpack.c.l.b16 %v295
      %v416 = vunpack.c.l.b16 %v296
      %v417 = vunpack.c.l.b16 %v297
      %v418 = vunpack.c.l.b16 %v298
      %v419 = vunpack.c.l.b16 %v299
      %v420 = vunpack.c.l.b16 %v300
      %v421 = vunpack.c.l.b16 %v301
      %v422 = vunpack.c.l.b16 %v302
      %v423 = vunpack.c.l.b16 %v303
      %v424 = vunpack.c.l.b16 %v304
      %v425 = vunpack.c.l.b16 %v305
      %v426 = vunpack.c.l.b16 %v306
      %v427 = vunpack.c.l.b16 %v307
      %v428 = vunpack.c.l.b16 %v308
      %v429 = vunpack.c.l.b16 %v309
      %v430 = vunpack.c.l.b16 %v310
      %v431 = vunpack.c.l.b16 %v311
      %v432 = vunpack.c.l.b16 %v312
      %v433 = vunpack.c.l.b16 %v313
      %v434 = vunpack.c.l.b16 %v314
      %v435 = vunpack.c.l.b16 %v315
      %v436 = vunpack.c.l.b16 %v316
      %v437 = vunpack.c.l.b16 %v317
      %v438 = vunpack.c.l.b16 %v318
      %v439 = vpack.c.b16 %v392, %v391
      %v440 = vpack.c.b16 %v394, %v393
      %v441 = vpack.c.b16 %v396, %v395
      %v442 = vpack.c.b16 %v398, %v397
      %v443 = vpack.c.b16 %v400, %v399
      %v444 = vpack.c.b16 %v402, %v401
      %v445 = vpack.c.b16 %v404, %v403
      %v446 = vpack.c.b16 %v406, %v405
      %v447 = vpack.c.b16 %v408, %v407
      %v448 = vpack.c.b16 %v410, %v409
      %v449 = vpack.c.b16 %v412, %v411
      %v450 = vpack.c.b16 %v414, %v413
      %v451 = vpack.c.b16 %v416, %v415
      %v452 = vpack.c.b16 %v418, %v417
      %v453 = vpack.c.b16 %v420, %v419
      %v454 = vpack.c.b16 %v422, %v421
      %v455 = vpack.c.b16 %v424, %v423
      %v456 = vpack.c.b16 %v426, %v425
      %v457 = vpack.c.b16 %v428, %v427
      %v458 = vpack.c.b16 %v430, %v429
      %v459 = vpack.c.b16 %v432, %v431
      %v460 = vpack.c.b16 %v434, %v433
      %v461 = vpack.c.b16 %v436, %v435
      %v462 = vpack.c.b16 %v438, %v437
      %487 = vmatprep.subr.bf16.mxu0 0
      %488 = vmatpush1.bf16.msra.mxu0 %v439
      %489 = vmatprep.subr.bf16.mxu0 0
      %490 = vmatpush1.bf16.msra.mxu0 %v440
      %491 = vmatprep.subr.bf16.mxu0 0
      %492 = vmatpush1.bf16.msra.mxu0 %v441
      %493 = vmatprep.subr.bf16.mxu0 0
      %494 = vmatpush1.bf16.msra.mxu0 %v442
      %495 = vmatprep.subr.bf16.mxu0 0
      %496 = vmatpush1.bf16.msra.mxu0 %v443
      %497 = vmatprep.subr.bf16.mxu0 0
      %498 = vmatpush1.bf16.msra.mxu0 %v444
      %499 = vmatprep.subr.bf16.mxu0 0
      %500 = vmatpush1.bf16.msra.mxu0 %v445
      %501 = vmatprep.subr.bf16.mxu0 0
      %502 = vmatpush1.bf16.msra.mxu0 %v446
      %503 = vmatprep.subr.bf16.mxu0 0
      %504 = vmatpush1.bf16.msra.mxu0 %v447
      %505 = vmatprep.subr.bf16.mxu0 0
      %506 = vmatpush1.bf16.msra.mxu0 %v448
      %507 = vmatprep.subr.bf16.mxu0 0
      %508 = vmatpush1.bf16.msra.mxu0 %v449
      %509 = vmatprep.subr.bf16.mxu0 0
      %510 = vmatpush1.bf16.msra.mxu0 %v450
      %511 = vmatprep.subr.bf16.mxu0 0
      %512 = vmatpush1.bf16.msra.mxu0 %v451
      %513 = vmatprep.subr.bf16.mxu0 0
      %514 = vmatpush1.bf16.msra.mxu0 %v452
      %515 = vmatprep.subr.bf16.mxu0 0
      %516 = vmatpush1.bf16.msra.mxu0 %v453
      %517 = vmatprep.subr.bf16.mxu0 0
      %518 = vmatpush1.bf16.msra.mxu0 %v454
      %519 = vmatprep.mubr.bf16.mxu0 %v335
      %520 = vmatmul.mubr.bf16.gmra.mrb[0].mxu0 %v334
      %v521 = vpop.f32.mrb[0].mxu0
      %v522 = vadd.f32 %v341, %v521
      %v523 = vpop.f32.mrb[0].mxu0
      %v524 = vpop.f32.mrb[0].mxu0
      %v525 = vadd.f32 %v341, %v524
      %v526 = vpop.f32.mrb[0].mxu0
      %527 = vdwg.mxu0
      %528 = vmatprep.subr.bf16.mxu0 0
      %529 = vmatpush1.bf16.msra.mxu0 %v455
      %530 = vmatprep.subr.bf16.mxu0 0
      %531 = vmatpush1.bf16.msra.mxu0 %v456
      %532 = vmatprep.subr.bf16.mxu0 0
      %533 = vmatpush1.bf16.msra.mxu0 %v457
      %534 = vmatprep.subr.bf16.mxu0 0
      %535 = vmatpush1.bf16.msra.mxu0 %v458
      %536 = vmatprep.subr.bf16.mxu0 0
      %537 = vmatpush1.bf16.msra.mxu0 %v459
      %538 = vmatprep.subr.bf16.mxu0 0
      %539 = vmatpush1.bf16.msra.mxu0 %v460
      %540 = vmatprep.subr.bf16.mxu0 0
      %541 = vmatpush1.bf16.msra.mxu0 %v461
      %542 = vmatprep.subr.bf16.mxu0 0
      %543 = vmatpush1.bf16.msra.mxu0 %v462
      %544 = vmatprep.subr.bf16.mxu0 0
      %545 = vmatpush1.bf16.msra.mxu0 0
      %546 = vmatprep.subr.bf16.mxu0 0
      %547 = vmatpush1.bf16.msra.mxu0 0
      %548 = vmatprep.subr.bf16.mxu0 0
      %549 = vmatpush1.bf16.msra.mxu0 0
      %550 = vmatprep.subr.bf16.mxu0 0
      %551 = vmatpush1.bf16.msra.mxu0 0
      %552 = vmatprep.subr.bf16.mxu0 0
      %553 = vmatpush1.bf16.msra.mxu0 0
      %554 = vmatprep.subr.bf16.mxu0 0
      %555 = vmatpush1.bf16.msra.mxu0 0
      %556 = vmatprep.subr.bf16.mxu0 0
      %557 = vmatpush1.bf16.msra.mxu0 0
      %558 = vmatprep.subr.bf16.mxu0 0
      %559 = vmatpush1.bf16.msra.mxu0 0
      %560 = vmatprep.mubr.bf16.mxu0 0
      %561 = vmatmul.mubr.bf16.gmra.mrb[0].mxu0 %v336
      %v562 = vpop.f32.mrb[0].mxu0
      %v563 = vadd.f32 %v522, %v562
      %v564 = vpop.f32.mrb[0].mxu0
      %v565 = vpop.f32.mrb[0].mxu0
      %v566 = vadd.f32 %v525, %v565
      %v567 = vpop.f32.mrb[0].mxu0
      %568 = vdwg.mxu0
      %v569 = vld [vmem:[%s5] sm:$0x1]
      %v570 = vld [vmem:[%s6] sm:$0x1]
      %v571 = vadd.f32 %v563, %v566
      %v572 = vrot.slane %v571, 4
      %v573 = vadd.f32 %v571, %v572
      %v574 = vrot.slane %v573, 2
      %v575 = vadd.f32 %v573, %v574
      %v576 = vrot.slane %v575, 1
      %v577 = vadd.f32 %v575, %v576
      %v578 = vrcp.pop 16.0
      %v579 = vmul.f32 %v577, %v578
      %v580 = vsub.f32 %v563, %v579
      %v581 = vsub.f32 %v566, %v579
      %v582 = vmul.f32 %v580, %v580
      %v583 = vmul.f32 %v581, %v581
      %v584 = vadd.f32 %v582, %v583
      %v585 = vrot.slane %v584, 4
      %v586 = vadd.f32 %v584, %v585
      %v587 = vrot.slane %v586, 2
      %v588 = vadd.f32 %v586, %v587
      %v589 = vrot.slane %v588, 1
      %v590 = vadd.f32 %v588, %v589
      %v591 = vmul.f32 %v590, %v578
      %v592 = vadd.f32 %v591, 1e-05
      %v593 = vrsqrt.pop %v592
      %v594 = vmul.f32 %v569, %v593
      %v596 = vlaneseq
      %v597 = vshrl.u32 %v596, 7
      %v598 = vsub.s32 0, %v597
      %v599 = vrot.slane %v594, %v598
      %v601 = vmul.f32 %v580, %v599
      %v602 = vmul.f32 %v581, %v599
      %v604 = vlaneseq
      %v605 = vshrl.u32 %v604, 7
      %v606 = vsub.s32 0, %v605
      %v607 = vrot.slane %v570, %v606
      %v609 = vadd.f32 %v601, %v607
      %v610 = vadd.f32 %v602, %v607
      %v611 = vmax.f32 %v609, 0.0
      %v612 = vmax.f32 %v610, 0.0
      %s613 = scalar_lea.vmem [#allocation9], 192
      %v614 = vld [vmem:[%s613] sm:$0xf]
      %v615 = vld [vmem:[%s613 + $0x4] sm:$0xf]
      %v616 = vld [vmem:[%s613 + $0x8] sm:$0xf]
      %v617 = vld [vmem:[%s613 + $0xc] sm:$0xf]
      %v618 = vld [vmem:[%s613 + $0x10] sm:$0xf]
      %v619 = vld [vmem:[%s613 + $0x14] sm:$0xf]
      %v620 = vld [vmem:[%s613 + $0x18] sm:$0xf]
      %v621 = vld [vmem:[%s613 + $0x1c] sm:$0xf]
      %v622 = vld [vmem:[%s613 + $0x20] sm:$0xf]
      %v623 = vld [vmem:[%s613 + $0x24] sm:$0xf]
      %v624 = vld [vmem:[%s613 + $0x28] sm:$0xf]
      %v625 = vld [vmem:[%s613 + $0x2c] sm:$0xf]
      %v626 = vld [vmem:[%s613 + $0x30] sm:$0xf]
      %v627 = vld [vmem:[%s613 + $0x34] sm:$0xf]
      %v628 = vld [vmem:[%s613 + $0x38] sm:$0xf]
      %v629 = vld [vmem:[%s613 + $0x3c] sm:$0xf]
      %v630 = vld [vmem:[%s613 + $0x40] sm:$0xf]
      %v631 = vld [vmem:[%s613 + $0x44] sm:$0xf]
      %v632 = vld [vmem:[%s613 + $0x48] sm:$0xf]
      %v633 = vld [vmem:[%s613 + $0x4c] sm:$0xf]
      %v634 = vld [vmem:[%s613 + $0x50] sm:$0xf]
      %v635 = vld [vmem:[%s613 + $0x54] sm:$0xf]
      %v636 = vld [vmem:[%s613 + $0x58] sm:$0xf]
      %v637 = vld [vmem:[%s613 + $0x5c] sm:$0xf]
      %v638 = vld [vmem:[%s613 + $0x60] sm:$0xf]
      %v639 = vld [vmem:[%s613 + $0x64] sm:$0xf]
      %v640 = vld [vmem:[%s613 + $0x68] sm:$0xf]
      %v641 = vld [vmem:[%s613 + $0x6c] sm:$0xf]
      %v642 = vld [vmem:[%s613 + $0x70] sm:$0xf]
      %v643 = vld [vmem:[%s613 + $0x74] sm:$0xf]
      %v644 = vld [vmem:[%s613 + $0x78] sm:$0xf]
      %v645 = vld [vmem:[%s613 + $0x7c] sm:$0xf]
      %v646 = vld [vmem:[%s613 + $0x80] sm:$0xf]
      %v647 = vld [vmem:[%s613 + $0x84] sm:$0xf]
      %v648 = vld [vmem:[%s613 + $0x88] sm:$0xf]
      %v649 = vld [vmem:[%s613 + $0x8c] sm:$0xf]
      %v650 = vld [vmem:[%s613 + $0x90] sm:$0xf]
      %v651 = vld [vmem:[%s613 + $0x94] sm:$0xf]
      %v652 = vld [vmem:[%s613 + $0x98] sm:$0xf]
      %v653 = vld [vmem:[%s613 + $0x9c] sm:$0xf]
      %v654 = vld [vmem:[%s613 + $0xa0] sm:$0xf]
      %v655 = vld [vmem:[%s613 + $0xa4] sm:$0xf]
      %v656 = vld [vmem:[%s613 + $0xa8] sm:$0xf]
      %v657 = vld [vmem:[%s613 + $0xac] sm:$0xf]
      %v658 = vld [vmem:[%s613 + $0xb0] sm:$0xf]
      %v659 = vld [vmem:[%s613 + $0xb4] sm:$0xf]
      %v660 = vld [vmem:[%s613 + $0xb8] sm:$0xf]
      %v661 = vld [vmem:[%s613 + $0xbc] sm:$0xf]
      %s662 = scalar_lea.vmem %s4, 1
      %v663 = vld [vmem:[%s662] sm:$0x1]
      %v664 = vrot.slane %v611, 7
      %v665 = vrot.slane %v612, 7
      %v666 = vsel %vm322, %v664, %v665
      %v667 = vsel %vm322, %v665, %v664
      %v668 = vmul.f32 %v667, %v259
      %v669 = vmul.f32 %v666, %v260
      %v670 = vrot.slane %v611, 1
      %v671 = vrot.slane %v612, 1
      %v672 = vsel %vm329, %v670, %v671
      %v673 = vsel %vm329, %v671, %v670
      %v674 = vmul.f32 %v672, %v269
      %v675 = vmul.f32 %v673, %v270
      %v676 = vpack.c.bf16 %v669, %v668
      %v677 = vpack.c.bf16 %v612, %v611
      %v678 = vpack.c.bf16 %v675, %v674
      %v680 = vlaneseq
      %v681 = vshrl.u32 %v680, 7
      %v682 = vsub.s32 0, %v681
      %v683 = vrot.slane %v663, %v682
      %v733 = vunpack.c.l.b16 %v614
      %v734 = vunpack.c.l.b16 %v615
      %v735 = vunpack.c.l.b16 %v616
      %v736 = vunpack.c.l.b16 %v617
      %v737 = vunpack.c.l.b16 %v618
      %v738 = vunpack.c.l.b16 %v619
      %v739 = vunpack.c.l.b16 %v620
      %v740 = vunpack.c.l.b16 %v621
      %v741 = vunpack.c.l.b16 %v622
      %v742 = vunpack.c.l.b16 %v623
      %v743 = vunpack.c.l.b16 %v624
      %v744 = vunpack.c.l.b16 %v625
      %v745 = vunpack.c.l.b16 %v626
      %v746 = vunpack.c.l.b16 %v627
      %v747 = vunpack.c.l.b16 %v628
      %v748 = vunpack.c.l.b16 %v629
      %v749 = vunpack.c.l.b16 %v630
      %v750 = vunpack.c.l.b16 %v631
      %v751 = vunpack.c.l.b16 %v632
      %v752 = vunpack.c.l.b16 %v633
      %v753 = vunpack.c.l.b16 %v634
      %v754 = vunpack.c.l.b16 %v635
      %v755 = vunpack.c.l.b16 %v636
      %v756 = vunpack.c.l.b16 %v637
      %v757 = vunpack.c.l.b16 %v638
      %v758 = vunpack.c.l.b16 %v639
      %v759 = vunpack.c.l.b16 %v640
      %v760 = vunpack.c.l.b16 %v641
      %v761 = vunpack.c.l.b16 %v642
      %v762 = vunpack.c.l.b16 %v643
      %v763 = vunpack.c.l.b16 %v644
      %v764 = vunpack.c.l.b16 %v645
      %v765 = vunpack.c.l.b16 %v646
      %v766 = vunpack.c.l.b16 %v647
      %v767 = vunpack.c.l.b16 %v648
      %v768 = vunpack.c.l.b16 %v649
      %v769 = vunpack.c.l.b16 %v650
      %v770 = vunpack.c.l.b16 %v651
      %v771 = vunpack.c.l.b16 %v652
      %v772 = vunpack.c.l.b16 %v653
      %v773 = vunpack.c.l.b16 %v654
      %v774 = vunpack.c.l.b16 %v655
      %v775 = vunpack.c.l.b16 %v656
      %v776 = vunpack.c.l.b16 %v657
      %v777 = vunpack.c.l.b16 %v658
      %v778 = vunpack.c.l.b16 %v659
      %v779 = vunpack.c.l.b16 %v660
      %v780 = vunpack.c.l.b16 %v661
      %v781 = vpack.c.b16 %v734, %v733
      %v782 = vpack.c.b16 %v736, %v735
      %v783 = vpack.c.b16 %v738, %v737
      %v784 = vpack.c.b16 %v740, %v739
      %v785 = vpack.c.b16 %v742, %v741
      %v786 = vpack.c.b16 %v744, %v743
      %v787 = vpack.c.b16 %v746, %v745
      %v788 = vpack.c.b16 %v748, %v747
      %v789 = vpack.c.b16 %v750, %v749
      %v790 = vpack.c.b16 %v752, %v751
      %v791 = vpack.c.b16 %v754, %v753
      %v792 = vpack.c.b16 %v756, %v755
      %v793 = vpack.c.b16 %v758, %v757
      %v794 = vpack.c.b16 %v760, %v759
      %v795 = vpack.c.b16 %v762, %v761
      %v796 = vpack.c.b16 %v764, %v763
      %v797 = vpack.c.b16 %v766, %v765
      %v798 = vpack.c.b16 %v768, %v767
      %v799 = vpack.c.b16 %v770, %v769
      %v800 = vpack.c.b16 %v772, %v771
      %v801 = vpack.c.b16 %v774, %v773
      %v802 = vpack.c.b16 %v776, %v775
      %v803 = vpack.c.b16 %v778, %v777
      %v804 = vpack.c.b16 %v780, %v779
      %829 = vmatprep.subr.bf16.mxu0 0
      %830 = vmatpush1.bf16.msra.mxu0 %v781
      %831 = vmatprep.subr.bf16.mxu0 0
      %832 = vmatpush1.bf16.msra.mxu0 %v782
      %833 = vmatprep.subr.bf16.mxu0 0
      %834 = vmatpush1.bf16.msra.mxu0 %v783
      %835 = vmatprep.subr.bf16.mxu0 0
      %836 = vmatpush1.bf16.msra.mxu0 %v784
      %837 = vmatprep.subr.bf16.mxu0 0
      %838 = vmatpush1.bf16.msra.mxu0 %v785
      %839 = vmatprep.subr.bf16.mxu0 0
      %840 = vmatpush1.bf16.msra.mxu0 %v786
      %841 = vmatprep.subr.bf16.mxu0 0
      %842 = vmatpush1.bf16.msra.mxu0 %v787
      %843 = vmatprep.subr.bf16.mxu0 0
      %844 = vmatpush1.bf16.msra.mxu0 %v788
      %845 = vmatprep.subr.bf16.mxu0 0
      %846 = vmatpush1.bf16.msra.mxu0 %v789
      %847 = vmatprep.subr.bf16.mxu0 0
      %848 = vmatpush1.bf16.msra.mxu0 %v790
      %849 = vmatprep.subr.bf16.mxu0 0
      %850 = vmatpush1.bf16.msra.mxu0 %v791
      %851 = vmatprep.subr.bf16.mxu0 0
      %852 = vmatpush1.bf16.msra.mxu0 %v792
      %853 = vmatprep.subr.bf16.mxu0 0
      %854 = vmatpush1.bf16.msra.mxu0 %v793
      %855 = vmatprep.subr.bf16.mxu0 0
      %856 = vmatpush1.bf16.msra.mxu0 %v794
      %857 = vmatprep.subr.bf16.mxu0 0
      %858 = vmatpush1.bf16.msra.mxu0 %v795
      %859 = vmatprep.subr.bf16.mxu0 0
      %860 = vmatpush1.bf16.msra.mxu0 %v796
      %861 = vmatprep.mubr.bf16.mxu0 %v677
      %862 = vmatmul.mubr.bf16.gmra.mrb[0].mxu0 %v676
      %v863 = vpop.f32.mrb[0].mxu0
      %v864 = vadd.f32 %v683, %v863
      %v865 = vpop.f32.mrb[0].mxu0
      %v866 = vpop.f32.mrb[0].mxu0
      %v867 = vadd.f32 %v683, %v866
      %v868 = vpop.f32.mrb[0].mxu0
      %869 = vdwg.mxu0
      %870 = vmatprep.subr.bf16.mxu0 0
      %871 = vmatpush1.bf16.msra.mxu0 %v797
      %872 = vmatprep.subr.bf16.mxu0 0
      %873 = vmatpush1.bf16.msra.mxu0 %v798
      %874 = vmatprep.subr.bf16.mxu0 0
      %875 = vmatpush1.bf16.msra.mxu0 %v799
      %876 = vmatprep.subr.bf16.mxu0 0
      %877 = vmatpush1.bf16.msra.mxu0 %v800
      %878 = vmatprep.subr.bf16.mxu0 0
      %879 = vmatpush1.bf16.msra.mxu0 %v801
      %880 = vmatprep.subr.bf16.mxu0 0
      %881 = vmatpush1.bf16.msra.mxu0 %v802
      %882 = vmatprep.subr.bf16.mxu0 0
      %883 = vmatpush1.bf16.msra.mxu0 %v803
      %884 = vmatprep.subr.bf16.mxu0 0
      %885 = vmatpush1.bf16.msra.mxu0 %v804
      %886 = vmatprep.subr.bf16.mxu0 0
      %887 = vmatpush1.bf16.msra.mxu0 0
      %888 = vmatprep.subr.bf16.mxu0 0
      %889 = vmatpush1.bf16.msra.mxu0 0
      %890 = vmatprep.subr.bf16.mxu0 0
      %891 = vmatpush1.bf16.msra.mxu0 0
      %892 = vmatprep.subr.bf16.mxu0 0
      %893 = vmatpush1.bf16.msra.mxu0 0
      %894 = vmatprep.subr.bf16.mxu0 0
      %895 = vmatpush1.bf16.msra.mxu0 0
      %896 = vmatprep.subr.bf16.mxu0 0
      %897 = vmatpush1.bf16.msra.mxu0 0
      %898 = vmatprep.subr.bf16.mxu0 0
      %899 = vmatpush1.bf16.msra.mxu0 0
      %900 = vmatprep.subr.bf16.mxu0 0
      %901 = vmatpush1.bf16.msra.mxu0 0
      %902 = vmatprep.mubr.bf16.mxu0 0
      %903 = vmatmul.mubr.bf16.gmra.mrb[0].mxu0 %v678
      %v904 = vpop.f32.mrb[0].mxu0
      %v905 = vadd.f32 %v864, %v904
      %v906 = vpop.f32.mrb[0].mxu0
      %v907 = vpop.f32.mrb[0].mxu0
      %v908 = vadd.f32 %v867, %v907
      %v909 = vpop.f32.mrb[0].mxu0
      %910 = vdwg.mxu0
      %s911 = scalar_lea.vmem %s5, 1
      %v912 = vld [vmem:[%s911] sm:$0x1]
      %s913 = scalar_lea.vmem %s6, 1
      %v914 = vld [vmem:[%s913] sm:$0x1]
      %v915 = vadd.f32 %v905, %v908
      %v916 = vrot.slane %v915, 4
      %v917 = vadd.f32 %v915, %v916
      %v918 = vrot.slane %v917, 2
      %v919 = vadd.f32 %v917, %v918
      %v920 = vrot.slane %v919, 1
      %v921 = vadd.f32 %v919, %v920
      %v922 = vmul.f32 %v921, %v578
      %v923 = vsub.f32 %v905, %v922
      %v924 = vsub.f32 %v908, %v922
      %v925 = vmul.f32 %v923, %v923
      %v926 = vmul.f32 %v924, %v924
      %v927 = vadd.f32 %v925, %v926
      %v928 = vrot.slane %v927, 4
      %v929 = vadd.f32 %v927, %v928
      %v930 = vrot.slane %v929, 2
      %v931 = vadd.f32 %v929, %v930
      %v932 = vrot.slane %v931, 1
      %v933 = vadd.f32 %v931, %v932
      %v934 = vmul.f32 %v933, %v578
      %v935 = vadd.f32 %v934, 1e-05
      %v936 = vrsqrt.pop %v935
      %v937 = vmul.f32 %v912, %v936
      %v939 = vlaneseq
      %v940 = vshrl.u32 %v939, 7
      %v941 = vsub.s32 0, %v940
      %v942 = vrot.slane %v937, %v941
      %v944 = vmul.f32 %v923, %v942
      %v945 = vmul.f32 %v924, %v942
      %v947 = vlaneseq
      %v948 = vshrl.u32 %v947, 7
      %v949 = vsub.s32 0, %v948
      %v950 = vrot.slane %v914, %v949
      %v952 = vadd.f32 %v944, %v950
      %v953 = vadd.f32 %v945, %v950
      %v954 = vadd.f32 %v952, %v218
      %v955 = vadd.f32 %v953, %v221
      %v956 = vmax.f32 %v954, 0.0
      %v957 = vmax.f32 %v955, 0.0
      %s958 = scalar_lea.vmem [#allocation9], 384
      %v959 = vld [vmem:[%s958] sm:$0xf]
      %v960 = vld [vmem:[%s958 + $0x4] sm:$0xf]
      %v961 = vld [vmem:[%s958 + $0x8] sm:$0xf]
      %v962 = vld [vmem:[%s958 + $0xc] sm:$0xf]
      %v963 = vld [vmem:[%s958 + $0x10] sm:$0xf]
      %v964 = vld [vmem:[%s958 + $0x14] sm:$0xf]
      %v965 = vld [vmem:[%s958 + $0x18] sm:$0xf]
      %v966 = vld [vmem:[%s958 + $0x1c] sm:$0xf]
      %v967 = vld [vmem:[%s958 + $0x20] sm:$0xf]
      %v968 = vld [vmem:[%s958 + $0x24] sm:$0xf]
      %v969 = vld [vmem:[%s958 + $0x28] sm:$0xf]
      %v970 = vld [vmem:[%s958 + $0x2c] sm:$0xf]
      %v971 = vld [vmem:[%s958 + $0x30] sm:$0xf]
      %v972 = vld [vmem:[%s958 + $0x34] sm:$0xf]
      %v973 = vld [vmem:[%s958 + $0x38] sm:$0xf]
      %v974 = vld [vmem:[%s958 + $0x3c] sm:$0xf]
      %v975 = vld [vmem:[%s958 + $0x40] sm:$0xf]
      %v976 = vld [vmem:[%s958 + $0x44] sm:$0xf]
      %v977 = vld [vmem:[%s958 + $0x48] sm:$0xf]
      %v978 = vld [vmem:[%s958 + $0x4c] sm:$0xf]
      %v979 = vld [vmem:[%s958 + $0x50] sm:$0xf]
      %v980 = vld [vmem:[%s958 + $0x54] sm:$0xf]
      %v981 = vld [vmem:[%s958 + $0x58] sm:$0xf]
      %v982 = vld [vmem:[%s958 + $0x5c] sm:$0xf]
      %v983 = vld [vmem:[%s958 + $0x60] sm:$0xf]
      %v984 = vld [vmem:[%s958 + $0x64] sm:$0xf]
      %v985 = vld [vmem:[%s958 + $0x68] sm:$0xf]
      %v986 = vld [vmem:[%s958 + $0x6c] sm:$0xf]
      %v987 = vld [vmem:[%s958 + $0x70] sm:$0xf]
      %v988 = vld [vmem:[%s958 + $0x74] sm:$0xf]
      %v989 = vld [vmem:[%s958 + $0x78] sm:$0xf]
      %v990 = vld [vmem:[%s958 + $0x7c] sm:$0xf]
      %v991 = vld [vmem:[%s958 + $0x80] sm:$0xf]
      %v992 = vld [vmem:[%s958 + $0x84] sm:$0xf]
      %v993 = vld [vmem:[%s958 + $0x88] sm:$0xf]
      %v994 = vld [vmem:[%s958 + $0x8c] sm:$0xf]
      %v995 = vld [vmem:[%s958 + $0x90] sm:$0xf]
      %v996 = vld [vmem:[%s958 + $0x94] sm:$0xf]
      %v997 = vld [vmem:[%s958 + $0x98] sm:$0xf]
      %v998 = vld [vmem:[%s958 + $0x9c] sm:$0xf]
      %v999 = vld [vmem:[%s958 + $0xa0] sm:$0xf]
      %v1000 = vld [vmem:[%s958 + $0xa4] sm:$0xf]
      %v1001 = vld [vmem:[%s958 + $0xa8] sm:$0xf]
      %v1002 = vld [vmem:[%s958 + $0xac] sm:$0xf]
      %v1003 = vld [vmem:[%s958 + $0xb0] sm:$0xf]
      %v1004 = vld [vmem:[%s958 + $0xb4] sm:$0xf]
      %v1005 = vld [vmem:[%s958 + $0xb8] sm:$0xf]
      %v1006 = vld [vmem:[%s958 + $0xbc] sm:$0xf]
      %s1007 = scalar_lea.vmem %s4, 2
      %v1008 = vld [vmem:[%s1007] sm:$0x1]
      %v1009 = vrot.slane %v956, 7
      %v1010 = vrot.slane %v957, 7
      %v1011 = vsel %vm322, %v1009, %v1010
      %v1012 = vsel %vm322, %v1010, %v1009
      %v1013 = vmul.f32 %v1012, %v259
      %v1014 = vmul.f32 %v1011, %v260
      %v1015 = vrot.slane %v956, 1
      %v1016 = vrot.slane %v957, 1
      %v1017 = vsel %vm329, %v1015, %v1016
      %v1018 = vsel %vm329, %v1016, %v1015
      %v1019 = vmul.f32 %v1017, %v269
      %v1020 = vmul.f32 %v1018, %v270
      %v1021 = vpack.c.bf16 %v1014, %v1013
      %v1022 = vpack.c.bf16 %v957, %v956
      %v1023 = vpack.c.bf16 %v1020, %v1019
      %v1025 = vlaneseq
      %v1026 = vshrl.u32 %v1025, 7
      %v1027 = vsub.s32 0, %v1026
      %v1028 = vrot.slane %v1008, %v1027
      %v1078 = vunpack.c.l.b16 %v959
      %v1079 = vunpack.c.l.b16 %v960
      %v1080 = vunpack.c.l.b16 %v961
      %v1081 = vunpack.c.l.b16 %v962
      %v1082 = vunpack.c.l.b16 %v963
      %v1083 = vunpack.c.l.b16 %v964
      %v1084 = vunpack.c.l.b16 %v965
      %v1085 = vunpack.c.l.b16 %v966
      %v1086 = vunpack.c.l.b16 %v967
      %v1087 = vunpack.c.l.b16 %v968
      %v1088 = vunpack.c.l.b16 %v969
      %v1089 = vunpack.c.l.b16 %v970
      %v1090 = vunpack.c.l.b16 %v971
      %v1091 = vunpack.c.l.b16 %v972
      %v1092 = vunpack.c.l.b16 %v973
      %v1093 = vunpack.c.l.b16 %v974
      %v1094 = vunpack.c.l.b16 %v975
      %v1095 = vunpack.c.l.b16 %v976
      %v1096 = vunpack.c.l.b16 %v977
      %v1097 = vunpack.c.l.b16 %v978
      %v1098 = vunpack.c.l.b16 %v979
      %v1099 = vunpack.c.l.b16 %v980
      %v1100 = vunpack.c.l.b16 %v981
      %v1101 = vunpack.c.l.b16 %v982
      %v1102 = vunpack.c.l.b16 %v983
      %v1103 = vunpack.c.l.b16 %v984
      %v1104 = vunpack.c.l.b16 %v985
      %v1105 = vunpack.c.l.b16 %v986
      %v1106 = vunpack.c.l.b16 %v987
      %v1107 = vunpack.c.l.b16 %v988
      %v1108 = vunpack.c.l.b16 %v989
      %v1109 = vunpack.c.l.b16 %v990
      %v1110 = vunpack.c.l.b16 %v991
      %v1111 = vunpack.c.l.b16 %v992
      %v1112 = vunpack.c.l.b16 %v993
      %v1113 = vunpack.c.l.b16 %v994
      %v1114 = vunpack.c.l.b16 %v995
      %v1115 = vunpack.c.l.b16 %v996
      %v1116 = vunpack.c.l.b16 %v997
      %v1117 = vunpack.c.l.b16 %v998
      %v1118 = vunpack.c.l.b16 %v999
      %v1119 = vunpack.c.l.b16 %v1000
      %v1120 = vunpack.c.l.b16 %v1001
      %v1121 = vunpack.c.l.b16 %v1002
      %v1122 = vunpack.c.l.b16 %v1003
      %v1123 = vunpack.c.l.b16 %v1004
      %v1124 = vunpack.c.l.b16 %v1005
      %v1125 = vunpack.c.l.b16 %v1006
      %v1126 = vpack.c.b16 %v1079, %v1078
      %v1127 = vpack.c.b16 %v1081, %v1080
      %v1128 = vpack.c.b16 %v1083, %v1082
      %v1129 = vpack.c.b16 %v1085, %v1084
      %v1130 = vpack.c.b16 %v1087, %v1086
      %v1131 = vpack.c.b16 %v1089, %v1088
      %v1132 = vpack.c.b16 %v1091, %v1090
      %v1133 = vpack.c.b16 %v1093, %v1092
      %v1134 = vpack.c.b16 %v1095, %v1094
      %v1135 = vpack.c.b16 %v1097, %v1096
      %v1136 = vpack.c.b16 %v1099, %v1098
      %v1137 = vpack.c.b16 %v1101, %v1100
      %v1138 = vpack.c.b16 %v1103, %v1102
      %v1139 = vpack.c.b16 %v1105, %v1104
      %v1140 = vpack.c.b16 %v1107, %v1106
      %v1141 = vpack.c.b16 %v1109, %v1108
      %v1142 = vpack.c.b16 %v1111, %v1110
      %v1143 = vpack.c.b16 %v1113, %v1112
      %v1144 = vpack.c.b16 %v1115, %v1114
      %v1145 = vpack.c.b16 %v1117, %v1116
      %v1146 = vpack.c.b16 %v1119, %v1118
      %v1147 = vpack.c.b16 %v1121, %v1120
      %v1148 = vpack.c.b16 %v1123, %v1122
      %v1149 = vpack.c.b16 %v1125, %v1124
      %1174 = vmatprep.subr.bf16.mxu0 0
      %1175 = vmatpush1.bf16.msra.mxu0 %v1126
      %1176 = vmatprep.subr.bf16.mxu0 0
      %1177 = vmatpush1.bf16.msra.mxu0 %v1127
      %1178 = vmatprep.subr.bf16.mxu0 0
      %1179 = vmatpush1.bf16.msra.mxu0 %v1128
      %1180 = vmatprep.subr.bf16.mxu0 0
      %1181 = vmatpush1.bf16.msra.mxu0 %v1129
      %1182 = vmatprep.subr.bf16.mxu0 0
      %1183 = vmatpush1.bf16.msra.mxu0 %v1130
      %1184 = vmatprep.subr.bf16.mxu0 0
      %1185 = vmatpush1.bf16.msra.mxu0 %v1131
      %1186 = vmatprep.subr.bf16.mxu0 0
      %1187 = vmatpush1.bf16.msra.mxu0 %v1132
      %1188 = vmatprep.subr.bf16.mxu0 0
      %1189 = vmatpush1.bf16.msra.mxu0 %v1133
      %1190 = vmatprep.subr.bf16.mxu0 0
      %1191 = vmatpush1.bf16.msra.mxu0 %v1134
      %1192 = vmatprep.subr.bf16.mxu0 0
      %1193 = vmatpush1.bf16.msra.mxu0 %v1135
      %1194 = vmatprep.subr.bf16.mxu0 0
      %1195 = vmatpush1.bf16.msra.mxu0 %v1136
      %1196 = vmatprep.subr.bf16.mxu0 0
      %1197 = vmatpush1.bf16.msra.mxu0 %v1137
      %1198 = vmatprep.subr.bf16.mxu0 0
      %1199 = vmatpush1.bf16.msra.mxu0 %v1138
      %1200 = vmatprep.subr.bf16.mxu0 0
      %1201 = vmatpush1.bf16.msra.mxu0 %v1139
      %1202 = vmatprep.subr.bf16.mxu0 0
      %1203 = vmatpush1.bf16.msra.mxu0 %v1140
      %1204 = vmatprep.subr.bf16.mxu0 0
      %1205 = vmatpush1.bf16.msra.mxu0 %v1141
      %1206 = vmatprep.mubr.bf16.mxu0 %v1022
      %1207 = vmatmul.mubr.bf16.gmra.mrb[0].mxu0 %v1021
      %v1208 = vpop.f32.mrb[0].mxu0
      %v1209 = vadd.f32 %v1028, %v1208
      %v1210 = vpop.f32.mrb[0].mxu0
      %v1211 = vpop.f32.mrb[0].mxu0
      %v1212 = vadd.f32 %v1028, %v1211
      %v1213 = vpop.f32.mrb[0].mxu0
      %1214 = vdwg.mxu0
      %1215 = vmatprep.subr.bf16.mxu0 0
      %1216 = vmatpush1.bf16.msra.mxu0 %v1142
      %1217 = vmatprep.subr.bf16.mxu0 0
      %1218 = vmatpush1.bf16.msra.mxu0 %v1143
      %1219 = vmatprep.subr.bf16.mxu0 0
      %1220 = vmatpush1.bf16.msra.mxu0 %v1144
      %1221 = vmatprep.subr.bf16.mxu0 0
      %1222 = vmatpush1.bf16.msra.mxu0 %v1145
      %1223 = vmatprep.subr.bf16.mxu0 0
      %1224 = vmatpush1.bf16.msra.mxu0 %v1146
      %1225 = vmatprep.subr.bf16.mxu0 0
      %1226 = vmatpush1.bf16.msra.mxu0 %v1147
      %1227 = vmatprep.subr.bf16.mxu0 0
      %1228 = vmatpush1.bf16.msra.mxu0 %v1148
      %1229 = vmatprep.subr.bf16.mxu0 0
      %1230 = vmatpush1.bf16.msra.mxu0 %v1149
      %1231 = vmatprep.subr.bf16.mxu0 0
      %1232 = vmatpush1.bf16.msra.mxu0 0
      %1233 = vmatprep.subr.bf16.mxu0 0
      %1234 = vmatpush1.bf16.msra.mxu0 0
      %1235 = vmatprep.subr.bf16.mxu0 0
      %1236 = vmatpush1.bf16.msra.mxu0 0
      %1237 = vmatprep.subr.bf16.mxu0 0
      %1238 = vmatpush1.bf16.msra.mxu0 0
      %1239 = vmatprep.subr.bf16.mxu0 0
      %1240 = vmatpush1.bf16.msra.mxu0 0
      %1241 = vmatprep.subr.bf16.mxu0 0
      %1242 = vmatpush1.bf16.msra.mxu0 0
      %1243 = vmatprep.subr.bf16.mxu0 0
      %1244 = vmatpush1.bf16.msra.mxu0 0
      %1245 = vmatprep.subr.bf16.mxu0 0
      %1246 = vmatpush1.bf16.msra.mxu0 0
      %1247 = vmatprep.mubr.bf16.mxu0 0
      %1248 = vmatmul.mubr.bf16.gmra.mrb[0].mxu0 %v1023
      %v1249 = vpop.f32.mrb[0].mxu0
      %v1250 = vadd.f32 %v1209, %v1249
      %v1251 = vpop.f32.mrb[0].mxu0
      %v1252 = vpop.f32.mrb[0].mxu0
      %v1253 = vadd.f32 %v1212, %v1252
      %v1254 = vpop.f32.mrb[0].mxu0
      %1255 = vdwg.mxu0
      %s1256 = scalar_lea.vmem %s5, 2
      %v1257 = vld [vmem:[%s1256] sm:$0x1]
      %s1258 = scalar_lea.vmem %s6, 2
      %v1259 = vld [vmem:[%s1258] sm:$0x1]
      %v1260 = vadd.f32 %v1250, %v1253
      %v1261 = vrot.slane %v1260, 4
      %v1262 = vadd.f32 %v1260, %v1261
      %v1263 = vrot.slane %v1262, 2
      %v1264 = vadd.f32 %v1262, %v1263
      %v1265 = vrot.slane %v1264, 1
      %v1266 = vadd.f32 %v1264, %v1265
      %v1267 = vmul.f32 %v1266, %v578
      %v1268 = vsub.f32 %v1250, %v1267
      %v1269 = vsub.f32 %v1253, %v1267
      %v1270 = vmul.f32 %v1268, %v1268
      %v1271 = vmul.f32 %v1269, %v1269
      %v1272 = vadd.f32 %v1270, %v1271
      %v1273 = vrot.slane %v1272, 4
      %v1274 = vadd.f32 %v1272, %v1273
      %v1275 = vrot.slane %v1274, 2
      %v1276 = vadd.f32 %v1274, %v1275
      %v1277 = vrot.slane %v1276, 1
      %v1278 = vadd.f32 %v1276, %v1277
      %v1279 = vmul.f32 %v1278, %v578
      %v1280 = vadd.f32 %v1279, 1e-05
      %v1281 = vrsqrt.pop %v1280
      %v1282 = vmul.f32 %v1257, %v1281
      %v1284 = vlaneseq
      %v1285 = vshrl.u32 %v1284, 7
      %v1286 = vsub.s32 0, %v1285
      %v1287 = vrot.slane %v1282, %v1286
      %v1289 = vmul.f32 %v1268, %v1287
      %v1290 = vmul.f32 %v1269, %v1287
      %v1292 = vlaneseq
      %v1293 = vshrl.u32 %v1292, 7
      %v1294 = vsub.s32 0, %v1293
      %v1295 = vrot.slane %v1259, %v1294
      %v1297 = vadd.f32 %v1289, %v1295
      %v1298 = vadd.f32 %v1290, %v1295
      %v1299 = vmax.f32 %v1297, 0.0
      %v1300 = vmax.f32 %v1298, 0.0
      %s1301 = scalar_lea.vmem [#allocation9], 576
      %v1302 = vld [vmem:[%s1301] sm:$0xf]
      %v1303 = vld [vmem:[%s1301 + $0x4] sm:$0xf]
      %v1304 = vld [vmem:[%s1301 + $0x8] sm:$0xf]
      %v1305 = vld [vmem:[%s1301 + $0xc] sm:$0xf]
      %v1306 = vld [vmem:[%s1301 + $0x10] sm:$0xf]
      %v1307 = vld [vmem:[%s1301 + $0x14] sm:$0xf]
      %v1308 = vld [vmem:[%s1301 + $0x18] sm:$0xf]
      %v1309 = vld [vmem:[%s1301 + $0x1c] sm:$0xf]
      %v1310 = vld [vmem:[%s1301 + $0x20] sm:$0xf]
      %v1311 = vld [vmem:[%s1301 + $0x24] sm:$0xf]
      %v1312 = vld [vmem:[%s1301 + $0x28] sm:$0xf]
      %v1313 = vld [vmem:[%s1301 + $0x2c] sm:$0xf]
      %v1314 = vld [vmem:[%s1301 + $0x30] sm:$0xf]
      %v1315 = vld [vmem:[%s1301 + $0x34] sm:$0xf]
      %v1316 = vld [vmem:[%s1301 + $0x38] sm:$0xf]
      %v1317 = vld [vmem:[%s1301 + $0x3c] sm:$0xf]
      %v1318 = vld [vmem:[%s1301 + $0x40] sm:$0xf]
      %v1319 = vld [vmem:[%s1301 + $0x44] sm:$0xf]
      %v1320 = vld [vmem:[%s1301 + $0x48] sm:$0xf]
      %v1321 = vld [vmem:[%s1301 + $0x4c] sm:$0xf]
      %v1322 = vld [vmem:[%s1301 + $0x50] sm:$0xf]
      %v1323 = vld [vmem:[%s1301 + $0x54] sm:$0xf]
      %v1324 = vld [vmem:[%s1301 + $0x58] sm:$0xf]
      %v1325 = vld [vmem:[%s1301 + $0x5c] sm:$0xf]
      %v1326 = vld [vmem:[%s1301 + $0x60] sm:$0xf]
      %v1327 = vld [vmem:[%s1301 + $0x64] sm:$0xf]
      %v1328 = vld [vmem:[%s1301 + $0x68] sm:$0xf]
      %v1329 = vld [vmem:[%s1301 + $0x6c] sm:$0xf]
      %v1330 = vld [vmem:[%s1301 + $0x70] sm:$0xf]
      %v1331 = vld [vmem:[%s1301 + $0x74] sm:$0xf]
      %v1332 = vld [vmem:[%s1301 + $0x78] sm:$0xf]
      %v1333 = vld [vmem:[%s1301 + $0x7c] sm:$0xf]
      %v1334 = vld [vmem:[%s1301 + $0x80] sm:$0xf]
      %v1335 = vld [vmem:[%s1301 + $0x84] sm:$0xf]
      %v1336 = vld [vmem:[%s1301 + $0x88] sm:$0xf]
      %v1337 = vld [vmem:[%s1301 + $0x8c] sm:$0xf]
      %v1338 = vld [vmem:[%s1301 + $0x90] sm:$0xf]
      %v1339 = vld [vmem:[%s1301 + $0x94] sm:$0xf]
      %v1340 = vld [vmem:[%s1301 + $0x98] sm:$0xf]
      %v1341 = vld [vmem:[%s1301 + $0x9c] sm:$0xf]
      %v1342 = vld [vmem:[%s1301 + $0xa0] sm:$0xf]
      %v1343 = vld [vmem:[%s1301 + $0xa4] sm:$0xf]
      %v1344 = vld [vmem:[%s1301 + $0xa8] sm:$0xf]
      %v1345 = vld [vmem:[%s1301 + $0xac] sm:$0xf]
      %v1346 = vld [vmem:[%s1301 + $0xb0] sm:$0xf]
      %v1347 = vld [vmem:[%s1301 + $0xb4] sm:$0xf]
      %v1348 = vld [vmem:[%s1301 + $0xb8] sm:$0xf]
      %v1349 = vld [vmem:[%s1301 + $0xbc] sm:$0xf]
      %s1350 = scalar_lea.vmem %s4, 3
      %v1351 = vld [vmem:[%s1350] sm:$0x1]
      %v1352 = vrot.slane %v1299, 7
      %v1353 = vrot.slane %v1300, 7
      %v1354 = vsel %vm322, %v1352, %v1353
      %v1355 = vsel %vm322, %v1353, %v1352
      %v1356 = vmul.f32 %v1355, %v259
      %v1357 = vmul.f32 %v1354, %v260
      %v1358 = vrot.slane %v1299, 1
      %v1359 = vrot.slane %v1300, 1
      %v1360 = vsel %vm329, %v1358, %v1359
      %v1361 = vsel %vm329, %v1359, %v1358
      %v1362 = vmul.f32 %v1360, %v269
      %v1363 = vmul.f32 %v1361, %v270
      %v1364 = vpack.c.bf16 %v1357, %v1356
      %v1365 = vpack.c.bf16 %v1300, %v1299
      %v1366 = vpack.c.bf16 %v1363, %v1362
      %v1368 = vlaneseq
      %v1369 = vshrl.u32 %v1368, 7
      %v1370 = vsub.s32 0, %v1369
      %v1371 = vrot.slane %v1351, %v1370
      %v1421 = vunpack.c.l.b16 %v1302
      %v1422 = vunpack.c.l.b16 %v1303
      %v1423 = vunpack.c.l.b16 %v1304
      %v1424 = vunpack.c.l.b16 %v1305
      %v1425 = vunpack.c.l.b16 %v1306
      %v1426 = vunpack.c.l.b16 %v1307
      %v1427 = vunpack.c.l.b16 %v1308
      %v1428 = vunpack.c.l.b16 %v1309
      %v1429 = vunpack.c.l.b16 %v1310
      %v1430 = vunpack.c.l.b16 %v1311
      %v1431 = vunpack.c.l.b16 %v1312
      %v1432 = vunpack.c.l.b16 %v1313
      %v1433 = vunpack.c.l.b16 %v1314
      %v1434 = vunpack.c.l.b16 %v1315
      %v1435 = vunpack.c.l.b16 %v1316
      %v1436 = vunpack.c.l.b16 %v1317
      %v1437 = vunpack.c.l.b16 %v1318
      %v1438 = vunpack.c.l.b16 %v1319
      %v1439 = vunpack.c.l.b16 %v1320
      %v1440 = vunpack.c.l.b16 %v1321
      %v1441 = vunpack.c.l.b16 %v1322
      %v1442 = vunpack.c.l.b16 %v1323
      %v1443 = vunpack.c.l.b16 %v1324
      %v1444 = vunpack.c.l.b16 %v1325
      %v1445 = vunpack.c.l.b16 %v1326
      %v1446 = vunpack.c.l.b16 %v1327
      %v1447 = vunpack.c.l.b16 %v1328
      %v1448 = vunpack.c.l.b16 %v1329
      %v1449 = vunpack.c.l.b16 %v1330
      %v1450 = vunpack.c.l.b16 %v1331
      %v1451 = vunpack.c.l.b16 %v1332
      %v1452 = vunpack.c.l.b16 %v1333
      %v1453 = vunpack.c.l.b16 %v1334
      %v1454 = vunpack.c.l.b16 %v1335
      %v1455 = vunpack.c.l.b16 %v1336
      %v1456 = vunpack.c.l.b16 %v1337
      %v1457 = vunpack.c.l.b16 %v1338
      %v1458 = vunpack.c.l.b16 %v1339
      %v1459 = vunpack.c.l.b16 %v1340
      %v1460 = vunpack.c.l.b16 %v1341
      %v1461 = vunpack.c.l.b16 %v1342
      %v1462 = vunpack.c.l.b16 %v1343
      %v1463 = vunpack.c.l.b16 %v1344
      %v1464 = vunpack.c.l.b16 %v1345
      %v1465 = vunpack.c.l.b16 %v1346
      %v1466 = vunpack.c.l.b16 %v1347
      %v1467 = vunpack.c.l.b16 %v1348
      %v1468 = vunpack.c.l.b16 %v1349
      %v1469 = vpack.c.b16 %v1422, %v1421
      %v1470 = vpack.c.b16 %v1424, %v1423
      %v1471 = vpack.c.b16 %v1426, %v1425
      %v1472 = vpack.c.b16 %v1428, %v1427
      %v1473 = vpack.c.b16 %v1430, %v1429
      %v1474 = vpack.c.b16 %v1432, %v1431
      %v1475 = vpack.c.b16 %v1434, %v1433
      %v1476 = vpack.c.b16 %v1436, %v1435
      %v1477 = vpack.c.b16 %v1438, %v1437
      %v1478 = vpack.c.b16 %v1440, %v1439
      %v1479 = vpack.c.b16 %v1442, %v1441
      %v1480 = vpack.c.b16 %v1444, %v1443
      %v1481 = vpack.c.b16 %v1446, %v1445
      %v1482 = vpack.c.b16 %v1448, %v1447
      %v1483 = vpack.c.b16 %v1450, %v1449
      %v1484 = vpack.c.b16 %v1452, %v1451
      %v1485 = vpack.c.b16 %v1454, %v1453
      %v1486 = vpack.c.b16 %v1456, %v1455
      %v1487 = vpack.c.b16 %v1458, %v1457
      %v1488 = vpack.c.b16 %v1460, %v1459
      %v1489 = vpack.c.b16 %v1462, %v1461
      %v1490 = vpack.c.b16 %v1464, %v1463
      %v1491 = vpack.c.b16 %v1466, %v1465
      %v1492 = vpack.c.b16 %v1468, %v1467
      %1517 = vmatprep.subr.bf16.mxu0 0
      %1518 = vmatpush1.bf16.msra.mxu0 %v1469
      %1519 = vmatprep.subr.bf16.mxu0 0
      %1520 = vmatpush1.bf16.msra.mxu0 %v1470
      %1521 = vmatprep.subr.bf16.mxu0 0
      %1522 = vmatpush1.bf16.msra.mxu0 %v1471
      %1523 = vmatprep.subr.bf16.mxu0 0
      %1524 = vmatpush1.bf16.msra.mxu0 %v1472
      %1525 = vmatprep.subr.bf16.mxu0 0
      %1526 = vmatpush1.bf16.msra.mxu0 %v1473
      %1527 = vmatprep.subr.bf16.mxu0 0
      %1528 = vmatpush1.bf16.msra.mxu0 %v1474
      %1529 = vmatprep.subr.bf16.mxu0 0
      %1530 = vmatpush1.bf16.msra.mxu0 %v1475
      %1531 = vmatprep.subr.bf16.mxu0 0
      %1532 = vmatpush1.bf16.msra.mxu0 %v1476
      %1533 = vmatprep.subr.bf16.mxu0 0
      %1534 = vmatpush1.bf16.msra.mxu0 %v1477
      %1535 = vmatprep.subr.bf16.mxu0 0
      %1536 = vmatpush1.bf16.msra.mxu0 %v1478
      %1537 = vmatprep.subr.bf16.mxu0 0
      %1538 = vmatpush1.bf16.msra.mxu0 %v1479
      %1539 = vmatprep.subr.bf16.mxu0 0
      %1540 = vmatpush1.bf16.msra.mxu0 %v1480
      %1541 = vmatprep.subr.bf16.mxu0 0
      %1542 = vmatpush1.bf16.msra.mxu0 %v1481
      %1543 = vmatprep.subr.bf16.mxu0 0
      %1544 = vmatpush1.bf16.msra.mxu0 %v1482
      %1545 = vmatprep.subr.bf16.mxu0 0
      %1546 = vmatpush1.bf16.msra.mxu0 %v1483
      %1547 = vmatprep.subr.bf16.mxu0 0
      %1548 = vmatpush1.bf16.msra.mxu0 %v1484
      %1549 = vmatprep.mubr.bf16.mxu0 %v1365
      %1550 = vmatmul.mubr.bf16.gmra.mrb[0].mxu0 %v1364
      %v1551 = vpop.f32.mrb[0].mxu0
      %v1552 = vadd.f32 %v1371, %v1551
      %v1553 = vpop.f32.mrb[0].mxu0
      %v1554 = vpop.f32.mrb[0].mxu0
      %v1555 = vadd.f32 %v1371, %v1554
      %v1556 = vpop.f32.mrb[0].mxu0
      %1557 = vdwg.mxu0
      %1558 = vmatprep.subr.bf16.mxu0 0
      %1559 = vmatpush1.bf16.msra.mxu0 %v1485
      %1560 = vmatprep.subr.bf16.mxu0 0
      %1561 = vmatpush1.bf16.msra.mxu0 %v1486
      %1562 = vmatprep.subr.bf16.mxu0 0
      %1563 = vmatpush1.bf16.msra.mxu0 %v1487
      %1564 = vmatprep.subr.bf16.mxu0 0
      %1565 = vmatpush1.bf16.msra.mxu0 %v1488
      %1566 = vmatprep.subr.bf16.mxu0 0
      %1567 = vmatpush1.bf16.msra.mxu0 %v1489
      %1568 = vmatprep.subr.bf16.mxu0 0
      %1569 = vmatpush1.bf16.msra.mxu0 %v1490
      %1570 = vmatprep.subr.bf16.mxu0 0
      %1571 = vmatpush1.bf16.msra.mxu0 %v1491
      %1572 = vmatprep.subr.bf16.mxu0 0
      %1573 = vmatpush1.bf16.msra.mxu0 %v1492
      %1574 = vmatprep.subr.bf16.mxu0 0
      %1575 = vmatpush1.bf16.msra.mxu0 0
      %1576 = vmatprep.subr.bf16.mxu0 0
      %1577 = vmatpush1.bf16.msra.mxu0 0
      %1578 = vmatprep.subr.bf16.mxu0 0
      %1579 = vmatpush1.bf16.msra.mxu0 0
      %1580 = vmatprep.subr.bf16.mxu0 0
      %1581 = vmatpush1.bf16.msra.mxu0 0
      %1582 = vmatprep.subr.bf16.mxu0 0
      %1583 = vmatpush1.bf16.msra.mxu0 0
      %1584 = vmatprep.subr.bf16.mxu0 0
      %1585 = vmatpush1.bf16.msra.mxu0 0
      %1586 = vmatprep.subr.bf16.mxu0 0
      %1587 = vmatpush1.bf16.msra.mxu0 0
      %1588 = vmatprep.subr.bf16.mxu0 0
      %1589 = vmatpush1.bf16.msra.mxu0 0
      %1590 = vmatprep.mubr.bf16.mxu0 0
      %1591 = vmatmul.mubr.bf16.gmra.mrb[0].mxu0 %v1366
      %v1592 = vpop.f32.mrb[0].mxu0
      %v1593 = vadd.f32 %v1552, %v1592
      %v1594 = vpop.f32.mrb[0].mxu0
      %v1595 = vpop.f32.mrb[0].mxu0
      %v1596 = vadd.f32 %v1555, %v1595
      %v1597 = vpop.f32.mrb[0].mxu0
      %1598 = vdwg.mxu0
      %s1599 = scalar_lea.vmem %s5, 3
      %v1600 = vld [vmem:[%s1599] sm:$0x1]
      %s1601 = scalar_lea.vmem %s6, 3
      %v1602 = vld [vmem:[%s1601] sm:$0x1]
      %v1603 = vadd.f32 %v1593, %v1596
      %v1604 = vrot.slane %v1603, 4
      %v1605 = vadd.f32 %v1603, %v1604
      %v1606 = vrot.slane %v1605, 2
      %v1607 = vadd.f32 %v1605, %v1606
      %v1608 = vrot.slane %v1607, 1
      %v1609 = vadd.f32 %v1607, %v1608
      %v1610 = vmul.f32 %v1609, %v578
      %v1611 = vsub.f32 %v1593, %v1610
      %v1612 = vsub.f32 %v1596, %v1610
      %v1613 = vmul.f32 %v1611, %v1611
      %v1614 = vmul.f32 %v1612, %v1612
      %v1615 = vadd.f32 %v1613, %v1614
      %v1616 = vrot.slane %v1615, 4
      %v1617 = vadd.f32 %v1615, %v1616
      %v1618 = vrot.slane %v1617, 2
      %v1619 = vadd.f32 %v1617, %v1618
      %v1620 = vrot.slane %v1619, 1
      %v1621 = vadd.f32 %v1619, %v1620
      %v1622 = vmul.f32 %v1621, %v578
      %v1623 = vadd.f32 %v1622, 1e-05
      %v1624 = vrsqrt.pop %v1623
      %v1625 = vmul.f32 %v1600, %v1624
      %v1627 = vlaneseq
      %v1628 = vshrl.u32 %v1627, 7
      %v1629 = vsub.s32 0, %v1628
      %v1630 = vrot.slane %v1625, %v1629
      %v1632 = vmul.f32 %v1611, %v1630
      %v1633 = vmul.f32 %v1612, %v1630
      %v1635 = vlaneseq
      %v1636 = vshrl.u32 %v1635, 7
      %v1637 = vsub.s32 0, %v1636
      %v1638 = vrot.slane %v1602, %v1637
      %v1640 = vadd.f32 %v1632, %v1638
      %v1641 = vadd.f32 %v1633, %v1638
      %v1642 = vadd.f32 %v1640, %v956
      %v1643 = vadd.f32 %v1641, %v957
      %v1644 = vmax.f32 %v1642, 0.0
      %v1645 = vmax.f32 %v1643, 0.0
      %s1646 = scalar_lea.vmem [#allocation9], 768
      %v1647 = vld [vmem:[%s1646] sm:$0xf]
      %v1648 = vld [vmem:[%s1646 + $0x4] sm:$0xf]
      %v1649 = vld [vmem:[%s1646 + $0x8] sm:$0xf]
      %v1650 = vld [vmem:[%s1646 + $0xc] sm:$0xf]
      %v1651 = vld [vmem:[%s1646 + $0x10] sm:$0xf]
      %v1652 = vld [vmem:[%s1646 + $0x14] sm:$0xf]
      %v1653 = vld [vmem:[%s1646 + $0x18] sm:$0xf]
      %v1654 = vld [vmem:[%s1646 + $0x1c] sm:$0xf]
      %v1655 = vld [vmem:[%s1646 + $0x20] sm:$0xf]
      %v1656 = vld [vmem:[%s1646 + $0x24] sm:$0xf]
      %v1657 = vld [vmem:[%s1646 + $0x28] sm:$0xf]
      %v1658 = vld [vmem:[%s1646 + $0x2c] sm:$0xf]
      %v1659 = vld [vmem:[%s1646 + $0x30] sm:$0xf]
      %v1660 = vld [vmem:[%s1646 + $0x34] sm:$0xf]
      %v1661 = vld [vmem:[%s1646 + $0x38] sm:$0xf]
      %v1662 = vld [vmem:[%s1646 + $0x3c] sm:$0xf]
      %v1663 = vld [vmem:[%s1646 + $0x40] sm:$0xf]
      %v1664 = vld [vmem:[%s1646 + $0x44] sm:$0xf]
      %v1665 = vld [vmem:[%s1646 + $0x48] sm:$0xf]
      %v1666 = vld [vmem:[%s1646 + $0x4c] sm:$0xf]
      %v1667 = vld [vmem:[%s1646 + $0x50] sm:$0xf]
      %v1668 = vld [vmem:[%s1646 + $0x54] sm:$0xf]
      %v1669 = vld [vmem:[%s1646 + $0x58] sm:$0xf]
      %v1670 = vld [vmem:[%s1646 + $0x5c] sm:$0xf]
      %v1671 = vld [vmem:[%s1646 + $0x60] sm:$0xf]
      %v1672 = vld [vmem:[%s1646 + $0x64] sm:$0xf]
      %v1673 = vld [vmem:[%s1646 + $0x68] sm:$0xf]
      %v1674 = vld [vmem:[%s1646 + $0x6c] sm:$0xf]
      %v1675 = vld [vmem:[%s1646 + $0x70] sm:$0xf]
      %v1676 = vld [vmem:[%s1646 + $0x74] sm:$0xf]
      %v1677 = vld [vmem:[%s1646 + $0x78] sm:$0xf]
      %v1678 = vld [vmem:[%s1646 + $0x7c] sm:$0xf]
      %v1679 = vld [vmem:[%s1646 + $0x80] sm:$0xf]
      %v1680 = vld [vmem:[%s1646 + $0x84] sm:$0xf]
      %v1681 = vld [vmem:[%s1646 + $0x88] sm:$0xf]
      %v1682 = vld [vmem:[%s1646 + $0x8c] sm:$0xf]
      %v1683 = vld [vmem:[%s1646 + $0x90] sm:$0xf]
      %v1684 = vld [vmem:[%s1646 + $0x94] sm:$0xf]
      %v1685 = vld [vmem:[%s1646 + $0x98] sm:$0xf]
      %v1686 = vld [vmem:[%s1646 + $0x9c] sm:$0xf]
      %v1687 = vld [vmem:[%s1646 + $0xa0] sm:$0xf]
      %v1688 = vld [vmem:[%s1646 + $0xa4] sm:$0xf]
      %v1689 = vld [vmem:[%s1646 + $0xa8] sm:$0xf]
      %v1690 = vld [vmem:[%s1646 + $0xac] sm:$0xf]
      %v1691 = vld [vmem:[%s1646 + $0xb0] sm:$0xf]
      %v1692 = vld [vmem:[%s1646 + $0xb4] sm:$0xf]
      %v1693 = vld [vmem:[%s1646 + $0xb8] sm:$0xf]
      %v1694 = vld [vmem:[%s1646 + $0xbc] sm:$0xf]
      %s1695 = scalar_lea.vmem %s4, 4
      %v1696 = vld [vmem:[%s1695] sm:$0x1]
      %v1697 = vrot.slane %v1644, 7
      %v1698 = vrot.slane %v1645, 7
      %v1699 = vsel %vm322, %v1697, %v1698
      %v1700 = vsel %vm322, %v1698, %v1697
      %v1701 = vmul.f32 %v1700, %v259
      %v1702 = vmul.f32 %v1699, %v260
      %v1703 = vrot.slane %v1644, 1
      %v1704 = vrot.slane %v1645, 1
      %v1705 = vsel %vm329, %v1703, %v1704
      %v1706 = vsel %vm329, %v1704, %v1703
      %v1707 = vmul.f32 %v1705, %v269
      %v1708 = vmul.f32 %v1706, %v270
      %v1709 = vpack.c.bf16 %v1702, %v1701
      %v1710 = vpack.c.bf16 %v1645, %v1644
      %v1711 = vpack.c.bf16 %v1708, %v1707
      %v1713 = vlaneseq
      %v1714 = vshrl.u32 %v1713, 7
      %v1715 = vsub.s32 0, %v1714
      %v1716 = vrot.slane %v1696, %v1715
      %v1766 = vunpack.c.l.b16 %v1647
      %v1767 = vunpack.c.l.b16 %v1648
      %v1768 = vunpack.c.l.b16 %v1649
      %v1769 = vunpack.c.l.b16 %v1650
      %v1770 = vunpack.c.l.b16 %v1651
      %v1771 = vunpack.c.l.b16 %v1652
      %v1772 = vunpack.c.l.b16 %v1653
      %v1773 = vunpack.c.l.b16 %v1654
      %v1774 = vunpack.c.l.b16 %v1655
      %v1775 = vunpack.c.l.b16 %v1656
      %v1776 = vunpack.c.l.b16 %v1657
      %v1777 = vunpack.c.l.b16 %v1658
      %v1778 = vunpack.c.l.b16 %v1659
      %v1779 = vunpack.c.l.b16 %v1660
      %v1780 = vunpack.c.l.b16 %v1661
      %v1781 = vunpack.c.l.b16 %v1662
      %v1782 = vunpack.c.l.b16 %v1663
      %v1783 = vunpack.c.l.b16 %v1664
      %v1784 = vunpack.c.l.b16 %v1665
      %v1785 = vunpack.c.l.b16 %v1666
      %v1786 = vunpack.c.l.b16 %v1667
      %v1787 = vunpack.c.l.b16 %v1668
      %v1788 = vunpack.c.l.b16 %v1669
      %v1789 = vunpack.c.l.b16 %v1670
      %v1790 = vunpack.c.l.b16 %v1671
      %v1791 = vunpack.c.l.b16 %v1672
      %v1792 = vunpack.c.l.b16 %v1673
      %v1793 = vunpack.c.l.b16 %v1674
      %v1794 = vunpack.c.l.b16 %v1675
      %v1795 = vunpack.c.l.b16 %v1676
      %v1796 = vunpack.c.l.b16 %v1677
      %v1797 = vunpack.c.l.b16 %v1678
      %v1798 = vunpack.c.l.b16 %v1679
      %v1799 = vunpack.c.l.b16 %v1680
      %v1800 = vunpack.c.l.b16 %v1681
      %v1801 = vunpack.c.l.b16 %v1682
      %v1802 = vunpack.c.l.b16 %v1683
      %v1803 = vunpack.c.l.b16 %v1684
      %v1804 = vunpack.c.l.b16 %v1685
      %v1805 = vunpack.c.l.b16 %v1686
      %v1806 = vunpack.c.l.b16 %v1687
      %v1807 = vunpack.c.l.b16 %v1688
      %v1808 = vunpack.c.l.b16 %v1689
      %v1809 = vunpack.c.l.b16 %v1690
      %v1810 = vunpack.c.l.b16 %v1691
      %v1811 = vunpack.c.l.b16 %v1692
      %v1812 = vunpack.c.l.b16 %v1693
      %v1813 = vunpack.c.l.b16 %v1694
      %v1814 = vpack.c.b16 %v1767, %v1766
      %v1815 = vpack.c.b16 %v1769, %v1768
      %v1816 = vpack.c.b16 %v1771, %v1770
      %v1817 = vpack.c.b16 %v1773, %v1772
      %v1818 = vpack.c.b16 %v1775, %v1774
      %v1819 = vpack.c.b16 %v1777, %v1776
      %v1820 = vpack.c.b16 %v1779, %v1778
      %v1821 = vpack.c.b16 %v1781, %v1780
      %v1822 = vpack.c.b16 %v1783, %v1782
      %v1823 = vpack.c.b16 %v1785, %v1784
      %v1824 = vpack.c.b16 %v1787, %v1786
      %v1825 = vpack.c.b16 %v1789, %v1788
      %v1826 = vpack.c.b16 %v1791, %v1790
      %v1827 = vpack.c.b16 %v1793, %v1792
      %v1828 = vpack.c.b16 %v1795, %v1794
      %v1829 = vpack.c.b16 %v1797, %v1796
      %v1830 = vpack.c.b16 %v1799, %v1798
      %v1831 = vpack.c.b16 %v1801, %v1800
      %v1832 = vpack.c.b16 %v1803, %v1802
      %v1833 = vpack.c.b16 %v1805, %v1804
      %v1834 = vpack.c.b16 %v1807, %v1806
      %v1835 = vpack.c.b16 %v1809, %v1808
      %v1836 = vpack.c.b16 %v1811, %v1810
      %v1837 = vpack.c.b16 %v1813, %v1812
      %1862 = vmatprep.subr.bf16.mxu0 0
      %1863 = vmatpush1.bf16.msra.mxu0 %v1814
      %1864 = vmatprep.subr.bf16.mxu0 0
      %1865 = vmatpush1.bf16.msra.mxu0 %v1815
      %1866 = vmatprep.subr.bf16.mxu0 0
      %1867 = vmatpush1.bf16.msra.mxu0 %v1816
      %1868 = vmatprep.subr.bf16.mxu0 0
      %1869 = vmatpush1.bf16.msra.mxu0 %v1817
      %1870 = vmatprep.subr.bf16.mxu0 0
      %1871 = vmatpush1.bf16.msra.mxu0 %v1818
      %1872 = vmatprep.subr.bf16.mxu0 0
      %1873 = vmatpush1.bf16.msra.mxu0 %v1819
      %1874 = vmatprep.subr.bf16.mxu0 0
      %1875 = vmatpush1.bf16.msra.mxu0 %v1820
      %1876 = vmatprep.subr.bf16.mxu0 0
      %1877 = vmatpush1.bf16.msra.mxu0 %v1821
      %1878 = vmatprep.subr.bf16.mxu0 0
      %1879 = vmatpush1.bf16.msra.mxu0 %v1822
      %1880 = vmatprep.subr.bf16.mxu0 0
      %1881 = vmatpush1.bf16.msra.mxu0 %v1823
      %1882 = vmatprep.subr.bf16.mxu0 0
      %1883 = vmatpush1.bf16.msra.mxu0 %v1824
      %1884 = vmatprep.subr.bf16.mxu0 0
      %1885 = vmatpush1.bf16.msra.mxu0 %v1825
      %1886 = vmatprep.subr.bf16.mxu0 0
      %1887 = vmatpush1.bf16.msra.mxu0 %v1826
      %1888 = vmatprep.subr.bf16.mxu0 0
      %1889 = vmatpush1.bf16.msra.mxu0 %v1827
      %1890 = vmatprep.subr.bf16.mxu0 0
      %1891 = vmatpush1.bf16.msra.mxu0 %v1828
      %1892 = vmatprep.subr.bf16.mxu0 0
      %1893 = vmatpush1.bf16.msra.mxu0 %v1829
      %1894 = vmatprep.mubr.bf16.mxu0 %v1710
      %1895 = vmatmul.mubr.bf16.gmra.mrb[0].mxu0 %v1709
      %v1896 = vpop.f32.mrb[0].mxu0
      %v1897 = vadd.f32 %v1716, %v1896
      %v1898 = vpop.f32.mrb[0].mxu0
      %v1899 = vpop.f32.mrb[0].mxu0
      %v1900 = vadd.f32 %v1716, %v1899
      %v1901 = vpop.f32.mrb[0].mxu0
      %1902 = vdwg.mxu0
      %1903 = vmatprep.subr.bf16.mxu0 0
      %1904 = vmatpush1.bf16.msra.mxu0 %v1830
      %1905 = vmatprep.subr.bf16.mxu0 0
      %1906 = vmatpush1.bf16.msra.mxu0 %v1831
      %1907 = vmatprep.subr.bf16.mxu0 0
      %1908 = vmatpush1.bf16.msra.mxu0 %v1832
      %1909 = vmatprep.subr.bf16.mxu0 0
      %1910 = vmatpush1.bf16.msra.mxu0 %v1833
      %1911 = vmatprep.subr.bf16.mxu0 0
      %1912 = vmatpush1.bf16.msra.mxu0 %v1834
      %1913 = vmatprep.subr.bf16.mxu0 0
      %1914 = vmatpush1.bf16.msra.mxu0 %v1835
      %1915 = vmatprep.subr.bf16.mxu0 0
      %1916 = vmatpush1.bf16.msra.mxu0 %v1836
      %1917 = vmatprep.subr.bf16.mxu0 0
      %1918 = vmatpush1.bf16.msra.mxu0 %v1837
      %1919 = vmatprep.subr.bf16.mxu0 0
      %1920 = vmatpush1.bf16.msra.mxu0 0
      %1921 = vmatprep.subr.bf16.mxu0 0
      %1922 = vmatpush1.bf16.msra.mxu0 0
      %1923 = vmatprep.subr.bf16.mxu0 0
      %1924 = vmatpush1.bf16.msra.mxu0 0
      %1925 = vmatprep.subr.bf16.mxu0 0
      %1926 = vmatpush1.bf16.msra.mxu0 0
      %1927 = vmatprep.subr.bf16.mxu0 0
      %1928 = vmatpush1.bf16.msra.mxu0 0
      %1929 = vmatprep.subr.bf16.mxu0 0
      %1930 = vmatpush1.bf16.msra.mxu0 0
      %1931 = vmatprep.subr.bf16.mxu0 0
      %1932 = vmatpush1.bf16.msra.mxu0 0
      %1933 = vmatprep.subr.bf16.mxu0 0
      %1934 = vmatpush1.bf16.msra.mxu0 0
      %1935 = vmatprep.mubr.bf16.mxu0 0
      %1936 = vmatmul.mubr.bf16.gmra.mrb[0].mxu0 %v1711
      %v1937 = vpop.f32.mrb[0].mxu0
      %v1938 = vadd.f32 %v1897, %v1937
      %v1939 = vpop.f32.mrb[0].mxu0
      %v1940 = vpop.f32.mrb[0].mxu0
      %v1941 = vadd.f32 %v1900, %v1940
      %v1942 = vpop.f32.mrb[0].mxu0
      %1943 = vdwg.mxu0
      %s1944 = scalar_lea.vmem %s5, 4
      %v1945 = vld [vmem:[%s1944] sm:$0x1]
      %s1946 = scalar_lea.vmem %s6, 4
      %v1947 = vld [vmem:[%s1946] sm:$0x1]
      %v1948 = vadd.f32 %v1938, %v1941
      %v1949 = vrot.slane %v1948, 4
      %v1950 = vadd.f32 %v1948, %v1949
      %v1951 = vrot.slane %v1950, 2
      %v1952 = vadd.f32 %v1950, %v1951
      %v1953 = vrot.slane %v1952, 1
      %v1954 = vadd.f32 %v1952, %v1953
      %v1955 = vmul.f32 %v1954, %v578
      %v1956 = vsub.f32 %v1938, %v1955
      %v1957 = vsub.f32 %v1941, %v1955
      %v1958 = vmul.f32 %v1956, %v1956
      %v1959 = vmul.f32 %v1957, %v1957
      %v1960 = vadd.f32 %v1958, %v1959
      %v1961 = vrot.slane %v1960, 4
      %v1962 = vadd.f32 %v1960, %v1961
      %v1963 = vrot.slane %v1962, 2
      %v1964 = vadd.f32 %v1962, %v1963
      %v1965 = vrot.slane %v1964, 1
      %v1966 = vadd.f32 %v1964, %v1965
      %v1967 = vmul.f32 %v1966, %v578
      %v1968 = vadd.f32 %v1967, 1e-05
      %v1969 = vrsqrt.pop %v1968
      %v1970 = vmul.f32 %v1945, %v1969
      %v1972 = vlaneseq
      %v1973 = vshrl.u32 %v1972, 7
      %v1974 = vsub.s32 0, %v1973
      %v1975 = vrot.slane %v1970, %v1974
      %v1977 = vmul.f32 %v1956, %v1975
      %v1978 = vmul.f32 %v1957, %v1975
      %v1980 = vlaneseq
      %v1981 = vshrl.u32 %v1980, 7
      %v1982 = vsub.s32 0, %v1981
      %v1983 = vrot.slane %v1947, %v1982
      %v1985 = vadd.f32 %v1977, %v1983
      %v1986 = vadd.f32 %v1978, %v1983
      %v1987 = vmax.f32 %v1985, 0.0
      %v1988 = vmax.f32 %v1986, 0.0
      %s1989 = scalar_lea.vmem [#allocation9], 960
      %v1990 = vld [vmem:[%s1989] sm:$0xf]
      %v1991 = vld [vmem:[%s1989 + $0x4] sm:$0xf]
      %v1992 = vld [vmem:[%s1989 + $0x8] sm:$0xf]
      %v1993 = vld [vmem:[%s1989 + $0xc] sm:$0xf]
      %v1994 = vld [vmem:[%s1989 + $0x10] sm:$0xf]
      %v1995 = vld [vmem:[%s1989 + $0x14] sm:$0xf]
      %v1996 = vld [vmem:[%s1989 + $0x18] sm:$0xf]
      %v1997 = vld [vmem:[%s1989 + $0x1c] sm:$0xf]
      %v1998 = vld [vmem:[%s1989 + $0x20] sm:$0xf]
      %v1999 = vld [vmem:[%s1989 + $0x24] sm:$0xf]
      %v2000 = vld [vmem:[%s1989 + $0x28] sm:$0xf]
      %v2001 = vld [vmem:[%s1989 + $0x2c] sm:$0xf]
      %v2002 = vld [vmem:[%s1989 + $0x30] sm:$0xf]
      %v2003 = vld [vmem:[%s1989 + $0x34] sm:$0xf]
      %v2004 = vld [vmem:[%s1989 + $0x38] sm:$0xf]
      %v2005 = vld [vmem:[%s1989 + $0x3c] sm:$0xf]
      %v2006 = vld [vmem:[%s1989 + $0x40] sm:$0xf]
      %v2007 = vld [vmem:[%s1989 + $0x44] sm:$0xf]
      %v2008 = vld [vmem:[%s1989 + $0x48] sm:$0xf]
      %v2009 = vld [vmem:[%s1989 + $0x4c] sm:$0xf]
      %v2010 = vld [vmem:[%s1989 + $0x50] sm:$0xf]
      %v2011 = vld [vmem:[%s1989 + $0x54] sm:$0xf]
      %v2012 = vld [vmem:[%s1989 + $0x58] sm:$0xf]
      %v2013 = vld [vmem:[%s1989 + $0x5c] sm:$0xf]
      %v2014 = vld [vmem:[%s1989 + $0x60] sm:$0xf]
      %v2015 = vld [vmem:[%s1989 + $0x64] sm:$0xf]
      %v2016 = vld [vmem:[%s1989 + $0x68] sm:$0xf]
      %v2017 = vld [vmem:[%s1989 + $0x6c] sm:$0xf]
      %v2018 = vld [vmem:[%s1989 + $0x70] sm:$0xf]
      %v2019 = vld [vmem:[%s1989 + $0x74] sm:$0xf]
      %v2020 = vld [vmem:[%s1989 + $0x78] sm:$0xf]
      %v2021 = vld [vmem:[%s1989 + $0x7c] sm:$0xf]
      %v2022 = vld [vmem:[%s1989 + $0x80] sm:$0xf]
      %v2023 = vld [vmem:[%s1989 + $0x84] sm:$0xf]
      %v2024 = vld [vmem:[%s1989 + $0x88] sm:$0xf]
      %v2025 = vld [vmem:[%s1989 + $0x8c] sm:$0xf]
      %v2026 = vld [vmem:[%s1989 + $0x90] sm:$0xf]
      %v2027 = vld [vmem:[%s1989 + $0x94] sm:$0xf]
      %v2028 = vld [vmem:[%s1989 + $0x98] sm:$0xf]
      %v2029 = vld [vmem:[%s1989 + $0x9c] sm:$0xf]
      %v2030 = vld [vmem:[%s1989 + $0xa0] sm:$0xf]
      %v2031 = vld [vmem:[%s1989 + $0xa4] sm:$0xf]
      %v2032 = vld [vmem:[%s1989 + $0xa8] sm:$0xf]
      %v2033 = vld [vmem:[%s1989 + $0xac] sm:$0xf]
      %v2034 = vld [vmem:[%s1989 + $0xb0] sm:$0xf]
      %v2035 = vld [vmem:[%s1989 + $0xb4] sm:$0xf]
      %v2036 = vld [vmem:[%s1989 + $0xb8] sm:$0xf]
      %v2037 = vld [vmem:[%s1989 + $0xbc] sm:$0xf]
      %s2038 = scalar_lea.vmem %s4, 5
      %v2039 = vld [vmem:[%s2038] sm:$0x1]
      %v2040 = vrot.slane %v1987, 7
      %v2041 = vrot.slane %v1988, 7
      %v2042 = vsel %vm322, %v2040, %v2041
      %v2043 = vsel %vm322, %v2041, %v2040
      %v2044 = vmul.f32 %v2043, %v259
      %v2045 = vmul.f32 %v2042, %v260
      %v2046 = vrot.slane %v1987, 1
      %v2047 = vrot.slane %v1988, 1
      %v2048 = vsel %vm329, %v2046, %v2047
      %v2049 = vsel %vm329, %v2047, %v2046
      %v2050 = vmul.f32 %v2048, %v269
      %v2051 = vmul.f32 %v2049, %v270
      %v2052 = vpack.c.bf16 %v2045, %v2044
      %v2053 = vpack.c.bf16 %v1988, %v1987
      %v2054 = vpack.c.bf16 %v2051, %v2050
      %v2056 = vlaneseq
      %v2057 = vshrl.u32 %v2056, 7
      %v2058 = vsub.s32 0, %v2057
      %v2059 = vrot.slane %v2039, %v2058
      %v2109 = vunpack.c.l.b16 %v1990
      %v2110 = vunpack.c.l.b16 %v1991
      %v2111 = vunpack.c.l.b16 %v1992
      %v2112 = vunpack.c.l.b16 %v1993
      %v2113 = vunpack.c.l.b16 %v1994
      %v2114 = vunpack.c.l.b16 %v1995
      %v2115 = vunpack.c.l.b16 %v1996
      %v2116 = vunpack.c.l.b16 %v1997
      %v2117 = vunpack.c.l.b16 %v1998
      %v2118 = vunpack.c.l.b16 %v1999
      %v2119 = vunpack.c.l.b16 %v2000
      %v2120 = vunpack.c.l.b16 %v2001
      %v2121 = vunpack.c.l.b16 %v2002
      %v2122 = vunpack.c.l.b16 %v2003
      %v2123 = vunpack.c.l.b16 %v2004
      %v2124 = vunpack.c.l.b16 %v2005
      %v2125 = vunpack.c.l.b16 %v2006
      %v2126 = vunpack.c.l.b16 %v2007
      %v2127 = vunpack.c.l.b16 %v2008
      %v2128 = vunpack.c.l.b16 %v2009
      %v2129 = vunpack.c.l.b16 %v2010
      %v2130 = vunpack.c.l.b16 %v2011
      %v2131 = vunpack.c.l.b16 %v2012
      %v2132 = vunpack.c.l.b16 %v2013
      %v2133 = vunpack.c.l.b16 %v2014
      %v2134 = vunpack.c.l.b16 %v2015
      %v2135 = vunpack.c.l.b16 %v2016
      %v2136 = vunpack.c.l.b16 %v2017
      %v2137 = vunpack.c.l.b16 %v2018
      %v2138 = vunpack.c.l.b16 %v2019
      %v2139 = vunpack.c.l.b16 %v2020
      %v2140 = vunpack.c.l.b16 %v2021
      %v2141 = vunpack.c.l.b16 %v2022
      %v2142 = vunpack.c.l.b16 %v2023
      %v2143 = vunpack.c.l.b16 %v2024
      %v2144 = vunpack.c.l.b16 %v2025
      %v2145 = vunpack.c.l.b16 %v2026
      %v2146 = vunpack.c.l.b16 %v2027
      %v2147 = vunpack.c.l.b16 %v2028
      %v2148 = vunpack.c.l.b16 %v2029
      %v2149 = vunpack.c.l.b16 %v2030
      %v2150 = vunpack.c.l.b16 %v2031
      %v2151 = vunpack.c.l.b16 %v2032
      %v2152 = vunpack.c.l.b16 %v2033
      %v2153 = vunpack.c.l.b16 %v2034
      %v2154 = vunpack.c.l.b16 %v2035
      %v2155 = vunpack.c.l.b16 %v2036
      %v2156 = vunpack.c.l.b16 %v2037
      %v2157 = vpack.c.b16 %v2110, %v2109
      %v2158 = vpack.c.b16 %v2112, %v2111
      %v2159 = vpack.c.b16 %v2114, %v2113
      %v2160 = vpack.c.b16 %v2116, %v2115
      %v2161 = vpack.c.b16 %v2118, %v2117
      %v2162 = vpack.c.b16 %v2120, %v2119
      %v2163 = vpack.c.b16 %v2122, %v2121
      %v2164 = vpack.c.b16 %v2124, %v2123
      %v2165 = vpack.c.b16 %v2126, %v2125
      %v2166 = vpack.c.b16 %v2128, %v2127
      %v2167 = vpack.c.b16 %v2130, %v2129
      %v2168 = vpack.c.b16 %v2132, %v2131
      %v2169 = vpack.c.b16 %v2134, %v2133
      %v2170 = vpack.c.b16 %v2136, %v2135
      %v2171 = vpack.c.b16 %v2138, %v2137
      %v2172 = vpack.c.b16 %v2140, %v2139
      %v2173 = vpack.c.b16 %v2142, %v2141
      %v2174 = vpack.c.b16 %v2144, %v2143
      %v2175 = vpack.c.b16 %v2146, %v2145
      %v2176 = vpack.c.b16 %v2148, %v2147
      %v2177 = vpack.c.b16 %v2150, %v2149
      %v2178 = vpack.c.b16 %v2152, %v2151
      %v2179 = vpack.c.b16 %v2154, %v2153
      %v2180 = vpack.c.b16 %v2156, %v2155
      %2205 = vmatprep.subr.bf16.mxu0 0
      %2206 = vmatpush1.bf16.msra.mxu0 %v2157
      %2207 = vmatprep.subr.bf16.mxu0 0
      %2208 = vmatpush1.bf16.msra.mxu0 %v2158
      %2209 = vmatprep.subr.bf16.mxu0 0
      %2210 = vmatpush1.bf16.msra.mxu0 %v2159
      %2211 = vmatprep.subr.bf16.mxu0 0
      %2212 = vmatpush1.bf16.msra.mxu0 %v2160
      %2213 = vmatprep.subr.bf16.mxu0 0
      %2214 = vmatpush1.bf16.msra.mxu0 %v2161
      %2215 = vmatprep.subr.bf16.mxu0 0
      %2216 = vmatpush1.bf16.msra.mxu0 %v2162
      %2217 = vmatprep.subr.bf16.mxu0 0
      %2218 = vmatpush1.bf16.msra.mxu0 %v2163
      %2219 = vmatprep.subr.bf16.mxu0 0
      %2220 = vmatpush1.bf16.msra.mxu0 %v2164
      %2221 = vmatprep.subr.bf16.mxu0 0
      %2222 = vmatpush1.bf16.msra.mxu0 %v2165
      %2223 = vmatprep.subr.bf16.mxu0 0
      %2224 = vmatpush1.bf16.msra.mxu0 %v2166
      %2225 = vmatprep.subr.bf16.mxu0 0
      %2226 = vmatpush1.bf16.msra.mxu0 %v2167
      %2227 = vmatprep.subr.bf16.mxu0 0
      %2228 = vmatpush1.bf16.msra.mxu0 %v2168
      %2229 = vmatprep.subr.bf16.mxu0 0
      %2230 = vmatpush1.bf16.msra.mxu0 %v2169
      %2231 = vmatprep.subr.bf16.mxu0 0
      %2232 = vmatpush1.bf16.msra.mxu0 %v2170
      %2233 = vmatprep.subr.bf16.mxu0 0
      %2234 = vmatpush1.bf16.msra.mxu0 %v2171
      %2235 = vmatprep.subr.bf16.mxu0 0
      %2236 = vmatpush1.bf16.msra.mxu0 %v2172
      %2237 = vmatprep.mubr.bf16.mxu0 %v2053
      %2238 = vmatmul.mubr.bf16.gmra.mrb[0].mxu0 %v2052
      %v2239 = vpop.f32.mrb[0].mxu0
      %v2240 = vadd.f32 %v2059, %v2239
      %v2241 = vpop.f32.mrb[0].mxu0
      %v2242 = vpop.f32.mrb[0].mxu0
      %v2243 = vadd.f32 %v2059, %v2242
      %v2244 = vpop.f32.mrb[0].mxu0
      %2245 = vdwg.mxu0
      %2246 = vmatprep.subr.bf16.mxu0 0
      %2247 = vmatpush1.bf16.msra.mxu0 %v2173
      %2248 = vmatprep.subr.bf16.mxu0 0
      %2249 = vmatpush1.bf16.msra.mxu0 %v2174
      %2250 = vmatprep.subr.bf16.mxu0 0
      %2251 = vmatpush1.bf16.msra.mxu0 %v2175
      %2252 = vmatprep.subr.bf16.mxu0 0
      %2253 = vmatpush1.bf16.msra.mxu0 %v2176
      %2254 = vmatprep.subr.bf16.mxu0 0
      %2255 = vmatpush1.bf16.msra.mxu0 %v2177
      %2256 = vmatprep.subr.bf16.mxu0 0
      %2257 = vmatpush1.bf16.msra.mxu0 %v2178
      %2258 = vmatprep.subr.bf16.mxu0 0
      %2259 = vmatpush1.bf16.msra.mxu0 %v2179
      %2260 = vmatprep.subr.bf16.mxu0 0
      %2261 = vmatpush1.bf16.msra.mxu0 %v2180
      %2262 = vmatprep.subr.bf16.mxu0 0
      %2263 = vmatpush1.bf16.msra.mxu0 0
      %2264 = vmatprep.subr.bf16.mxu0 0
      %2265 = vmatpush1.bf16.msra.mxu0 0
      %2266 = vmatprep.subr.bf16.mxu0 0
      %2267 = vmatpush1.bf16.msra.mxu0 0
      %2268 = vmatprep.subr.bf16.mxu0 0
      %2269 = vmatpush1.bf16.msra.mxu0 0
      %2270 = vmatprep.subr.bf16.mxu0 0
      %2271 = vmatpush1.bf16.msra.mxu0 0
      %2272 = vmatprep.subr.bf16.mxu0 0
      %2273 = vmatpush1.bf16.msra.mxu0 0
      %2274 = vmatprep.subr.bf16.mxu0 0
      %2275 = vmatpush1.bf16.msra.mxu0 0
      %2276 = vmatprep.subr.bf16.mxu0 0
      %2277 = vmatpush1.bf16.msra.mxu0 0
      %2278 = vmatprep.mubr.bf16.mxu0 0
      %2279 = vmatmul.mubr.bf16.gmra.mrb[0].mxu0 %v2054
      %v2280 = vpop.f32.mrb[0].mxu0
      %v2281 = vadd.f32 %v2240, %v2280
      %v2282 = vpop.f32.mrb[0].mxu0
      %v2283 = vpop.f32.mrb[0].mxu0
      %v2284 = vadd.f32 %v2243, %v2283
      %v2285 = vpop.f32.mrb[0].mxu0
      %2286 = vdwg.mxu0
      %s2287 = scalar_lea.vmem %s5, 5
      %v2288 = vld [vmem:[%s2287] sm:$0x1]
      %s2289 = scalar_lea.vmem %s6, 5
      %v2290 = vld [vmem:[%s2289] sm:$0x1]
      %v2291 = vadd.f32 %v2281, %v2284
      %v2292 = vrot.slane %v2291, 4
      %v2293 = vadd.f32 %v2291, %v2292
      %v2294 = vrot.slane %v2293, 2
      %v2295 = vadd.f32 %v2293, %v2294
      %v2296 = vrot.slane %v2295, 1
      %v2297 = vadd.f32 %v2295, %v2296
      %v2298 = vmul.f32 %v2297, %v578
      %v2299 = vsub.f32 %v2281, %v2298
      %v2300 = vsub.f32 %v2284, %v2298
      %v2301 = vmul.f32 %v2299, %v2299
      %v2302 = vmul.f32 %v2300, %v2300
      %v2303 = vadd.f32 %v2301, %v2302
      %v2304 = vrot.slane %v2303, 4
      %v2305 = vadd.f32 %v2303, %v2304
      %v2306 = vrot.slane %v2305, 2
      %v2307 = vadd.f32 %v2305, %v2306
      %v2308 = vrot.slane %v2307, 1
      %v2309 = vadd.f32 %v2307, %v2308
      %v2310 = vmul.f32 %v2309, %v578
      %v2311 = vadd.f32 %v2310, 1e-05
      %v2312 = vrsqrt.pop %v2311
      %v2313 = vmul.f32 %v2288, %v2312
      %v2315 = vlaneseq
      %v2316 = vshrl.u32 %v2315, 7
      %v2317 = vsub.s32 0, %v2316
      %v2318 = vrot.slane %v2313, %v2317
      %v2320 = vmul.f32 %v2299, %v2318
      %v2321 = vmul.f32 %v2300, %v2318
      %v2323 = vlaneseq
      %v2324 = vshrl.u32 %v2323, 7
      %v2325 = vsub.s32 0, %v2324
      %v2326 = vrot.slane %v2290, %v2325
      %v2328 = vadd.f32 %v2320, %v2326
      %v2329 = vadd.f32 %v2321, %v2326
      %v2330 = vadd.f32 %v2328, %v1644
      %v2331 = vadd.f32 %v2329, %v1645
      %v2332 = vmax.f32 %v2330, 0.0
      %v2333 = vmax.f32 %v2331, 0.0
      %v2334 = vpack.c.bf16 %v2333, %v2332
      %2335 = vst [vmem:[#allocation2] sm:$0xff] %v2334
    $region61: #{tpu_custom_call.1} parent=1 // pred_fallthru
      _
    %v2336 = vld [vmem:[#allocation2] sm:$0xff]
    %v2337 = vld [vmem:[#allocation11] sm:$0xf]
    %v2338 = vld [vmem:[#allocation11 + $0x4] sm:$0xf]
    %v2339 = vld [vmem:[#allocation11 + $0x8] sm:$0xf]
    %v2340 = vld [vmem:[#allocation11 + $0xc] sm:$0xf]
    %v2341 = vld [vmem:[#allocation11 + $0x10] sm:$0xf]
    %v2342 = vld [vmem:[#allocation11 + $0x14] sm:$0xf]
    %v2343 = vld [vmem:[#allocation11 + $0x18] sm:$0xf]
    %v2344 = vld [vmem:[#allocation11 + $0x1c] sm:$0xf]
    %v2345 = vld [vmem:[#allocation11 + $0x20] sm:$0xf]
    %v2346 = vld [vmem:[#allocation11 + $0x24] sm:$0xf]
    %v2347 = vld [vmem:[#allocation11 + $0x28] sm:$0xf]
    %v2348 = vld [vmem:[#allocation11 + $0x2c] sm:$0xf]
    %v2349 = vld [vmem:[#allocation11 + $0x30] sm:$0xf]
    %v2350 = vld [vmem:[#allocation11 + $0x34] sm:$0xf]
    %v2351 = vld [vmem:[#allocation11 + $0x38] sm:$0xf]
    %v2352 = vld [vmem:[#allocation11 + $0x3c] sm:$0xf]
    %v2353 = vld [vmem:[%s8] sm:$0x1]
    %v2355 = vlaneseq
    %v2356 = vshrl.u32 %v2355, 7
    %v2357 = vsub.s32 0, %v2356
    %v2358 = vrot.slane %v2353, %v2357
    %v2376 = vunpack.c.l.b16 %v2337
    %v2377 = vunpack.c.l.b16 %v2338
    %v2378 = vunpack.c.l.b16 %v2339
    %v2379 = vunpack.c.l.b16 %v2340
    %v2380 = vunpack.c.l.b16 %v2341
    %v2381 = vunpack.c.l.b16 %v2342
    %v2382 = vunpack.c.l.b16 %v2343
    %v2383 = vunpack.c.l.b16 %v2344
    %v2384 = vunpack.c.l.b16 %v2345
    %v2385 = vunpack.c.l.b16 %v2346
    %v2386 = vunpack.c.l.b16 %v2347
    %v2387 = vunpack.c.l.b16 %v2348
    %v2388 = vunpack.c.l.b16 %v2349
    %v2389 = vunpack.c.l.b16 %v2350
    %v2390 = vunpack.c.l.b16 %v2351
    %v2391 = vunpack.c.l.b16 %v2352
    %v2392 = vpack.c.b16 %v2377, %v2376
    %v2393 = vpack.c.b16 %v2379, %v2378
    %v2394 = vpack.c.b16 %v2381, %v2380
    %v2395 = vpack.c.b16 %v2383, %v2382
    %v2396 = vpack.c.b16 %v2385, %v2384
    %v2397 = vpack.c.b16 %v2387, %v2386
    %v2398 = vpack.c.b16 %v2389, %v2388
    %v2399 = vpack.c.b16 %v2391, %v2390
    %2408 = vmatprep.subr.bf16.mxu0 0
    %2409 = vmatpush1.bf16.msra.mxu0 %v2392
    %2410 = vmatprep.subr.bf16.mxu0 0
    %2411 = vmatpush1.bf16.msra.mxu0 %v2393
    %2412 = vmatprep.subr.bf16.mxu0 0
    %2413 = vmatpush1.bf16.msra.mxu0 %v2394
    %2414 = vmatprep.subr.bf16.mxu0 0
    %2415 = vmatpush1.bf16.msra.mxu0 %v2395
    %2416 = vmatprep.subr.bf16.mxu0 0
    %2417 = vmatpush1.bf16.msra.mxu0 %v2396
    %2418 = vmatprep.subr.bf16.mxu0 0
    %2419 = vmatpush1.bf16.msra.mxu0 %v2397
    %2420 = vmatprep.subr.bf16.mxu0 0
    %2421 = vmatpush1.bf16.msra.mxu0 %v2398
    %2422 = vmatprep.subr.bf16.mxu0 0
    %2423 = vmatpush1.bf16.msra.mxu0 %v2399
    %2424 = vmatprep.subr.bf16.mxu0 0
    %2425 = vmatpush1.bf16.msra.mxu0 0
    %2426 = vmatprep.subr.bf16.mxu0 0
    %2427 = vmatpush1.bf16.msra.mxu0 0
    %2428 = vmatprep.subr.bf16.mxu0 0
    %2429 = vmatpush1.bf16.msra.mxu0 0
    %2430 = vmatprep.subr.bf16.mxu0 0
    %2431 = vmatpush1.bf16.msra.mxu0 0
    %2432 = vmatprep.subr.bf16.mxu0 0
    %2433 = vmatpush1.bf16.msra.mxu0 0
    %2434 = vmatprep.subr.bf16.mxu0 0
    %2435 = vmatpush1.bf16.msra.mxu0 0
    %2436 = vmatprep.subr.bf16.mxu0 0
    %2437 = vmatpush1.bf16.msra.mxu0 0
    %2438 = vmatprep.subr.bf16.mxu0 0
    %2439 = vmatpush1.bf16.msra.mxu0 0
    %2440 = vmatprep.mubr.bf16.mxu0 0
    %2441 = vmatmul.mubr.bf16.gmra.mrb[0].mxu0 %v2336
    %v2442 = vpop.f32.mrb[0].mxu0
    %v2443 = vadd.f32 %v2358, %v2442
    %v2444 = vpop.f32.mrb[0].mxu0
    %v2445 = vpop.f32.mrb[0].mxu0
    %v2446 = vadd.f32 %v2358, %v2445
    %v2447 = vpop.f32.mrb[0].mxu0
    %2448 = vdwg.mxu0
    %2449 = vst [vmem:[#allocation12] sm:$0xff] %v2443
    %2450 = vst [vmem:[#allocation12 + $0x8] sm:$0xff] %v2446
    // Predicated region
    $region62: #{tpu_custom_call.1} parent=1 // pred_check
      _
    $region63: #{tpu_custom_call.1} parent=1 // pred_check_branch
      %2452 = sbr.rel (0) target = $region65
    $region64: #{tpu_custom_call.1} parent=1 // pred_region
      %s2454 = ssub.s32 256, 256
      %2455 = vsyncadd [#allocation5], %s2454
      %s2456 = sshll.u32 [#allocation12], 4
      %s2457 = int_to_ptr.vmem [resolvable:$true] %s2456
      %2462 = dma.vmem_to_hbm [thread:$0]  %s2457, 256, %s9, [#allocation5], 128, 128, 8
    $region65: #{tpu_custom_call.1} parent=1 // pred_fallthru
      _
    // Predicated region
    $region66: #{tpu_custom_call.1} parent=1 // pred_check
      _
    $region67: #{tpu_custom_call.1} parent=1 // pred_check_branch
      %2464 = sbr.rel (0) target = $region69
    $region68: #{tpu_custom_call.1} parent=1 // pred_region
      %2465 = dma.done [#allocation5], 256
    $region69: #{tpu_custom_call.1} parent=1 // pred_fallthru
      _
    %2466 = vsyncpa [#allocation4], 1
    %2467 = vsyncpa [#allocation7], 1
    %2468 = vsyncpa [#allocation10], 1
    %2469 = vsyncpa [#allocation5], 1

// kernel: tpu_custom_call.1
$region0: #{tpu_custom_call.1}
  #allocation0 [shape = 'u32[]', space=smem, size = 0x4, offset = 0x4, fixed_abs, tag = 'smem constant byte address 0x4 - core index']
  #allocation1 [shape = 'u32[144,128]{1,0:T(1,128)}', space=vmem, size = 0x12000, scoped, tag = 'internal scratch']
  #allocation2 [shape = 'bf16[16,128]{1,0:T(16,128)(2,1)}', space=vmem, size = 0x1000, scoped, tag = 'scratch operand']
  %s0 = inlined_call_operand.hbm [shape: bf16[16,128], index: 0, kind: input, shape index: {}]
  %s1 = inlined_call_operand.hbm [shape: bf16[128,128], index: 1, kind: input, shape index: {}]
  %s2 = inlined_call_operand.hbm [shape: f32[1,128], index: 2, kind: input, shape index: {}]
  %s3 = inlined_call_operand.hbm [shape: bf16[3,2,384,128], index: 3, kind: input, shape index: {}]
  %s4 = inlined_call_operand.vmem [shape: f32[3,2,1,128], index: 4, kind: input, shape index: {}]
  %s5 = inlined_call_operand.vmem [shape: f32[3,2,1,128], index: 5, kind: input, shape index: {}]
  %s6 = inlined_call_operand.vmem [shape: f32[3,2,1,128], index: 6, kind: input, shape index: {}]
  %s7 = inlined_call_operand.hbm [shape: bf16[128,128], index: 7, kind: input, shape index: {}]
  %s8 = inlined_call_operand.vmem [shape: f32[1,128], index: 8, kind: input, shape index: {}]
  %s9 = inlined_call_operand.hbm [shape: f32[16,128], index: 9, kind: output, shape index: {}]
  %s10 = sld [smem:[#allocation0]]
  $region70: #{tpu_custom_call.1} parent=0
    _
  %s12 = ssub.s32 1, %s10
  %s13 = scalar_select 0, %s12, %s10
  $region1: #{tpu_custom_call.1} parent=0
    #allocation3 [shape = 'u8[4096]{0}', space=vmem, size = 0x1000, scoped, tag = 'input window, operand 0, single buffered']
    #allocation4 [shape = 's32[1]{0}', space=sflag, size = 0x4, scoped, tag = 'scoped memory for tpu_custom_call.1']
    #allocation5 [shape = 's32[1]{0}', space=sflag, size = 0x4, scoped, tag = 'scoped memory for tpu_custom_call.1']
    #allocation6 [shape = 'u8[32768]{0}', space=vmem, size = 0x8000, scoped, tag = 'input window, operand 1, single buffered']
    #allocation7 [shape = 's32[1]{0}', space=sflag, size = 0x4, scoped, tag = 'scoped memory for tpu_custom_call.1']
    #allocation8 [shape = 'u8[512]{0}', space=vmem, size = 0x400, scoped, tag = 'input window, operand 2, single buffered']
    #allocation9 [shape = 'u8[589824]{0}', space=vmem, size = 0x90000, scoped, tag = 'input window, operand 3, single buffered']
    #allocation10 [shape = 's32[1]{0}', space=sflag, size = 0x4, scoped, tag = 'scoped memory for tpu_custom_call.1']
    #allocation11 [shape = 'u8[32768]{0}', space=vmem, size = 0x8000, scoped, tag = 'input window, operand 7, single buffered']
    #allocation12 [shape = 'u8[8192]{0}', space=vmem, size = 0x2000, scoped, tag = 'output window, operand 0, single buffered']
    %14 = vsyncpa [#allocation4], 0
    %15 = vsyncpa [#allocation7], 0
    %16 = vsyncpa [#allocation10], 0
    %17 = vsyncpa [#allocation5], 0
    // Predicated region
    $region2: #{tpu_custom_call.1} parent=1 // pred_check
      _
    $region3: #{tpu_custom_call.1} parent=1 // pred_check_branch
      %19 = sbr.rel (0) target = $region5
    $region4: #{tpu_custom_call.1} parent=1 // pred_region
      %s21 = ssub.s32 128, 128
      %22 = vsyncadd [#allocation4], %s21
      %s23 = sshll.u32 [#allocation3], 4
      %s24 = int_to_ptr.vmem [resolvable:$true] %s23
      %29 = dma.hbm_to_vmem [thread:$0]  %s0, 128, %s24, [#allocation4], 64, 64, 4
    $region5: #{tpu_custom_call.1} parent=1 // pred_fallthru
      _
    // Predicated region
    $region6: #{tpu_custom_call.1} parent=1 // pred_check
      _
    $region7: #{tpu_custom_call.1} parent=1 // pred_check_branch
      %31 = sbr.rel (0) target = $region9
    $region8: #{tpu_custom_call.1} parent=1 // pred_region
      %s33 = ssub.s32 1024, 1024
      %34 = vsyncadd [#allocation7], %s33
      %s35 = sshll.u32 [#allocation6], 4
      %s36 = int_to_ptr.vmem [resolvable:$true] %s35
      %41 = dma.hbm_to_vmem [thread:$0]  %s1, 1024, %s36, [#allocation7], 64, 64, 4
    $region9: #{tpu_custom_call.1} parent=1 // pred_fallthru
      _
    // Predicated region
    $region10: #{tpu_custom_call.1} parent=1 // pred_check
      _
    $region11: #{tpu_custom_call.1} parent=1 // pred_check_branch
      %43 = sbr.rel (0) target = $region13
    $region12: #{tpu_custom_call.1} parent=1 // pred_region
      %s45 = ssub.s32 16, 16
      %46 = vsyncadd [#allocation7], %s45
      %s48 = sshll.u32 [#allocation8], 4
      %s49 = int_to_ptr.vmem [resolvable:$true] %s48
      %51 = dma.hbm_to_vmem [thread:$0]  %s2, 16, %s49, [#allocation7]
    $region13: #{tpu_custom_call.1} parent=1 // pred_fallthru
      _
    // Predicated region
    $region14: #{tpu_custom_call.1} parent=1 // pred_check
      _
    $region15: #{tpu_custom_call.1} parent=1 // pred_check_branch
      %53 = sbr.rel (0) target = $region17
    $region16: #{tpu_custom_call.1} parent=1 // pred_region
      %s55 = ssub.s32 18432, 18432
      %56 = vsyncadd [#allocation10], %s55
      %s57 = sshll.u32 [#allocation9], 4
      %s58 = int_to_ptr.vmem [resolvable:$true] %s57
      %63 = dma.hbm_to_vmem [thread:$0]  %s3, 18432, %s58, [#allocation10], 64, 64, 4
    $region17: #{tpu_custom_call.1} parent=1 // pred_fallthru
      _
    // Predicated region
    $region18: #{tpu_custom_call.1} parent=1 // pred_check
      _
    $region19: #{tpu_custom_call.1} parent=1 // pred_check_branch
      %65 = sbr.rel (0) target = $region21
    $region20: #{tpu_custom_call.1} parent=1 // pred_region
      _
    $region21: #{tpu_custom_call.1} parent=1 // pred_fallthru
      _
    // Predicated region
    $region22: #{tpu_custom_call.1} parent=1 // pred_check
      _
    $region23: #{tpu_custom_call.1} parent=1 // pred_check_branch
      %67 = sbr.rel (0) target = $region25
    $region24: #{tpu_custom_call.1} parent=1 // pred_region
      _
    $region25: #{tpu_custom_call.1} parent=1 // pred_fallthru
      _
    // Predicated region
    $region26: #{tpu_custom_call.1} parent=1 // pred_check
      _
    $region27: #{tpu_custom_call.1} parent=1 // pred_check_branch
      %69 = sbr.rel (0) target = $region29
    $region28: #{tpu_custom_call.1} parent=1 // pred_region
      _
    $region29: #{tpu_custom_call.1} parent=1 // pred_fallthru
      _
    // Predicated region
    $region30: #{tpu_custom_call.1} parent=1 // pred_check
      _
    $region31: #{tpu_custom_call.1} parent=1 // pred_check_branch
      %71 = sbr.rel (0) target = $region33
    $region32: #{tpu_custom_call.1} parent=1 // pred_region
      %s73 = ssub.s32 1024, 1024
      %74 = vsyncadd [#allocation10], %s73
      %s75 = sshll.u32 [#allocation11], 4
      %s76 = int_to_ptr.vmem [resolvable:$true] %s75
      %81 = dma.hbm_to_vmem [thread:$0]  %s7, 1024, %s76, [#allocation10], 64, 64, 4
    $region33: #{tpu_custom_call.1} parent=1 // pred_fallthru
      _
    // Predicated region
    $region34: #{tpu_custom_call.1} parent=1 // pred_check
      _
    $region35: #{tpu_custom_call.1} parent=1 // pred_check_branch
      %83 = sbr.rel (0) target = $region37
    $region36: #{tpu_custom_call.1} parent=1 // pred_region
      _
    $region37: #{tpu_custom_call.1} parent=1 // pred_fallthru
      _
    // Predicated region
    $region38: #{tpu_custom_call.1} parent=1 // pred_check
      _
    $region39: #{tpu_custom_call.1} parent=1 // pred_check_branch
      %85 = sbr.rel (0) target = $region41
    $region40: #{tpu_custom_call.1} parent=1 // pred_region
      %86 = dma.done [#allocation4], 128
    $region41: #{tpu_custom_call.1} parent=1 // pred_fallthru
      _
    // Predicated region
    $region42: #{tpu_custom_call.1} parent=1 // pred_check
      _
    $region43: #{tpu_custom_call.1} parent=1 // pred_check_branch
      %88 = sbr.rel (0) target = $region45
    $region44: #{tpu_custom_call.1} parent=1 // pred_region
      %89 = dma.done [#allocation7], 1024
    $region45: #{tpu_custom_call.1} parent=1 // pred_fallthru
      _
    // Predicated region
    $region46: #{tpu_custom_call.1} parent=1 // pred_check
      _
    $region47: #{tpu_custom_call.1} parent=1 // pred_check_branch
      %91 = sbr.rel (0) target = $region49
    $region48: #{tpu_custom_call.1} parent=1 // pred_region
      %92 = dma.done [#allocation7], 16
    $region49: #{tpu_custom_call.1} parent=1 // pred_fallthru
      _
    // Predicated region
    $region50: #{tpu_custom_call.1} parent=1 // pred_check
      _
    $region51: #{tpu_custom_call.1} parent=1 // pred_check_branch
      %94 = sbr.rel (0) target = $region53
    $region52: #{tpu_custom_call.1} parent=1 // pred_region
      %95 = dma.done [#allocation10], 18432
    $region53: #{tpu_custom_call.1} parent=1 // pred_fallthru
      _
    // Predicated region
    $region54: #{tpu_custom_call.1} parent=1 // pred_check
      _
    $region55: #{tpu_custom_call.1} parent=1 // pred_check_branch
      %97 = sbr.rel (0) target = $region57
    $region56: #{tpu_custom_call.1} parent=1 // pred_region
      %98 = dma.done [#allocation10], 1024
    $region57: #{tpu_custom_call.1} parent=1 // pred_fallthru
      _
    %p100 = scmp.eq.s32.totalorder 0, 0
    // Predicated region
    $region58: #{tpu_custom_call.1} parent=1 // pred_check
      %p101 = pneg %p100
    $region59: #{tpu_custom_call.1} parent=1 // pred_check_branch
      %103 = sbr.rel (%p101) target = $region61
    $region60: #{tpu_custom_call.1} parent=1 // pred_region
      %v104 = vld [vmem:[#allocation3] sm:$0xf]
      %v105 = vld [vmem:[#allocation3 + $0x4] sm:$0xf]
      %v106 = vld [vmem:[#allocation6] sm:$0xf]
      %v107 = vld [vmem:[#allocation6 + $0x4] sm:$0xf]
      %v108 = vld [vmem:[#allocation6 + $0x8] sm:$0xf]
      %v109 = vld [vmem:[#allocation6 + $0xc] sm:$0xf]
      %v110 = vld [vmem:[#allocation6 + $0x10] sm:$0xf]
      %v111 = vld [vmem:[#allocation6 + $0x14] sm:$0xf]
      %v112 = vld [vmem:[#allocation6 + $0x18] sm:$0xf]
      %v113 = vld [vmem:[#allocation6 + $0x1c] sm:$0xf]
      %v114 = vld [vmem:[#allocation6 + $0x20] sm:$0xf]
      %v115 = vld [vmem:[#allocation6 + $0x24] sm:$0xf]
      %v116 = vld [vmem:[#allocation6 + $0x28] sm:$0xf]
      %v117 = vld [vmem:[#allocation6 + $0x2c] sm:$0xf]
      %v118 = vld [vmem:[#allocation6 + $0x30] sm:$0xf]
      %v119 = vld [vmem:[#allocation6 + $0x34] sm:$0xf]
      %v120 = vld [vmem:[#allocation6 + $0x38] sm:$0xf]
      %v121 = vld [vmem:[#allocation6 + $0x3c] sm:$0xf]
      %v122 = vld [vmem:[#allocation8] sm:$0x1]
      %v124 = vlaneseq
      %v125 = vshrl.u32 %v124, 7
      %v126 = vsub.s32 0, %v125
      %v127 = vrot.slane %v122, %v126
      %v131 = vunpack.c.l.b16 %v104
      %v132 = vunpack.c.l.b16 %v105
      %v133 = vpack.c.b16 %v132, %v131
      %v151 = vunpack.c.l.b16 %v106
      %v152 = vunpack.c.l.b16 %v107
      %v153 = vunpack.c.l.b16 %v108
      %v154 = vunpack.c.l.b16 %v109
      %v155 = vunpack.c.l.b16 %v110
      %v156 = vunpack.c.l.b16 %v111
      %v157 = vunpack.c.l.b16 %v112
      %v158 = vunpack.c.l.b16 %v113
      %v159 = vunpack.c.l.b16 %v114
      %v160 = vunpack.c.l.b16 %v115
      %v161 = vunpack.c.l.b16 %v116
      %v162 = vunpack.c.l.b16 %v117
      %v163 = vunpack.c.l.b16 %v118
      %v164 = vunpack.c.l.b16 %v119
      %v165 = vunpack.c.l.b16 %v120
      %v166 = vunpack.c.l.b16 %v121
      %v167 = vpack.c.b16 %v152, %v151
      %v168 = vpack.c.b16 %v154, %v153
      %v169 = vpack.c.b16 %v156, %v155
      %v170 = vpack.c.b16 %v158, %v157
      %v171 = vpack.c.b16 %v160, %v159
      %v172 = vpack.c.b16 %v162, %v161
      %v173 = vpack.c.b16 %v164, %v163
      %v174 = vpack.c.b16 %v166, %v165
      %183 = vmatprep.subr.bf16.mxu0 0
      %184 = vmatpush1.bf16.msra.mxu0 %v167
      %185 = vmatprep.subr.bf16.mxu0 0
      %186 = vmatpush1.bf16.msra.mxu0 %v168
      %187 = vmatprep.subr.bf16.mxu0 0
      %188 = vmatpush1.bf16.msra.mxu0 %v169
      %189 = vmatprep.subr.bf16.mxu0 0
      %190 = vmatpush1.bf16.msra.mxu0 %v170
      %191 = vmatprep.subr.bf16.mxu0 0
      %192 = vmatpush1.bf16.msra.mxu0 %v171
      %193 = vmatprep.subr.bf16.mxu0 0
      %194 = vmatpush1.bf16.msra.mxu0 %v172
      %195 = vmatprep.subr.bf16.mxu0 0
      %196 = vmatpush1.bf16.msra.mxu0 %v173
      %197 = vmatprep.subr.bf16.mxu0 0
      %198 = vmatpush1.bf16.msra.mxu0 %v174
      %199 = vmatprep.subr.bf16.mxu0 0
      %200 = vmatpush1.bf16.msra.mxu0 0
      %201 = vmatprep.subr.bf16.mxu0 0
      %202 = vmatpush1.bf16.msra.mxu0 0
      %203 = vmatprep.subr.bf16.mxu0 0
      %204 = vmatpush1.bf16.msra.mxu0 0
      %205 = vmatprep.subr.bf16.mxu0 0
      %206 = vmatpush1.bf16.msra.mxu0 0
      %207 = vmatprep.subr.bf16.mxu0 0
      %208 = vmatpush1.bf16.msra.mxu0 0
      %209 = vmatprep.subr.bf16.mxu0 0
      %210 = vmatpush1.bf16.msra.mxu0 0
      %211 = vmatprep.subr.bf16.mxu0 0
      %212 = vmatpush1.bf16.msra.mxu0 0
      %213 = vmatprep.subr.bf16.mxu0 0
      %214 = vmatpush1.bf16.msra.mxu0 0
      %215 = vmatprep.mubr.bf16.mxu0 0
      %216 = vmatmul.mubr.bf16.gmra.mrb[0].mxu0 %v133
      %v217 = vpop.f32.mrb[0].mxu0
      %v218 = vadd.f32 %v127, %v217
      %v219 = vpop.f32.mrb[0].mxu0
      %v220 = vpop.f32.mrb[0].mxu0
      %v221 = vadd.f32 %v127, %v220
      %v222 = vpop.f32.mrb[0].mxu0
      %223 = vdwg.mxu0
      %v224 = vlaneseq
      %v225 = vshrl.u32 %v224, 7
      %v226 = vadd.s32 %v225, 8
      %vm227 = vcmp.lt.s32.totalorder %v225, 0
      %v228 = vsub.s32 0, %v225
      %v229 = vsel %vm227, %v228, %v225
      %v230 = vshrl.u32 %v229, 3
      %v231 = vand.u32 %v229, 7
      %v232 = vsub.s32 0, %v231
      %v233 = vsel %vm227, %v232, %v231
      %vm234 = vcmp.lt.s32.totalorder %v226, 0
      %v235 = vsub.s32 0, %v226
      %v236 = vsel %vm234, %v235, %v226
      %v237 = vshrl.u32 %v236, 3
      %v238 = vand.u32 %v236, 7
      %v239 = vsub.s32 0, %v238
      %v240 = vsel %vm234, %v239, %v238
      %vm241 = vcmp.ne.s32.totalorder %v233, 0
      %vm242 = vcmp.ne.s32.totalorder %v240, 0
      %vm243 = vcmp.lt.s32.totalorder %v233, 0
      %vm244 = vcmp.lt.s32.totalorder %v240, 0
      %vm245 = vmand %vm243, %vm241
      %vm246 = vmand %vm244, %vm242
      %v247 = vadd.s32 %v233, 8
      %v248 = vadd.s32 %v240, 8
      %v249 = vsel %vm245, %v247, %v233
      %v250 = vsel %vm246, %v248, %v240
      %vm251 = vcmp.ge.s32.totalorder %v249, 1
      %vm252 = vcmp.ge.s32.totalorder %v250, 1
      %v253 = vsel %vm251, 1, 0
      %v254 = vsel %vm252, 1, 0
      %vm255 = vcmp.eq.s32.totalorder %v253, 1
      %vm256 = vcmp.eq.s32.totalorder %v254, 1
      %v257 = vsel %vm255, 1, 0
      %v258 = vsel %vm256, 1, 0
      %v259 = vcvt.s32.f32 %v257
      %v260 = vcvt.s32.f32 %v258
      %vm261 = vcmp.le.s32.totalorder %v249, 6
      %vm262 = vcmp.le.s32.totalorder %v250, 6
      %v263 = vsel %vm261, 1, 0
      %v264 = vsel %vm262, 1, 0
      %vm265 = vcmp.eq.s32.totalorder %v263, 1
      %vm266 = vcmp.eq.s32.totalorder %v264, 1
      %v267 = vsel %vm265, 1, 0
      %v268 = vsel %vm266, 1, 0
      %v269 = vcvt.s32.f32 %v267
      %v270 = vcvt.s32.f32 %v268
      %v271 = vld [vmem:[#allocation9] sm:$0xf]
      %v272 = vld [vmem:[#allocation9 + $0x4] sm:$0xf]
      %v273 = vld [vmem:[#allocation9 + $0x8] sm:$0xf]
      %v274 = vld [vmem:[#allocation9 + $0xc] sm:$0xf]
      %v275 = vld [vmem:[#allocation9 + $0x10] sm:$0xf]
      %v276 = vld [vmem:[#allocation9 + $0x14] sm:$0xf]
      %v277 = vld [vmem:[#allocation9 + $0x18] sm:$0xf]
      %v278 = vld [vmem:[#allocation9 + $0x1c] sm:$0xf]
      %v279 = vld [vmem:[#allocation9 + $0x20] sm:$0xf]
      %v280 = vld [vmem:[#allocation9 + $0x24] sm:$0xf]
      %v281 = vld [vmem:[#allocation9 + $0x28] sm:$0xf]
      %v282 = vld [vmem:[#allocation9 + $0x2c] sm:$0xf]
      %v283 = vld [vmem:[#allocation9 + $0x30] sm:$0xf]
      %v284 = vld [vmem:[#allocation9 + $0x34] sm:$0xf]
      %v285 = vld [vmem:[#allocation9 + $0x38] sm:$0xf]
      %v286 = vld [vmem:[#allocation9 + $0x3c] sm:$0xf]
      %v287 = vld [vmem:[#allocation9 + $0x40] sm:$0xf]
      %v288 = vld [vmem:[#allocation9 + $0x44] sm:$0xf]
      %v289 = vld [vmem:[#allocation9 + $0x48] sm:$0xf]
      %v290 = vld [vmem:[#allocation9 + $0x4c] sm:$0xf]
      %v291 = vld [vmem:[#allocation9 + $0x50] sm:$0xf]
      %v292 = vld [vmem:[#allocation9 + $0x54] sm:$0xf]
      %v293 = vld [vmem:[#allocation9 + $0x58] sm:$0xf]
      %v294 = vld [vmem:[#allocation9 + $0x5c] sm:$0xf]
      %v295 = vld [vmem:[#allocation9 + $0x60] sm:$0xf]
      %v296 = vld [vmem:[#allocation9 + $0x64] sm:$0xf]
      %v297 = vld [vmem:[#allocation9 + $0x68] sm:$0xf]
      %v298 = vld [vmem:[#allocation9 + $0x6c] sm:$0xf]
      %v299 = vld [vmem:[#allocation9 + $0x70] sm:$0xf]
      %v300 = vld [vmem:[#allocation9 + $0x74] sm:$0xf]
      %v301 = vld [vmem:[#allocation9 + $0x78] sm:$0xf]
      %v302 = vld [vmem:[#allocation9 + $0x7c] sm:$0xf]
      %v303 = vld [vmem:[#allocation9 + $0x80] sm:$0xf]
      %v304 = vld [vmem:[#allocation9 + $0x84] sm:$0xf]
      %v305 = vld [vmem:[#allocation9 + $0x88] sm:$0xf]
      %v306 = vld [vmem:[#allocation9 + $0x8c] sm:$0xf]
      %v307 = vld [vmem:[#allocation9 + $0x90] sm:$0xf]
      %v308 = vld [vmem:[#allocation9 + $0x94] sm:$0xf]
      %v309 = vld [vmem:[#allocation9 + $0x98] sm:$0xf]
      %v310 = vld [vmem:[#allocation9 + $0x9c] sm:$0xf]
      %v311 = vld [vmem:[#allocation9 + $0xa0] sm:$0xf]
      %v312 = vld [vmem:[#allocation9 + $0xa4] sm:$0xf]
      %v313 = vld [vmem:[#allocation9 + $0xa8] sm:$0xf]
      %v314 = vld [vmem:[#allocation9 + $0xac] sm:$0xf]
      %v315 = vld [vmem:[#allocation9 + $0xb0] sm:$0xf]
      %v316 = vld [vmem:[#allocation9 + $0xb4] sm:$0xf]
      %v317 = vld [vmem:[#allocation9 + $0xb8] sm:$0xf]
      %v318 = vld [vmem:[#allocation9 + $0xbc] sm:$0xf]
      %v319 = vld [vmem:[%s4] sm:$0x1]
      %v320 = vrot.slane %v218, 7
      %v321 = vrot.slane %v221, 7
      %vm322 = vcmp.lt.s32.totalorder %v225, 1
      %v323 = vsel %vm322, %v320, %v321
      %v324 = vsel %vm322, %v321, %v320
      %v325 = vmul.f32 %v324, %v259
      %v326 = vmul.f32 %v323, %v260
      %v327 = vrot.slane %v218, 1
      %v328 = vrot.slane %v221, 1
      %vm329 = vcmp.lt.s32.totalorder %v225, 7
      %v330 = vsel %vm329, %v327, %v328
      %v331 = vsel %vm329, %v328, %v327
      %v332 = vmul.f32 %v330, %v269
      %v333 = vmul.f32 %v331, %v270
      %v334 = vpack.c.bf16 %v326, %v325
      %v335 = vpack.c.bf16 %v221, %v218
      %v336 = vpack.c.bf16 %v333, %v332
      %v338 = vlaneseq
      %v339 = vshrl.u32 %v338, 7
      %v340 = vsub.s32 0, %v339
      %v341 = vrot.slane %v319, %v340
      %v391 = vunpack.c.l.b16 %v271
      %v392 = vunpack.c.l.b16 %v272
      %v393 = vunpack.c.l.b16 %v273
      %v394 = vunpack.c.l.b16 %v274
      %v395 = vunpack.c.l.b16 %v275
      %v396 = vunpack.c.l.b16 %v276
      %v397 = vunpack.c.l.b16 %v277
      %v398 = vunpack.c.l.b16 %v278
      %v399 = vunpack.c.l.b16 %v279
      %v400 = vunpack.c.l.b16 %v280
      %v401 = vunpack.c.l.b16 %v281
      %v402 = vunpack.c.l.b16 %v282
      %v403 = vunpack.c.l.b16 %v283
      %v404 = vunpack.c.l.b16 %v284
      %v405 = vunpack.c.l.b16 %v285
      %v406 = vunpack.c.l.b16 %v286
      %v407 = vunpack.c.l.b16 %v287
      %v408 = vunpack.c.l.b16 %v288
      %v409 = vunpack.c.l.b16 %v289
      %v410 = vunpack.c.l.b16 %v290
      %v411 = vunpack.c.l.b16 %v291
      %v412 = vunpack.c.l.b16 %v292
      %v413 = vunpack.c.l.b16 %v293
      %v414 = vunpack.c.l.b16 %v294
      %v415 = vunpack.c.l.b16 %v295
      %v416 = vunpack.c.l.b16 %v296
      %v417 = vunpack.c.l.b16 %v297
      %v418 = vunpack.c.l.b16 %v298
      %v419 = vunpack.c.l.b16 %v299
      %v420 = vunpack.c.l.b16 %v300
      %v421 = vunpack.c.l.b16 %v301
      %v422 = vunpack.c.l.b16 %v302
      %v423 = vunpack.c.l.b16 %v303
      %v424 = vunpack.c.l.b16 %v304
      %v425 = vunpack.c.l.b16 %v305
      %v426 = vunpack.c.l.b16 %v306
      %v427 = vunpack.c.l.b16 %v307
      %v428 = vunpack.c.l.b16 %v308
      %v429 = vunpack.c.l.b16 %v309
      %v430 = vunpack.c.l.b16 %v310
      %v431 = vunpack.c.l.b16 %v311
      %v432 = vunpack.c.l.b16 %v312
      %v433 = vunpack.c.l.b16 %v313
      %v434 = vunpack.c.l.b16 %v314
      %v435 = vunpack.c.l.b16 %v315
      %v436 = vunpack.c.l.b16 %v316
      %v437 = vunpack.c.l.b16 %v317
      %v438 = vunpack.c.l.b16 %v318
      %v439 = vpack.c.b16 %v392, %v391
      %v440 = vpack.c.b16 %v394, %v393
      %v441 = vpack.c.b16 %v396, %v395
      %v442 = vpack.c.b16 %v398, %v397
      %v443 = vpack.c.b16 %v400, %v399
      %v444 = vpack.c.b16 %v402, %v401
      %v445 = vpack.c.b16 %v404, %v403
      %v446 = vpack.c.b16 %v406, %v405
      %v447 = vpack.c.b16 %v408, %v407
      %v448 = vpack.c.b16 %v410, %v409
      %v449 = vpack.c.b16 %v412, %v411
      %v450 = vpack.c.b16 %v414, %v413
      %v451 = vpack.c.b16 %v416, %v415
      %v452 = vpack.c.b16 %v418, %v417
      %v453 = vpack.c.b16 %v420, %v419
      %v454 = vpack.c.b16 %v422, %v421
      %v455 = vpack.c.b16 %v424, %v423
      %v456 = vpack.c.b16 %v426, %v425
      %v457 = vpack.c.b16 %v428, %v427
      %v458 = vpack.c.b16 %v430, %v429
      %v459 = vpack.c.b16 %v432, %v431
      %v460 = vpack.c.b16 %v434, %v433
      %v461 = vpack.c.b16 %v436, %v435
      %v462 = vpack.c.b16 %v438, %v437
      %487 = vmatprep.subr.bf16.mxu0 0
      %488 = vmatpush1.bf16.msra.mxu0 %v439
      %489 = vmatprep.subr.bf16.mxu0 0
      %490 = vmatpush1.bf16.msra.mxu0 %v440
      %491 = vmatprep.subr.bf16.mxu0 0
      %492 = vmatpush1.bf16.msra.mxu0 %v441
      %493 = vmatprep.subr.bf16.mxu0 0
      %494 = vmatpush1.bf16.msra.mxu0 %v442
      %495 = vmatprep.subr.bf16.mxu0 0
      %496 = vmatpush1.bf16.msra.mxu0 %v443
      %497 = vmatprep.subr.bf16.mxu0 0
      %498 = vmatpush1.bf16.msra.mxu0 %v444
      %499 = vmatprep.subr.bf16.mxu0 0
      %500 = vmatpush1.bf16.msra.mxu0 %v445
      %501 = vmatprep.subr.bf16.mxu0 0
      %502 = vmatpush1.bf16.msra.mxu0 %v446
      %503 = vmatprep.subr.bf16.mxu0 0
      %504 = vmatpush1.bf16.msra.mxu0 %v447
      %505 = vmatprep.subr.bf16.mxu0 0
      %506 = vmatpush1.bf16.msra.mxu0 %v448
      %507 = vmatprep.subr.bf16.mxu0 0
      %508 = vmatpush1.bf16.msra.mxu0 %v449
      %509 = vmatprep.subr.bf16.mxu0 0
      %510 = vmatpush1.bf16.msra.mxu0 %v450
      %511 = vmatprep.subr.bf16.mxu0 0
      %512 = vmatpush1.bf16.msra.mxu0 %v451
      %513 = vmatprep.subr.bf16.mxu0 0
      %514 = vmatpush1.bf16.msra.mxu0 %v452
      %515 = vmatprep.subr.bf16.mxu0 0
      %516 = vmatpush1.bf16.msra.mxu0 %v453
      %517 = vmatprep.subr.bf16.mxu0 0
      %518 = vmatpush1.bf16.msra.mxu0 %v454
      %519 = vmatprep.mubr.bf16.mxu0 %v335
      %520 = vmatmul.mubr.bf16.gmra.mrb[0].mxu0 %v334
      %v521 = vpop.f32.mrb[0].mxu0
      %v522 = vadd.f32 %v341, %v521
      %v523 = vpop.f32.mrb[0].mxu0
      %v524 = vpop.f32.mrb[0].mxu0
      %v525 = vadd.f32 %v341, %v524
      %v526 = vpop.f32.mrb[0].mxu0
      %527 = vdwg.mxu0
      %528 = vmatprep.subr.bf16.mxu0 0
      %529 = vmatpush1.bf16.msra.mxu0 %v455
      %530 = vmatprep.subr.bf16.mxu0 0
      %531 = vmatpush1.bf16.msra.mxu0 %v456
      %532 = vmatprep.subr.bf16.mxu0 0
      %533 = vmatpush1.bf16.msra.mxu0 %v457
      %534 = vmatprep.subr.bf16.mxu0 0
      %535 = vmatpush1.bf16.msra.mxu0 %v458
      %536 = vmatprep.subr.bf16.mxu0 0
      %537 = vmatpush1.bf16.msra.mxu0 %v459
      %538 = vmatprep.subr.bf16.mxu0 0
      %539 = vmatpush1.bf16.msra.mxu0 %v460
      %540 = vmatprep.subr.bf16.mxu0 0
      %541 = vmatpush1.bf16.msra.mxu0 %v461
      %542 = vmatprep.subr.bf16.mxu0 0
      %543 = vmatpush1.bf16.msra.mxu0 %v462
      %544 = vmatprep.subr.bf16.mxu0 0
      %545 = vmatpush1.bf16.msra.mxu0 0
      %546 = vmatprep.subr.bf16.mxu0 0
      %547 = vmatpush1.bf16.msra.mxu0 0
      %548 = vmatprep.subr.bf16.mxu0 0
      %549 = vmatpush1.bf16.msra.mxu0 0
      %550 = vmatprep.subr.bf16.mxu0 0
      %551 = vmatpush1.bf16.msra.mxu0 0
      %552 = vmatprep.subr.bf16.mxu0 0
      %553 = vmatpush1.bf16.msra.mxu0 0
      %554 = vmatprep.subr.bf16.mxu0 0
      %555 = vmatpush1.bf16.msra.mxu0 0
      %556 = vmatprep.subr.bf16.mxu0 0
      %557 = vmatpush1.bf16.msra.mxu0 0
      %558 = vmatprep.subr.bf16.mxu0 0
      %559 = vmatpush1.bf16.msra.mxu0 0
      %560 = vmatprep.mubr.bf16.mxu0 0
      %561 = vmatmul.mubr.bf16.gmra.mrb[0].mxu0 %v336
      %v562 = vpop.f32.mrb[0].mxu0
      %v563 = vadd.f32 %v522, %v562
      %v564 = vpop.f32.mrb[0].mxu0
      %v565 = vpop.f32.mrb[0].mxu0
      %v566 = vadd.f32 %v525, %v565
      %v567 = vpop.f32.mrb[0].mxu0
      %568 = vdwg.mxu0
      %v569 = vld [vmem:[%s5] sm:$0x1]
      %v570 = vld [vmem:[%s6] sm:$0x1]
      %v571 = vadd.f32 %v563, %v566
      %v572 = vrot.slane %v571, 4
      %v573 = vadd.f32 %v571, %v572
      %v574 = vrot.slane %v573, 2
      %v575 = vadd.f32 %v573, %v574
      %v576 = vrot.slane %v575, 1
      %v577 = vadd.f32 %v575, %v576
      %v578 = vrcp.pop 16.0
      %v579 = vmul.f32 %v577, %v578
      %v580 = vsub.f32 %v563, %v579
      %v581 = vsub.f32 %v566, %v579
      %v582 = vmul.f32 %v580, %v580
      %v583 = vmul.f32 %v581, %v581
      %v584 = vadd.f32 %v582, %v583
      %v585 = vrot.slane %v584, 4
      %v586 = vadd.f32 %v584, %v585
      %v587 = vrot.slane %v586, 2
      %v588 = vadd.f32 %v586, %v587
      %v589 = vrot.slane %v588, 1
      %v590 = vadd.f32 %v588, %v589
      %v591 = vmul.f32 %v590, %v578
      %v592 = vadd.f32 %v591, 1e-05
      %v593 = vrsqrt.pop %v592
      %v594 = vmul.f32 %v569, %v593
      %v596 = vlaneseq
      %v597 = vshrl.u32 %v596, 7
      %v598 = vsub.s32 0, %v597
      %v599 = vrot.slane %v594, %v598
      %v601 = vmul.f32 %v580, %v599
      %v602 = vmul.f32 %v581, %v599
      %v604 = vlaneseq
      %v605 = vshrl.u32 %v604, 7
      %v606 = vsub.s32 0, %v605
      %v607 = vrot.slane %v570, %v606
      %v609 = vadd.f32 %v601, %v607
      %v610 = vadd.f32 %v602, %v607
      %v611 = vmax.f32 %v609, 0.0
      %v612 = vmax.f32 %v610, 0.0
      %s613 = scalar_lea.vmem [#allocation9], 192
      %v614 = vld [vmem:[%s613] sm:$0xf]
      %v615 = vld [vmem:[%s613 + $0x4] sm:$0xf]
      %v616 = vld [vmem:[%s613 + $0x8] sm:$0xf]
      %v617 = vld [vmem:[%s613 + $0xc] sm:$0xf]
      %v618 = vld [vmem:[%s613 + $0x10] sm:$0xf]
      %v619 = vld [vmem:[%s613 + $0x14] sm:$0xf]
      %v620 = vld [vmem:[%s613 + $0x18] sm:$0xf]
      %v621 = vld [vmem:[%s613 + $0x1c] sm:$0xf]
      %v622 = vld [vmem:[%s613 + $0x20] sm:$0xf]
      %v623 = vld [vmem:[%s613 + $0x24] sm:$0xf]
      %v624 = vld [vmem:[%s613 + $0x28] sm:$0xf]
      %v625 = vld [vmem:[%s613 + $0x2c] sm:$0xf]
      %v626 = vld [vmem:[%s613 + $0x30] sm:$0xf]
      %v627 = vld [vmem:[%s613 + $0x34] sm:$0xf]
      %v628 = vld [vmem:[%s613 + $0x38] sm:$0xf]
      %v629 = vld [vmem:[%s613 + $0x3c] sm:$0xf]
      %v630 = vld [vmem:[%s613 + $0x40] sm:$0xf]
      %v631 = vld [vmem:[%s613 + $0x44] sm:$0xf]
      %v632 = vld [vmem:[%s613 + $0x48] sm:$0xf]
      %v633 = vld [vmem:[%s613 + $0x4c] sm:$0xf]
      %v634 = vld [vmem:[%s613 + $0x50] sm:$0xf]
      %v635 = vld [vmem:[%s613 + $0x54] sm:$0xf]
      %v636 = vld [vmem:[%s613 + $0x58] sm:$0xf]
      %v637 = vld [vmem:[%s613 + $0x5c] sm:$0xf]
      %v638 = vld [vmem:[%s613 + $0x60] sm:$0xf]
      %v639 = vld [vmem:[%s613 + $0x64] sm:$0xf]
      %v640 = vld [vmem:[%s613 + $0x68] sm:$0xf]
      %v641 = vld [vmem:[%s613 + $0x6c] sm:$0xf]
      %v642 = vld [vmem:[%s613 + $0x70] sm:$0xf]
      %v643 = vld [vmem:[%s613 + $0x74] sm:$0xf]
      %v644 = vld [vmem:[%s613 + $0x78] sm:$0xf]
      %v645 = vld [vmem:[%s613 + $0x7c] sm:$0xf]
      %v646 = vld [vmem:[%s613 + $0x80] sm:$0xf]
      %v647 = vld [vmem:[%s613 + $0x84] sm:$0xf]
      %v648 = vld [vmem:[%s613 + $0x88] sm:$0xf]
      %v649 = vld [vmem:[%s613 + $0x8c] sm:$0xf]
      %v650 = vld [vmem:[%s613 + $0x90] sm:$0xf]
      %v651 = vld [vmem:[%s613 + $0x94] sm:$0xf]
      %v652 = vld [vmem:[%s613 + $0x98] sm:$0xf]
      %v653 = vld [vmem:[%s613 + $0x9c] sm:$0xf]
      %v654 = vld [vmem:[%s613 + $0xa0] sm:$0xf]
      %v655 = vld [vmem:[%s613 + $0xa4] sm:$0xf]
      %v656 = vld [vmem:[%s613 + $0xa8] sm:$0xf]
      %v657 = vld [vmem:[%s613 + $0xac] sm:$0xf]
      %v658 = vld [vmem:[%s613 + $0xb0] sm:$0xf]
      %v659 = vld [vmem:[%s613 + $0xb4] sm:$0xf]
      %v660 = vld [vmem:[%s613 + $0xb8] sm:$0xf]
      %v661 = vld [vmem:[%s613 + $0xbc] sm:$0xf]
      %s662 = scalar_lea.vmem %s4, 1
      %v663 = vld [vmem:[%s662] sm:$0x1]
      %v664 = vrot.slane %v611, 7
      %v665 = vrot.slane %v612, 7
      %v666 = vsel %vm322, %v664, %v665
      %v667 = vsel %vm322, %v665, %v664
      %v668 = vmul.f32 %v667, %v259
      %v669 = vmul.f32 %v666, %v260
      %v670 = vrot.slane %v611, 1
      %v671 = vrot.slane %v612, 1
      %v672 = vsel %vm329, %v670, %v671
      %v673 = vsel %vm329, %v671, %v670
      %v674 = vmul.f32 %v672, %v269
      %v675 = vmul.f32 %v673, %v270
      %v676 = vpack.c.bf16 %v669, %v668
      %v677 = vpack.c.bf16 %v612, %v611
      %v678 = vpack.c.bf16 %v675, %v674
      %v680 = vlaneseq
      %v681 = vshrl.u32 %v680, 7
      %v682 = vsub.s32 0, %v681
      %v683 = vrot.slane %v663, %v682
      %v733 = vunpack.c.l.b16 %v614
      %v734 = vunpack.c.l.b16 %v615
      %v735 = vunpack.c.l.b16 %v616
      %v736 = vunpack.c.l.b16 %v617
      %v737 = vunpack.c.l.b16 %v618
      %v738 = vunpack.c.l.b16 %v619
      %v739 = vunpack.c.l.b16 %v620
      %v740 = vunpack.c.l.b16 %v621
      %v741 = vunpack.c.l.b16 %v622
      %v742 = vunpack.c.l.b16 %v623
      %v743 = vunpack.c.l.b16 %v624
      %v744 = vunpack.c.l.b16 %v625
      %v745 = vunpack.c.l.b16 %v626
      %v746 = vunpack.c.l.b16 %v627
      %v747 = vunpack.c.l.b16 %v628
      %v748 = vunpack.c.l.b16 %v629
      %v749 = vunpack.c.l.b16 %v630
      %v750 = vunpack.c.l.b16 %v631
      %v751 = vunpack.c.l.b16 %v632
      %v752 = vunpack.c.l.b16 %v633
      %v753 = vunpack.c.l.b16 %v634
      %v754 = vunpack.c.l.b16 %v635
      %v755 = vunpack.c.l.b16 %v636
      %v756 = vunpack.c.l.b16 %v637
      %v757 = vunpack.c.l.b16 %v638
      %v758 = vunpack.c.l.b16 %v639
      %v759 = vunpack.c.l.b16 %v640
      %v760 = vunpack.c.l.b16 %v641
      %v761 = vunpack.c.l.b16 %v642
      %v762 = vunpack.c.l.b16 %v643
      %v763 = vunpack.c.l.b16 %v644
      %v764 = vunpack.c.l.b16 %v645
      %v765 = vunpack.c.l.b16 %v646
      %v766 = vunpack.c.l.b16 %v647
      %v767 = vunpack.c.l.b16 %v648
      %v768 = vunpack.c.l.b16 %v649
      %v769 = vunpack.c.l.b16 %v650
      %v770 = vunpack.c.l.b16 %v651
      %v771 = vunpack.c.l.b16 %v652
      %v772 = vunpack.c.l.b16 %v653
      %v773 = vunpack.c.l.b16 %v654
      %v774 = vunpack.c.l.b16 %v655
      %v775 = vunpack.c.l.b16 %v656
      %v776 = vunpack.c.l.b16 %v657
      %v777 = vunpack.c.l.b16 %v658
      %v778 = vunpack.c.l.b16 %v659
      %v779 = vunpack.c.l.b16 %v660
      %v780 = vunpack.c.l.b16 %v661
      %v781 = vpack.c.b16 %v734, %v733
      %v782 = vpack.c.b16 %v736, %v735
      %v783 = vpack.c.b16 %v738, %v737
      %v784 = vpack.c.b16 %v740, %v739
      %v785 = vpack.c.b16 %v742, %v741
      %v786 = vpack.c.b16 %v744, %v743
      %v787 = vpack.c.b16 %v746, %v745
      %v788 = vpack.c.b16 %v748, %v747
      %v789 = vpack.c.b16 %v750, %v749
      %v790 = vpack.c.b16 %v752, %v751
      %v791 = vpack.c.b16 %v754, %v753
      %v792 = vpack.c.b16 %v756, %v755
      %v793 = vpack.c.b16 %v758, %v757
      %v794 = vpack.c.b16 %v760, %v759
      %v795 = vpack.c.b16 %v762, %v761
      %v796 = vpack.c.b16 %v764, %v763
      %v797 = vpack.c.b16 %v766, %v765
      %v798 = vpack.c.b16 %v768, %v767
      %v799 = vpack.c.b16 %v770, %v769
      %v800 = vpack.c.b16 %v772, %v771
      %v801 = vpack.c.b16 %v774, %v773
      %v802 = vpack.c.b16 %v776, %v775
      %v803 = vpack.c.b16 %v778, %v777
      %v804 = vpack.c.b16 %v780, %v779
      %829 = vmatprep.subr.bf16.mxu0 0
      %830 = vmatpush1.bf16.msra.mxu0 %v781
      %831 = vmatprep.subr.bf16.mxu0 0
      %832 = vmatpush1.bf16.msra.mxu0 %v782
      %833 = vmatprep.subr.bf16.mxu0 0
      %834 = vmatpush1.bf16.msra.mxu0 %v783
      %835 = vmatprep.subr.bf16.mxu0 0
      %836 = vmatpush1.bf16.msra.mxu0 %v784
      %837 = vmatprep.subr.bf16.mxu0 0
      %838 = vmatpush1.bf16.msra.mxu0 %v785
      %839 = vmatprep.subr.bf16.mxu0 0
      %840 = vmatpush1.bf16.msra.mxu0 %v786
      %841 = vmatprep.subr.bf16.mxu0 0
      %842 = vmatpush1.bf16.msra.mxu0 %v787
      %843 = vmatprep.subr.bf16.mxu0 0
      %844 = vmatpush1.bf16.msra.mxu0 %v788
      %845 = vmatprep.subr.bf16.mxu0 0
      %846 = vmatpush1.bf16.msra.mxu0 %v789
      %847 = vmatprep.subr.bf16.mxu0 0
      %848 = vmatpush1.bf16.msra.mxu0 %v790
      %849 = vmatprep.subr.bf16.mxu0 0
      %850 = vmatpush1.bf16.msra.mxu0 %v791
      %851 = vmatprep.subr.bf16.mxu0 0
      %852 = vmatpush1.bf16.msra.mxu0 %v792
      %853 = vmatprep.subr.bf16.mxu0 0
      %854 = vmatpush1.bf16.msra.mxu0 %v793
      %855 = vmatprep.subr.bf16.mxu0 0
      %856 = vmatpush1.bf16.msra.mxu0 %v794
      %857 = vmatprep.subr.bf16.mxu0 0
      %858 = vmatpush1.bf16.msra.mxu0 %v795
      %859 = vmatprep.subr.bf16.mxu0 0
      %860 = vmatpush1.bf16.msra.mxu0 %v796
      %861 = vmatprep.mubr.bf16.mxu0 %v677
      %862 = vmatmul.mubr.bf16.gmra.mrb[0].mxu0 %v676
      %v863 = vpop.f32.mrb[0].mxu0
      %v864 = vadd.f32 %v683, %v863
      %v865 = vpop.f32.mrb[0].mxu0
      %v866 = vpop.f32.mrb[0].mxu0
      %v867 = vadd.f32 %v683, %v866
      %v868 = vpop.f32.mrb[0].mxu0
      %869 = vdwg.mxu0
      %870 = vmatprep.subr.bf16.mxu0 0
      %871 = vmatpush1.bf16.msra.mxu0 %v797
      %872 = vmatprep.subr.bf16.mxu0 0
      %873 = vmatpush1.bf16.msra.mxu0 %v798
      %874 = vmatprep.subr.bf16.mxu0 0
      %875 = vmatpush1.bf16.msra.mxu0 %v799
      %876 = vmatprep.subr.bf16.mxu0 0
      %877 = vmatpush1.bf16.msra.mxu0 %v800
      %878 = vmatprep.subr.bf16.mxu0 0
      %879 = vmatpush1.bf16.msra.mxu0 %v801
      %880 = vmatprep.subr.bf16.mxu0 0
      %881 = vmatpush1.bf16.msra.mxu0 %v802
      %882 = vmatprep.subr.bf16.mxu0 0
      %883 = vmatpush1.bf16.msra.mxu0 %v803
      %884 = vmatprep.subr.bf16.mxu0 0
      %885 = vmatpush1.bf16.msra.mxu0 %v804
      %886 = vmatprep.subr.bf16.mxu0 0
      %887 = vmatpush1.bf16.msra.mxu0 0
      %888 = vmatprep.subr.bf16.mxu0 0
      %889 = vmatpush1.bf16.msra.mxu0 0
      %890 = vmatprep.subr.bf16.mxu0 0
      %891 = vmatpush1.bf16.msra.mxu0 0
      %892 = vmatprep.subr.bf16.mxu0 0
      %893 = vmatpush1.bf16.msra.mxu0 0
      %894 = vmatprep.subr.bf16.mxu0 0
      %895 = vmatpush1.bf16.msra.mxu0 0
      %896 = vmatprep.subr.bf16.mxu0 0
      %897 = vmatpush1.bf16.msra.mxu0 0
      %898 = vmatprep.subr.bf16.mxu0 0
      %899 = vmatpush1.bf16.msra.mxu0 0
      %900 = vmatprep.subr.bf16.mxu0 0
      %901 = vmatpush1.bf16.msra.mxu0 0
      %902 = vmatprep.mubr.bf16.mxu0 0
      %903 = vmatmul.mubr.bf16.gmra.mrb[0].mxu0 %v678
      %v904 = vpop.f32.mrb[0].mxu0
      %v905 = vadd.f32 %v864, %v904
      %v906 = vpop.f32.mrb[0].mxu0
      %v907 = vpop.f32.mrb[0].mxu0
      %v908 = vadd.f32 %v867, %v907
      %v909 = vpop.f32.mrb[0].mxu0
      %910 = vdwg.mxu0
      %s911 = scalar_lea.vmem %s5, 1
      %v912 = vld [vmem:[%s911] sm:$0x1]
      %s913 = scalar_lea.vmem %s6, 1
      %v914 = vld [vmem:[%s913] sm:$0x1]
      %v915 = vadd.f32 %v905, %v908
      %v916 = vrot.slane %v915, 4
      %v917 = vadd.f32 %v915, %v916
      %v918 = vrot.slane %v917, 2
      %v919 = vadd.f32 %v917, %v918
      %v920 = vrot.slane %v919, 1
      %v921 = vadd.f32 %v919, %v920
      %v922 = vmul.f32 %v921, %v578
      %v923 = vsub.f32 %v905, %v922
      %v924 = vsub.f32 %v908, %v922
      %v925 = vmul.f32 %v923, %v923
      %v926 = vmul.f32 %v924, %v924
      %v927 = vadd.f32 %v925, %v926
      %v928 = vrot.slane %v927, 4
      %v929 = vadd.f32 %v927, %v928
      %v930 = vrot.slane %v929, 2
      %v931 = vadd.f32 %v929, %v930
      %v932 = vrot.slane %v931, 1
      %v933 = vadd.f32 %v931, %v932
      %v934 = vmul.f32 %v933, %v578
      %v935 = vadd.f32 %v934, 1e-05
      %v936 = vrsqrt.pop %v935
      %v937 = vmul.f32 %v912, %v936
      %v939 = vlaneseq
      %v940 = vshrl.u32 %v939, 7
      %v941 = vsub.s32 0, %v940
      %v942 = vrot.slane %v937, %v941
      %v944 = vmul.f32 %v923, %v942
      %v945 = vmul.f32 %v924, %v942
      %v947 = vlaneseq
      %v948 = vshrl.u32 %v947, 7
      %v949 = vsub.s32 0, %v948
      %v950 = vrot.slane %v914, %v949
      %v952 = vadd.f32 %v944, %v950
      %v953 = vadd.f32 %v945, %v950
      %v954 = vadd.f32 %v952, %v218
      %v955 = vadd.f32 %v953, %v221
      %v956 = vmax.f32 %v954, 0.0
      %v957 = vmax.f32 %v955, 0.0
      %s958 = scalar_lea.vmem [#allocation9], 384
      %v959 = vld [vmem:[%s958] sm:$0xf]
      %v960 = vld [vmem:[%s958 + $0x4] sm:$0xf]
      %v961 = vld [vmem:[%s958 + $0x8] sm:$0xf]
      %v962 = vld [vmem:[%s958 + $0xc] sm:$0xf]
      %v963 = vld [vmem:[%s958 + $0x10] sm:$0xf]
      %v964 = vld [vmem:[%s958 + $0x14] sm:$0xf]
      %v965 = vld [vmem:[%s958 + $0x18] sm:$0xf]
      %v966 = vld [vmem:[%s958 + $0x1c] sm:$0xf]
      %v967 = vld [vmem:[%s958 + $0x20] sm:$0xf]
      %v968 = vld [vmem:[%s958 + $0x24] sm:$0xf]
      %v969 = vld [vmem:[%s958 + $0x28] sm:$0xf]
      %v970 = vld [vmem:[%s958 + $0x2c] sm:$0xf]
      %v971 = vld [vmem:[%s958 + $0x30] sm:$0xf]
      %v972 = vld [vmem:[%s958 + $0x34] sm:$0xf]
      %v973 = vld [vmem:[%s958 + $0x38] sm:$0xf]
      %v974 = vld [vmem:[%s958 + $0x3c] sm:$0xf]
      %v975 = vld [vmem:[%s958 + $0x40] sm:$0xf]
      %v976 = vld [vmem:[%s958 + $0x44] sm:$0xf]
      %v977 = vld [vmem:[%s958 + $0x48] sm:$0xf]
      %v978 = vld [vmem:[%s958 + $0x4c] sm:$0xf]
      %v979 = vld [vmem:[%s958 + $0x50] sm:$0xf]
      %v980 = vld [vmem:[%s958 + $0x54] sm:$0xf]
      %v981 = vld [vmem:[%s958 + $0x58] sm:$0xf]
      %v982 = vld [vmem:[%s958 + $0x5c] sm:$0xf]
      %v983 = vld [vmem:[%s958 + $0x60] sm:$0xf]
      %v984 = vld [vmem:[%s958 + $0x64] sm:$0xf]
      %v985 = vld [vmem:[%s958 + $0x68] sm:$0xf]
      %v986 = vld [vmem:[%s958 + $0x6c] sm:$0xf]
      %v987 = vld [vmem:[%s958 + $0x70] sm:$0xf]
      %v988 = vld [vmem:[%s958 + $0x74] sm:$0xf]
      %v989 = vld [vmem:[%s958 + $0x78] sm:$0xf]
      %v990 = vld [vmem:[%s958 + $0x7c] sm:$0xf]
      %v991 = vld [vmem:[%s958 + $0x80] sm:$0xf]
      %v992 = vld [vmem:[%s958 + $0x84] sm:$0xf]
      %v993 = vld [vmem:[%s958 + $0x88] sm:$0xf]
      %v994 = vld [vmem:[%s958 + $0x8c] sm:$0xf]
      %v995 = vld [vmem:[%s958 + $0x90] sm:$0xf]
      %v996 = vld [vmem:[%s958 + $0x94] sm:$0xf]
      %v997 = vld [vmem:[%s958 + $0x98] sm:$0xf]
      %v998 = vld [vmem:[%s958 + $0x9c] sm:$0xf]
      %v999 = vld [vmem:[%s958 + $0xa0] sm:$0xf]
      %v1000 = vld [vmem:[%s958 + $0xa4] sm:$0xf]
      %v1001 = vld [vmem:[%s958 + $0xa8] sm:$0xf]
      %v1002 = vld [vmem:[%s958 + $0xac] sm:$0xf]
      %v1003 = vld [vmem:[%s958 + $0xb0] sm:$0xf]
      %v1004 = vld [vmem:[%s958 + $0xb4] sm:$0xf]
      %v1005 = vld [vmem:[%s958 + $0xb8] sm:$0xf]
      %v1006 = vld [vmem:[%s958 + $0xbc] sm:$0xf]
      %s1007 = scalar_lea.vmem %s4, 2
      %v1008 = vld [vmem:[%s1007] sm:$0x1]
      %v1009 = vrot.slane %v956, 7
      %v1010 = vrot.slane %v957, 7
      %v1011 = vsel %vm322, %v1009, %v1010
      %v1012 = vsel %vm322, %v1010, %v1009
      %v1013 = vmul.f32 %v1012, %v259
      %v1014 = vmul.f32 %v1011, %v260
      %v1015 = vrot.slane %v956, 1
      %v1016 = vrot.slane %v957, 1
      %v1017 = vsel %vm329, %v1015, %v1016
      %v1018 = vsel %vm329, %v1016, %v1015
      %v1019 = vmul.f32 %v1017, %v269
      %v1020 = vmul.f32 %v1018, %v270
      %v1021 = vpack.c.bf16 %v1014, %v1013
      %v1022 = vpack.c.bf16 %v957, %v956
      %v1023 = vpack.c.bf16 %v1020, %v1019
      %v1025 = vlaneseq
      %v1026 = vshrl.u32 %v1025, 7
      %v1027 = vsub.s32 0, %v1026
      %v1028 = vrot.slane %v1008, %v1027
      %v1078 = vunpack.c.l.b16 %v959
      %v1079 = vunpack.c.l.b16 %v960
      %v1080 = vunpack.c.l.b16 %v961
      %v1081 = vunpack.c.l.b16 %v962
      %v1082 = vunpack.c.l.b16 %v963
      %v1083 = vunpack.c.l.b16 %v964
      %v1084 = vunpack.c.l.b16 %v965
      %v1085 = vunpack.c.l.b16 %v966
      %v1086 = vunpack.c.l.b16 %v967
      %v1087 = vunpack.c.l.b16 %v968
      %v1088 = vunpack.c.l.b16 %v969
      %v1089 = vunpack.c.l.b16 %v970
      %v1090 = vunpack.c.l.b16 %v971
      %v1091 = vunpack.c.l.b16 %v972
      %v1092 = vunpack.c.l.b16 %v973
      %v1093 = vunpack.c.l.b16 %v974
      %v1094 = vunpack.c.l.b16 %v975
      %v1095 = vunpack.c.l.b16 %v976
      %v1096 = vunpack.c.l.b16 %v977
      %v1097 = vunpack.c.l.b16 %v978
      %v1098 = vunpack.c.l.b16 %v979
      %v1099 = vunpack.c.l.b16 %v980
      %v1100 = vunpack.c.l.b16 %v981
      %v1101 = vunpack.c.l.b16 %v982
      %v1102 = vunpack.c.l.b16 %v983
      %v1103 = vunpack.c.l.b16 %v984
      %v1104 = vunpack.c.l.b16 %v985
      %v1105 = vunpack.c.l.b16 %v986
      %v1106 = vunpack.c.l.b16 %v987
      %v1107 = vunpack.c.l.b16 %v988
      %v1108 = vunpack.c.l.b16 %v989
      %v1109 = vunpack.c.l.b16 %v990
      %v1110 = vunpack.c.l.b16 %v991
      %v1111 = vunpack.c.l.b16 %v992
      %v1112 = vunpack.c.l.b16 %v993
      %v1113 = vunpack.c.l.b16 %v994
      %v1114 = vunpack.c.l.b16 %v995
      %v1115 = vunpack.c.l.b16 %v996
      %v1116 = vunpack.c.l.b16 %v997
      %v1117 = vunpack.c.l.b16 %v998
      %v1118 = vunpack.c.l.b16 %v999
      %v1119 = vunpack.c.l.b16 %v1000
      %v1120 = vunpack.c.l.b16 %v1001
      %v1121 = vunpack.c.l.b16 %v1002
      %v1122 = vunpack.c.l.b16 %v1003
      %v1123 = vunpack.c.l.b16 %v1004
      %v1124 = vunpack.c.l.b16 %v1005
      %v1125 = vunpack.c.l.b16 %v1006
      %v1126 = vpack.c.b16 %v1079, %v1078
      %v1127 = vpack.c.b16 %v1081, %v1080
      %v1128 = vpack.c.b16 %v1083, %v1082
      %v1129 = vpack.c.b16 %v1085, %v1084
      %v1130 = vpack.c.b16 %v1087, %v1086
      %v1131 = vpack.c.b16 %v1089, %v1088
      %v1132 = vpack.c.b16 %v1091, %v1090
      %v1133 = vpack.c.b16 %v1093, %v1092
      %v1134 = vpack.c.b16 %v1095, %v1094
      %v1135 = vpack.c.b16 %v1097, %v1096
      %v1136 = vpack.c.b16 %v1099, %v1098
      %v1137 = vpack.c.b16 %v1101, %v1100
      %v1138 = vpack.c.b16 %v1103, %v1102
      %v1139 = vpack.c.b16 %v1105, %v1104
      %v1140 = vpack.c.b16 %v1107, %v1106
      %v1141 = vpack.c.b16 %v1109, %v1108
      %v1142 = vpack.c.b16 %v1111, %v1110
      %v1143 = vpack.c.b16 %v1113, %v1112
      %v1144 = vpack.c.b16 %v1115, %v1114
      %v1145 = vpack.c.b16 %v1117, %v1116
      %v1146 = vpack.c.b16 %v1119, %v1118
      %v1147 = vpack.c.b16 %v1121, %v1120
      %v1148 = vpack.c.b16 %v1123, %v1122
      %v1149 = vpack.c.b16 %v1125, %v1124
      %1174 = vmatprep.subr.bf16.mxu0 0
      %1175 = vmatpush1.bf16.msra.mxu0 %v1126
      %1176 = vmatprep.subr.bf16.mxu0 0
      %1177 = vmatpush1.bf16.msra.mxu0 %v1127
      %1178 = vmatprep.subr.bf16.mxu0 0
      %1179 = vmatpush1.bf16.msra.mxu0 %v1128
      %1180 = vmatprep.subr.bf16.mxu0 0
      %1181 = vmatpush1.bf16.msra.mxu0 %v1129
      %1182 = vmatprep.subr.bf16.mxu0 0
      %1183 = vmatpush1.bf16.msra.mxu0 %v1130
      %1184 = vmatprep.subr.bf16.mxu0 0
      %1185 = vmatpush1.bf16.msra.mxu0 %v1131
      %1186 = vmatprep.subr.bf16.mxu0 0
      %1187 = vmatpush1.bf16.msra.mxu0 %v1132
      %1188 = vmatprep.subr.bf16.mxu0 0
      %1189 = vmatpush1.bf16.msra.mxu0 %v1133
      %1190 = vmatprep.subr.bf16.mxu0 0
      %1191 = vmatpush1.bf16.msra.mxu0 %v1134
      %1192 = vmatprep.subr.bf16.mxu0 0
      %1193 = vmatpush1.bf16.msra.mxu0 %v1135
      %1194 = vmatprep.subr.bf16.mxu0 0
      %1195 = vmatpush1.bf16.msra.mxu0 %v1136
      %1196 = vmatprep.subr.bf16.mxu0 0
      %1197 = vmatpush1.bf16.msra.mxu0 %v1137
      %1198 = vmatprep.subr.bf16.mxu0 0
      %1199 = vmatpush1.bf16.msra.mxu0 %v1138
      %1200 = vmatprep.subr.bf16.mxu0 0
      %1201 = vmatpush1.bf16.msra.mxu0 %v1139
      %1202 = vmatprep.subr.bf16.mxu0 0
      %1203 = vmatpush1.bf16.msra.mxu0 %v1140
      %1204 = vmatprep.subr.bf16.mxu0 0
      %1205 = vmatpush1.bf16.msra.mxu0 %v1141
      %1206 = vmatprep.mubr.bf16.mxu0 %v1022
      %1207 = vmatmul.mubr.bf16.gmra.mrb[0].mxu0 %v1021
      %v1208 = vpop.f32.mrb[0].mxu0
      %v1209 = vadd.f32 %v1028, %v1208
      %v1210 = vpop.f32.mrb[0].mxu0
      %v1211 = vpop.f32.mrb[0].mxu0
      %v1212 = vadd.f32 %v1028, %v1211
      %v1213 = vpop.f32.mrb[0].mxu0
      %1214 = vdwg.mxu0
      %1215 = vmatprep.subr.bf16.mxu0 0
      %1216 = vmatpush1.bf16.msra.mxu0 %v1142
      %1217 = vmatprep.subr.bf16.mxu0 0
      %1218 = vmatpush1.bf16.msra.mxu0 %v1143
      %1219 = vmatprep.subr.bf16.mxu0 0
      %1220 = vmatpush1.bf16.msra.mxu0 %v1144
      %1221 = vmatprep.subr.bf16.mxu0 0
      %1222 = vmatpush1.bf16.msra.mxu0 %v1145
      %1223 = vmatprep.subr.bf16.mxu0 0
      %1224 = vmatpush1.bf16.msra.mxu0 %v1146
      %1225 = vmatprep.subr.bf16.mxu0 0
      %1226 = vmatpush1.bf16.msra.mxu0 %v1147
      %1227 = vmatprep.subr.bf16.mxu0 0
      %1228 = vmatpush1.bf16.msra.mxu0 %v1148
      %1229 = vmatprep.subr.bf16.mxu0 0
      %1230 = vmatpush1.bf16.msra.mxu0 %v1149
      %1231 = vmatprep.subr.bf16.mxu0 0
      %1232 = vmatpush1.bf16.msra.mxu0 0
      %1233 = vmatprep.subr.bf16.mxu0 0
      %1234 = vmatpush1.bf16.msra.mxu0 0
      %1235 = vmatprep.subr.bf16.mxu0 0
      %1236 = vmatpush1.bf16.msra.mxu0 0
      %1237 = vmatprep.subr.bf16.mxu0 0
      %1238 = vmatpush1.bf16.msra.mxu0 0
      %1239 = vmatprep.subr.bf16.mxu0 0
      %1240 = vmatpush1.bf16.msra.mxu0 0
      %1241 = vmatprep.subr.bf16.mxu0 0
      %1242 = vmatpush1.bf16.msra.mxu0 0
      %1243 = vmatprep.subr.bf16.mxu0 0
      %1244 = vmatpush1.bf16.msra.mxu0 0
      %1245 = vmatprep.subr.bf16.mxu0 0
      %1246 = vmatpush1.bf16.msra.mxu0 0
      %1247 = vmatprep.mubr.bf16.mxu0 0
      %1248 = vmatmul.mubr.bf16.gmra.mrb[0].mxu0 %v1023
      %v1249 = vpop.f32.mrb[0].mxu0
      %v1250 = vadd.f32 %v1209, %v1249
      %v1251 = vpop.f32.mrb[0].mxu0
      %v1252 = vpop.f32.mrb[0].mxu0
      %v1253 = vadd.f32 %v1212, %v1252
      %v1254 = vpop.f32.mrb[0].mxu0
      %1255 = vdwg.mxu0
      %s1256 = scalar_lea.vmem %s5, 2
      %v1257 = vld [vmem:[%s1256] sm:$0x1]
      %s1258 = scalar_lea.vmem %s6, 2
      %v1259 = vld [vmem:[%s1258] sm:$0x1]
      %v1260 = vadd.f32 %v1250, %v1253
      %v1261 = vrot.slane %v1260, 4
      %v1262 = vadd.f32 %v1260, %v1261
      %v1263 = vrot.slane %v1262, 2
      %v1264 = vadd.f32 %v1262, %v1263
      %v1265 = vrot.slane %v1264, 1
      %v1266 = vadd.f32 %v1264, %v1265
      %v1267 = vmul.f32 %v1266, %v578
      %v1268 = vsub.f32 %v1250, %v1267
      %v1269 = vsub.f32 %v1253, %v1267
      %v1270 = vmul.f32 %v1268, %v1268
      %v1271 = vmul.f32 %v1269, %v1269
      %v1272 = vadd.f32 %v1270, %v1271
      %v1273 = vrot.slane %v1272, 4
      %v1274 = vadd.f32 %v1272, %v1273
      %v1275 = vrot.slane %v1274, 2
      %v1276 = vadd.f32 %v1274, %v1275
      %v1277 = vrot.slane %v1276, 1
      %v1278 = vadd.f32 %v1276, %v1277
      %v1279 = vmul.f32 %v1278, %v578
      %v1280 = vadd.f32 %v1279, 1e-05
      %v1281 = vrsqrt.pop %v1280
      %v1282 = vmul.f32 %v1257, %v1281
      %v1284 = vlaneseq
      %v1285 = vshrl.u32 %v1284, 7
      %v1286 = vsub.s32 0, %v1285
      %v1287 = vrot.slane %v1282, %v1286
      %v1289 = vmul.f32 %v1268, %v1287
      %v1290 = vmul.f32 %v1269, %v1287
      %v1292 = vlaneseq
      %v1293 = vshrl.u32 %v1292, 7
      %v1294 = vsub.s32 0, %v1293
      %v1295 = vrot.slane %v1259, %v1294
      %v1297 = vadd.f32 %v1289, %v1295
      %v1298 = vadd.f32 %v1290, %v1295
      %v1299 = vmax.f32 %v1297, 0.0
      %v1300 = vmax.f32 %v1298, 0.0
      %s1301 = scalar_lea.vmem [#allocation9], 576
      %v1302 = vld [vmem:[%s1301] sm:$0xf]
      %v1303 = vld [vmem:[%s1301 + $0x4] sm:$0xf]
      %v1304 = vld [vmem:[%s1301 + $0x8] sm:$0xf]
      %v1305 = vld [vmem:[%s1301 + $0xc] sm:$0xf]
      %v1306 = vld [vmem:[%s1301 + $0x10] sm:$0xf]
      %v1307 = vld [vmem:[%s1301 + $0x14] sm:$0xf]
      %v1308 = vld [vmem:[%s1301 + $0x18] sm:$0xf]
      %v1309 = vld [vmem:[%s1301 + $0x1c] sm:$0xf]
      %v1310 = vld [vmem:[%s1301 + $0x20] sm:$0xf]
      %v1311 = vld [vmem:[%s1301 + $0x24] sm:$0xf]
      %v1312 = vld [vmem:[%s1301 + $0x28] sm:$0xf]
      %v1313 = vld [vmem:[%s1301 + $0x2c] sm:$0xf]
      %v1314 = vld [vmem:[%s1301 + $0x30] sm:$0xf]
      %v1315 = vld [vmem:[%s1301 + $0x34] sm:$0xf]
      %v1316 = vld [vmem:[%s1301 + $0x38] sm:$0xf]
      %v1317 = vld [vmem:[%s1301 + $0x3c] sm:$0xf]
      %v1318 = vld [vmem:[%s1301 + $0x40] sm:$0xf]
      %v1319 = vld [vmem:[%s1301 + $0x44] sm:$0xf]
      %v1320 = vld [vmem:[%s1301 + $0x48] sm:$0xf]
      %v1321 = vld [vmem:[%s1301 + $0x4c] sm:$0xf]
      %v1322 = vld [vmem:[%s1301 + $0x50] sm:$0xf]
      %v1323 = vld [vmem:[%s1301 + $0x54] sm:$0xf]
      %v1324 = vld [vmem:[%s1301 + $0x58] sm:$0xf]
      %v1325 = vld [vmem:[%s1301 + $0x5c] sm:$0xf]
      %v1326 = vld [vmem:[%s1301 + $0x60] sm:$0xf]
      %v1327 = vld [vmem:[%s1301 + $0x64] sm:$0xf]
      %v1328 = vld [vmem:[%s1301 + $0x68] sm:$0xf]
      %v1329 = vld [vmem:[%s1301 + $0x6c] sm:$0xf]
      %v1330 = vld [vmem:[%s1301 + $0x70] sm:$0xf]
      %v1331 = vld [vmem:[%s1301 + $0x74] sm:$0xf]
      %v1332 = vld [vmem:[%s1301 + $0x78] sm:$0xf]
      %v1333 = vld [vmem:[%s1301 + $0x7c] sm:$0xf]
      %v1334 = vld [vmem:[%s1301 + $0x80] sm:$0xf]
      %v1335 = vld [vmem:[%s1301 + $0x84] sm:$0xf]
      %v1336 = vld [vmem:[%s1301 + $0x88] sm:$0xf]
      %v1337 = vld [vmem:[%s1301 + $0x8c] sm:$0xf]
      %v1338 = vld [vmem:[%s1301 + $0x90] sm:$0xf]
      %v1339 = vld [vmem:[%s1301 + $0x94] sm:$0xf]
      %v1340 = vld [vmem:[%s1301 + $0x98] sm:$0xf]
      %v1341 = vld [vmem:[%s1301 + $0x9c] sm:$0xf]
      %v1342 = vld [vmem:[%s1301 + $0xa0] sm:$0xf]
      %v1343 = vld [vmem:[%s1301 + $0xa4] sm:$0xf]
      %v1344 = vld [vmem:[%s1301 + $0xa8] sm:$0xf]
      %v1345 = vld [vmem:[%s1301 + $0xac] sm:$0xf]
      %v1346 = vld [vmem:[%s1301 + $0xb0] sm:$0xf]
      %v1347 = vld [vmem:[%s1301 + $0xb4] sm:$0xf]
      %v1348 = vld [vmem:[%s1301 + $0xb8] sm:$0xf]
      %v1349 = vld [vmem:[%s1301 + $0xbc] sm:$0xf]
      %s1350 = scalar_lea.vmem %s4, 3
      %v1351 = vld [vmem:[%s1350] sm:$0x1]
      %v1352 = vrot.slane %v1299, 7
      %v1353 = vrot.slane %v1300, 7
      %v1354 = vsel %vm322, %v1352, %v1353
      %v1355 = vsel %vm322, %v1353, %v1352
      %v1356 = vmul.f32 %v1355, %v259
      %v1357 = vmul.f32 %v1354, %v260
      %v1358 = vrot.slane %v1299, 1
      %v1359 = vrot.slane %v1300, 1
      %v1360 = vsel %vm329, %v1358, %v1359
      %v1361 = vsel %vm329, %v1359, %v1358
      %v1362 = vmul.f32 %v1360, %v269
      %v1363 = vmul.f32 %v1361, %v270
      %v1364 = vpack.c.bf16 %v1357, %v1356
      %v1365 = vpack.c.bf16 %v1300, %v1299
      %v1366 = vpack.c.bf16 %v1363, %v1362
      %v1368 = vlaneseq
      %v1369 = vshrl.u32 %v1368, 7
      %v1370 = vsub.s32 0, %v1369
      %v1371 = vrot.slane %v1351, %v1370
      %v1421 = vunpack.c.l.b16 %v1302
      %v1422 = vunpack.c.l.b16 %v1303
      %v1423 = vunpack.c.l.b16 %v1304
      %v1424 = vunpack.c.l.b16 %v1305
      %v1425 = vunpack.c.l.b16 %v1306
      %v1426 = vunpack.c.l.b16 %v1307
      %v1427 = vunpack.c.l.b16 %v1308
      %v1428 = vunpack.c.l.b16 %v1309
      %v1429 = vunpack.c.l.b16 %v1310
      %v1430 = vunpack.c.l.b16 %v1311
      %v1431 = vunpack.c.l.b16 %v1312
      %v1432 = vunpack.c.l.b16 %v1313
      %v1433 = vunpack.c.l.b16 %v1314
      %v1434 = vunpack.c.l.b16 %v1315
      %v1435 = vunpack.c.l.b16 %v1316
      %v1436 = vunpack.c.l.b16 %v1317
      %v1437 = vunpack.c.l.b16 %v1318
      %v1438 = vunpack.c.l.b16 %v1319
      %v1439 = vunpack.c.l.b16 %v1320
      %v1440 = vunpack.c.l.b16 %v1321
      %v1441 = vunpack.c.l.b16 %v1322
      %v1442 = vunpack.c.l.b16 %v1323
      %v1443 = vunpack.c.l.b16 %v1324
      %v1444 = vunpack.c.l.b16 %v1325
      %v1445 = vunpack.c.l.b16 %v1326
      %v1446 = vunpack.c.l.b16 %v1327
      %v1447 = vunpack.c.l.b16 %v1328
      %v1448 = vunpack.c.l.b16 %v1329
      %v1449 = vunpack.c.l.b16 %v1330
      %v1450 = vunpack.c.l.b16 %v1331
      %v1451 = vunpack.c.l.b16 %v1332
      %v1452 = vunpack.c.l.b16 %v1333
      %v1453 = vunpack.c.l.b16 %v1334
      %v1454 = vunpack.c.l.b16 %v1335
      %v1455 = vunpack.c.l.b16 %v1336
      %v1456 = vunpack.c.l.b16 %v1337
      %v1457 = vunpack.c.l.b16 %v1338
      %v1458 = vunpack.c.l.b16 %v1339
      %v1459 = vunpack.c.l.b16 %v1340
      %v1460 = vunpack.c.l.b16 %v1341
      %v1461 = vunpack.c.l.b16 %v1342
      %v1462 = vunpack.c.l.b16 %v1343
      %v1463 = vunpack.c.l.b16 %v1344
      %v1464 = vunpack.c.l.b16 %v1345
      %v1465 = vunpack.c.l.b16 %v1346
      %v1466 = vunpack.c.l.b16 %v1347
      %v1467 = vunpack.c.l.b16 %v1348
      %v1468 = vunpack.c.l.b16 %v1349
      %v1469 = vpack.c.b16 %v1422, %v1421
      %v1470 = vpack.c.b16 %v1424, %v1423
      %v1471 = vpack.c.b16 %v1426, %v1425
      %v1472 = vpack.c.b16 %v1428, %v1427
      %v1473 = vpack.c.b16 %v1430, %v1429
      %v1474 = vpack.c.b16 %v1432, %v1431
      %v1475 = vpack.c.b16 %v1434, %v1433
      %v1476 = vpack.c.b16 %v1436, %v1435
      %v1477 = vpack.c.b16 %v1438, %v1437
      %v1478 = vpack.c.b16 %v1440, %v1439
      %v1479 = vpack.c.b16 %v1442, %v1441
      %v1480 = vpack.c.b16 %v1444, %v1443
      %v1481 = vpack.c.b16 %v1446, %v1445
      %v1482 = vpack.c.b16 %v1448, %v1447
      %v1483 = vpack.c.b16 %v1450, %v1449
      %v1484 = vpack.c.b16 %v1452, %v1451
      %v1485 = vpack.c.b16 %v1454, %v1453
      %v1486 = vpack.c.b16 %v1456, %v1455
      %v1487 = vpack.c.b16 %v1458, %v1457
      %v1488 = vpack.c.b16 %v1460, %v1459
      %v1489 = vpack.c.b16 %v1462, %v1461
      %v1490 = vpack.c.b16 %v1464, %v1463
      %v1491 = vpack.c.b16 %v1466, %v1465
      %v1492 = vpack.c.b16 %v1468, %v1467
      %1517 = vmatprep.subr.bf16.mxu0 0
      %1518 = vmatpush1.bf16.msra.mxu0 %v1469
      %1519 = vmatprep.subr.bf16.mxu0 0
      %1520 = vmatpush1.bf16.msra.mxu0 %v1470
      %1521 = vmatprep.subr.bf16.mxu0 0
      %1522 = vmatpush1.bf16.msra.mxu0 %v1471
      %1523 = vmatprep.subr.bf16.mxu0 0
      %1524 = vmatpush1.bf16.msra.mxu0 %v1472
      %1525 = vmatprep.subr.bf16.mxu0 0
      %1526 = vmatpush1.bf16.msra.mxu0 %v1473
      %1527 = vmatprep.subr.bf16.mxu0 0
      %1528 = vmatpush1.bf16.msra.mxu0 %v1474
      %1529 = vmatprep.subr.bf16.mxu0 0
      %1530 = vmatpush1.bf16.msra.mxu0 %v1475
      %1531 = vmatprep.subr.bf16.mxu0 0
      %1532 = vmatpush1.bf16.msra.mxu0 %v1476
      %1533 = vmatprep.subr.bf16.mxu0 0
      %1534 = vmatpush1.bf16.msra.mxu0 %v1477
      %1535 = vmatprep.subr.bf16.mxu0 0
      %1536 = vmatpush1.bf16.msra.mxu0 %v1478
      %1537 = vmatprep.subr.bf16.mxu0 0
      %1538 = vmatpush1.bf16.msra.mxu0 %v1479
      %1539 = vmatprep.subr.bf16.mxu0 0
      %1540 = vmatpush1.bf16.msra.mxu0 %v1480
      %1541 = vmatprep.subr.bf16.mxu0 0
      %1542 = vmatpush1.bf16.msra.mxu0 %v1481
      %1543 = vmatprep.subr.bf16.mxu0 0
      %1544 = vmatpush1.bf16.msra.mxu0 %v1482
      %1545 = vmatprep.subr.bf16.mxu0 0
      %1546 = vmatpush1.bf16.msra.mxu0 %v1483
      %1547 = vmatprep.subr.bf16.mxu0 0
      %1548 = vmatpush1.bf16.msra.mxu0 %v1484
      %1549 = vmatprep.mubr.bf16.mxu0 %v1365
      %1550 = vmatmul.mubr.bf16.gmra.mrb[0].mxu0 %v1364
      %v1551 = vpop.f32.mrb[0].mxu0
      %v1552 = vadd.f32 %v1371, %v1551
      %v1553 = vpop.f32.mrb[0].mxu0
      %v1554 = vpop.f32.mrb[0].mxu0
      %v1555 = vadd.f32 %v1371, %v1554
      %v1556 = vpop.f32.mrb[0].mxu0
      %1557 = vdwg.mxu0
      %1558 = vmatprep.subr.bf16.mxu0 0
      %1559 = vmatpush1.bf16.msra.mxu0 %v1485
      %1560 = vmatprep.subr.bf16.mxu0 0
      %1561 = vmatpush1.bf16.msra.mxu0 %v1486
      %1562 = vmatprep.subr.bf16.mxu0 0
      %1563 = vmatpush1.bf16.msra.mxu0 %v1487
      %1564 = vmatprep.subr.bf16.mxu0 0
      %1565 = vmatpush1.bf16.msra.mxu0 %v1488
      %1566 = vmatprep.subr.bf16.mxu0 0
      %1567 = vmatpush1.bf16.msra.mxu0 %v1489
      %1568 = vmatprep.subr.bf16.mxu0 0
      %1569 = vmatpush1.bf16.msra.mxu0 %v1490
      %1570 = vmatprep.subr.bf16.mxu0 0
      %1571 = vmatpush1.bf16.msra.mxu0 %v1491
      %1572 = vmatprep.subr.bf16.mxu0 0
      %1573 = vmatpush1.bf16.msra.mxu0 %v1492
      %1574 = vmatprep.subr.bf16.mxu0 0
      %1575 = vmatpush1.bf16.msra.mxu0 0
      %1576 = vmatprep.subr.bf16.mxu0 0
      %1577 = vmatpush1.bf16.msra.mxu0 0
      %1578 = vmatprep.subr.bf16.mxu0 0
      %1579 = vmatpush1.bf16.msra.mxu0 0
      %1580 = vmatprep.subr.bf16.mxu0 0
      %1581 = vmatpush1.bf16.msra.mxu0 0
      %1582 = vmatprep.subr.bf16.mxu0 0
      %1583 = vmatpush1.bf16.msra.mxu0 0
      %1584 = vmatprep.subr.bf16.mxu0 0
      %1585 = vmatpush1.bf16.msra.mxu0 0
      %1586 = vmatprep.subr.bf16.mxu0 0
      %1587 = vmatpush1.bf16.msra.mxu0 0
      %1588 = vmatprep.subr.bf16.mxu0 0
      %1589 = vmatpush1.bf16.msra.mxu0 0
      %1590 = vmatprep.mubr.bf16.mxu0 0
      %1591 = vmatmul.mubr.bf16.gmra.mrb[0].mxu0 %v1366
      %v1592 = vpop.f32.mrb[0].mxu0
      %v1593 = vadd.f32 %v1552, %v1592
      %v1594 = vpop.f32.mrb[0].mxu0
      %v1595 = vpop.f32.mrb[0].mxu0
      %v1596 = vadd.f32 %v1555, %v1595
      %v1597 = vpop.f32.mrb[0].mxu0
      %1598 = vdwg.mxu0
      %s1599 = scalar_lea.vmem %s5, 3
      %v1600 = vld [vmem:[%s1599] sm:$0x1]
      %s1601 = scalar_lea.vmem %s6, 3
      %v1602 = vld [vmem:[%s1601] sm:$0x1]
      %v1603 = vadd.f32 %v1593, %v1596
      %v1604 = vrot.slane %v1603, 4
      %v1605 = vadd.f32 %v1603, %v1604
      %v1606 = vrot.slane %v1605, 2
      %v1607 = vadd.f32 %v1605, %v1606
      %v1608 = vrot.slane %v1607, 1
      %v1609 = vadd.f32 %v1607, %v1608
      %v1610 = vmul.f32 %v1609, %v578
      %v1611 = vsub.f32 %v1593, %v1610
      %v1612 = vsub.f32 %v1596, %v1610
      %v1613 = vmul.f32 %v1611, %v1611
      %v1614 = vmul.f32 %v1612, %v1612
      %v1615 = vadd.f32 %v1613, %v1614
      %v1616 = vrot.slane %v1615, 4
      %v1617 = vadd.f32 %v1615, %v1616
      %v1618 = vrot.slane %v1617, 2
      %v1619 = vadd.f32 %v1617, %v1618
      %v1620 = vrot.slane %v1619, 1
      %v1621 = vadd.f32 %v1619, %v1620
      %v1622 = vmul.f32 %v1621, %v578
      %v1623 = vadd.f32 %v1622, 1e-05
      %v1624 = vrsqrt.pop %v1623
      %v1625 = vmul.f32 %v1600, %v1624
      %v1627 = vlaneseq
      %v1628 = vshrl.u32 %v1627, 7
      %v1629 = vsub.s32 0, %v1628
      %v1630 = vrot.slane %v1625, %v1629
      %v1632 = vmul.f32 %v1611, %v1630
      %v1633 = vmul.f32 %v1612, %v1630
      %v1635 = vlaneseq
      %v1636 = vshrl.u32 %v1635, 7
      %v1637 = vsub.s32 0, %v1636
      %v1638 = vrot.slane %v1602, %v1637
      %v1640 = vadd.f32 %v1632, %v1638
      %v1641 = vadd.f32 %v1633, %v1638
      %v1642 = vadd.f32 %v1640, %v956
      %v1643 = vadd.f32 %v1641, %v957
      %v1644 = vmax.f32 %v1642, 0.0
      %v1645 = vmax.f32 %v1643, 0.0
      %s1646 = scalar_lea.vmem [#allocation9], 768
      %v1647 = vld [vmem:[%s1646] sm:$0xf]
      %v1648 = vld [vmem:[%s1646 + $0x4] sm:$0xf]
      %v1649 = vld [vmem:[%s1646 + $0x8] sm:$0xf]
      %v1650 = vld [vmem:[%s1646 + $0xc] sm:$0xf]
      %v1651 = vld [vmem:[%s1646 + $0x10] sm:$0xf]
      %v1652 = vld [vmem:[%s1646 + $0x14] sm:$0xf]
      %v1653 = vld [vmem:[%s1646 + $0x18] sm:$0xf]
      %v1654 = vld [vmem:[%s1646 + $0x1c] sm:$0xf]
      %v1655 = vld [vmem:[%s1646 + $0x20] sm:$0xf]
      %v1656 = vld [vmem:[%s1646 + $0x24] sm:$0xf]
      %v1657 = vld [vmem:[%s1646 + $0x28] sm:$0xf]
      %v1658 = vld [vmem:[%s1646 + $0x2c] sm:$0xf]
      %v1659 = vld [vmem:[%s1646 + $0x30] sm:$0xf]
      %v1660 = vld [vmem:[%s1646 + $0x34] sm:$0xf]
      %v1661 = vld [vmem:[%s1646 + $0x38] sm:$0xf]
      %v1662 = vld [vmem:[%s1646 + $0x3c] sm:$0xf]
      %v1663 = vld [vmem:[%s1646 + $0x40] sm:$0xf]
      %v1664 = vld [vmem:[%s1646 + $0x44] sm:$0xf]
      %v1665 = vld [vmem:[%s1646 + $0x48] sm:$0xf]
      %v1666 = vld [vmem:[%s1646 + $0x4c] sm:$0xf]
      %v1667 = vld [vmem:[%s1646 + $0x50] sm:$0xf]
      %v1668 = vld [vmem:[%s1646 + $0x54] sm:$0xf]
      %v1669 = vld [vmem:[%s1646 + $0x58] sm:$0xf]
      %v1670 = vld [vmem:[%s1646 + $0x5c] sm:$0xf]
      %v1671 = vld [vmem:[%s1646 + $0x60] sm:$0xf]
      %v1672 = vld [vmem:[%s1646 + $0x64] sm:$0xf]
      %v1673 = vld [vmem:[%s1646 + $0x68] sm:$0xf]
      %v1674 = vld [vmem:[%s1646 + $0x6c] sm:$0xf]
      %v1675 = vld [vmem:[%s1646 + $0x70] sm:$0xf]
      %v1676 = vld [vmem:[%s1646 + $0x74] sm:$0xf]
      %v1677 = vld [vmem:[%s1646 + $0x78] sm:$0xf]
      %v1678 = vld [vmem:[%s1646 + $0x7c] sm:$0xf]
      %v1679 = vld [vmem:[%s1646 + $0x80] sm:$0xf]
      %v1680 = vld [vmem:[%s1646 + $0x84] sm:$0xf]
      %v1681 = vld [vmem:[%s1646 + $0x88] sm:$0xf]
      %v1682 = vld [vmem:[%s1646 + $0x8c] sm:$0xf]
      %v1683 = vld [vmem:[%s1646 + $0x90] sm:$0xf]
      %v1684 = vld [vmem:[%s1646 + $0x94] sm:$0xf]
      %v1685 = vld [vmem:[%s1646 + $0x98] sm:$0xf]
      %v1686 = vld [vmem:[%s1646 + $0x9c] sm:$0xf]
      %v1687 = vld [vmem:[%s1646 + $0xa0] sm:$0xf]
      %v1688 = vld [vmem:[%s1646 + $0xa4] sm:$0xf]
      %v1689 = vld [vmem:[%s1646 + $0xa8] sm:$0xf]
      %v1690 = vld [vmem:[%s1646 + $0xac] sm:$0xf]
      %v1691 = vld [vmem:[%s1646 + $0xb0] sm:$0xf]
      %v1692 = vld [vmem:[%s1646 + $0xb4] sm:$0xf]
      %v1693 = vld [vmem:[%s1646 + $0xb8] sm:$0xf]
      %v1694 = vld [vmem:[%s1646 + $0xbc] sm:$0xf]
      %s1695 = scalar_lea.vmem %s4, 4
      %v1696 = vld [vmem:[%s1695] sm:$0x1]
      %v1697 = vrot.slane %v1644, 7
      %v1698 = vrot.slane %v1645, 7
      %v1699 = vsel %vm322, %v1697, %v1698
      %v1700 = vsel %vm322, %v1698, %v1697
      %v1701 = vmul.f32 %v1700, %v259
      %v1702 = vmul.f32 %v1699, %v260
      %v1703 = vrot.slane %v1644, 1
      %v1704 = vrot.slane %v1645, 1
      %v1705 = vsel %vm329, %v1703, %v1704
      %v1706 = vsel %vm329, %v1704, %v1703
      %v1707 = vmul.f32 %v1705, %v269
      %v1708 = vmul.f32 %v1706, %v270
      %v1709 = vpack.c.bf16 %v1702, %v1701
      %v1710 = vpack.c.bf16 %v1645, %v1644
      %v1711 = vpack.c.bf16 %v1708, %v1707
      %v1713 = vlaneseq
      %v1714 = vshrl.u32 %v1713, 7
      %v1715 = vsub.s32 0, %v1714
      %v1716 = vrot.slane %v1696, %v1715
      %v1766 = vunpack.c.l.b16 %v1647
      %v1767 = vunpack.c.l.b16 %v1648
      %v1768 = vunpack.c.l.b16 %v1649
      %v1769 = vunpack.c.l.b16 %v1650
      %v1770 = vunpack.c.l.b16 %v1651
      %v1771 = vunpack.c.l.b16 %v1652
      %v1772 = vunpack.c.l.b16 %v1653
      %v1773 = vunpack.c.l.b16 %v1654
      %v1774 = vunpack.c.l.b16 %v1655
      %v1775 = vunpack.c.l.b16 %v1656
      %v1776 = vunpack.c.l.b16 %v1657
      %v1777 = vunpack.c.l.b16 %v1658
      %v1778 = vunpack.c.l.b16 %v1659
      %v1779 = vunpack.c.l.b16 %v1660
      %v1780 = vunpack.c.l.b16 %v1661
      %v1781 = vunpack.c.l.b16 %v1662
      %v1782 = vunpack.c.l.b16 %v1663
      %v1783 = vunpack.c.l.b16 %v1664
      %v1784 = vunpack.c.l.b16 %v1665
      %v1785 = vunpack.c.l.b16 %v1666
      %v1786 = vunpack.c.l.b16 %v1667
      %v1787 = vunpack.c.l.b16 %v1668
      %v1788 = vunpack.c.l.b16 %v1669
      %v1789 = vunpack.c.l.b16 %v1670
      %v1790 = vunpack.c.l.b16 %v1671
      %v1791 = vunpack.c.l.b16 %v1672
      %v1792 = vunpack.c.l.b16 %v1673
      %v1793 = vunpack.c.l.b16 %v1674
      %v1794 = vunpack.c.l.b16 %v1675
      %v1795 = vunpack.c.l.b16 %v1676
      %v1796 = vunpack.c.l.b16 %v1677
      %v1797 = vunpack.c.l.b16 %v1678
      %v1798 = vunpack.c.l.b16 %v1679
      %v1799 = vunpack.c.l.b16 %v1680
      %v1800 = vunpack.c.l.b16 %v1681
      %v1801 = vunpack.c.l.b16 %v1682
      %v1802 = vunpack.c.l.b16 %v1683
      %v1803 = vunpack.c.l.b16 %v1684
      %v1804 = vunpack.c.l.b16 %v1685
      %v1805 = vunpack.c.l.b16 %v1686
      %v1806 = vunpack.c.l.b16 %v1687
      %v1807 = vunpack.c.l.b16 %v1688
      %v1808 = vunpack.c.l.b16 %v1689
      %v1809 = vunpack.c.l.b16 %v1690
      %v1810 = vunpack.c.l.b16 %v1691
      %v1811 = vunpack.c.l.b16 %v1692
      %v1812 = vunpack.c.l.b16 %v1693
      %v1813 = vunpack.c.l.b16 %v1694
      %v1814 = vpack.c.b16 %v1767, %v1766
      %v1815 = vpack.c.b16 %v1769, %v1768
      %v1816 = vpack.c.b16 %v1771, %v1770
      %v1817 = vpack.c.b16 %v1773, %v1772
      %v1818 = vpack.c.b16 %v1775, %v1774
      %v1819 = vpack.c.b16 %v1777, %v1776
      %v1820 = vpack.c.b16 %v1779, %v1778
      %v1821 = vpack.c.b16 %v1781, %v1780
      %v1822 = vpack.c.b16 %v1783, %v1782
      %v1823 = vpack.c.b16 %v1785, %v1784
      %v1824 = vpack.c.b16 %v1787, %v1786
      %v1825 = vpack.c.b16 %v1789, %v1788
      %v1826 = vpack.c.b16 %v1791, %v1790
      %v1827 = vpack.c.b16 %v1793, %v1792
      %v1828 = vpack.c.b16 %v1795, %v1794
      %v1829 = vpack.c.b16 %v1797, %v1796
      %v1830 = vpack.c.b16 %v1799, %v1798
      %v1831 = vpack.c.b16 %v1801, %v1800
      %v1832 = vpack.c.b16 %v1803, %v1802
      %v1833 = vpack.c.b16 %v1805, %v1804
      %v1834 = vpack.c.b16 %v1807, %v1806
      %v1835 = vpack.c.b16 %v1809, %v1808
      %v1836 = vpack.c.b16 %v1811, %v1810
      %v1837 = vpack.c.b16 %v1813, %v1812
      %1862 = vmatprep.subr.bf16.mxu0 0
      %1863 = vmatpush1.bf16.msra.mxu0 %v1814
      %1864 = vmatprep.subr.bf16.mxu0 0
      %1865 = vmatpush1.bf16.msra.mxu0 %v1815
      %1866 = vmatprep.subr.bf16.mxu0 0
      %1867 = vmatpush1.bf16.msra.mxu0 %v1816
      %1868 = vmatprep.subr.bf16.mxu0 0
      %1869 = vmatpush1.bf16.msra.mxu0 %v1817
      %1870 = vmatprep.subr.bf16.mxu0 0
      %1871 = vmatpush1.bf16.msra.mxu0 %v1818
      %1872 = vmatprep.subr.bf16.mxu0 0
      %1873 = vmatpush1.bf16.msra.mxu0 %v1819
      %1874 = vmatprep.subr.bf16.mxu0 0
      %1875 = vmatpush1.bf16.msra.mxu0 %v1820
      %1876 = vmatprep.subr.bf16.mxu0 0
      %1877 = vmatpush1.bf16.msra.mxu0 %v1821
      %1878 = vmatprep.subr.bf16.mxu0 0
      %1879 = vmatpush1.bf16.msra.mxu0 %v1822
      %1880 = vmatprep.subr.bf16.mxu0 0
      %1881 = vmatpush1.bf16.msra.mxu0 %v1823
      %1882 = vmatprep.subr.bf16.mxu0 0
      %1883 = vmatpush1.bf16.msra.mxu0 %v1824
      %1884 = vmatprep.subr.bf16.mxu0 0
      %1885 = vmatpush1.bf16.msra.mxu0 %v1825
      %1886 = vmatprep.subr.bf16.mxu0 0
      %1887 = vmatpush1.bf16.msra.mxu0 %v1826
      %1888 = vmatprep.subr.bf16.mxu0 0
      %1889 = vmatpush1.bf16.msra.mxu0 %v1827
      %1890 = vmatprep.subr.bf16.mxu0 0
      %1891 = vmatpush1.bf16.msra.mxu0 %v1828
      %1892 = vmatprep.subr.bf16.mxu0 0
      %1893 = vmatpush1.bf16.msra.mxu0 %v1829
      %1894 = vmatprep.mubr.bf16.mxu0 %v1710
      %1895 = vmatmul.mubr.bf16.gmra.mrb[0].mxu0 %v1709
      %v1896 = vpop.f32.mrb[0].mxu0
      %v1897 = vadd.f32 %v1716, %v1896
      %v1898 = vpop.f32.mrb[0].mxu0
      %v1899 = vpop.f32.mrb[0].mxu0
      %v1900 = vadd.f32 %v1716, %v1899
      %v1901 = vpop.f32.mrb[0].mxu0
      %1902 = vdwg.mxu0
      %1903 = vmatprep.subr.bf16.mxu0 0
      %1904 = vmatpush1.bf16.msra.mxu0 %v1830
      %1905 = vmatprep.subr.bf16.mxu0 0
      %1906 = vmatpush1.bf16.msra.mxu0 %v1831
      %1907 = vmatprep.subr.bf16.mxu0 0
      %1908 = vmatpush1.bf16.msra.mxu0 %v1832
      %1909 = vmatprep.subr.bf16.mxu0 0
      %1910 = vmatpush1.bf16.msra.mxu0 %v1833
      %1911 = vmatprep.subr.bf16.mxu0 0
      %1912 = vmatpush1.bf16.msra.mxu0 %v1834
      %1913 = vmatprep.subr.bf16.mxu0 0
      %1914 = vmatpush1.bf16.msra.mxu0 %v1835
      %1915 = vmatprep.subr.bf16.mxu0 0
      %1916 = vmatpush1.bf16.msra.mxu0 %v1836
      %1917 = vmatprep.subr.bf16.mxu0 0
      %1918 = vmatpush1.bf16.msra.mxu0 %v1837
      %1919 = vmatprep.subr.bf16.mxu0 0
      %1920 = vmatpush1.bf16.msra.mxu0 0
      %1921 = vmatprep.subr.bf16.mxu0 0
      %1922 = vmatpush1.bf16.msra.mxu0 0
      %1923 = vmatprep.subr.bf16.mxu0 0
      %1924 = vmatpush1.bf16.msra.mxu0 0
      %1925 = vmatprep.subr.bf16.mxu0 0
      %1926 = vmatpush1.bf16.msra.mxu0 0
      %1927 = vmatprep.subr.bf16.mxu0 0
      %1928 = vmatpush1.bf16.msra.mxu0 0
      %1929 = vmatprep.subr.bf16.mxu0 0
      %1930 = vmatpush1.bf16.msra.mxu0 0
      %1931 = vmatprep.subr.bf16.mxu0 0
      %1932 = vmatpush1.bf16.msra.mxu0 0
      %1933 = vmatprep.subr.bf16.mxu0 0
      %1934 = vmatpush1.bf16.msra.mxu0 0
      %1935 = vmatprep.mubr.bf16.mxu0 0
      %1936 = vmatmul.mubr.bf16.gmra.mrb[0].mxu0 %v1711
      %v1937 = vpop.f32.mrb[0].mxu0
      %v1938 = vadd.f32 %v1897, %v1937
      %v1939 = vpop.f32.mrb[0].mxu0
      %v1940 = vpop.f32.mrb[0].mxu0
      %v1941 = vadd.f32 %v1900, %v1940
      %v1942 = vpop.f32.mrb[0].mxu0
      %1943 = vdwg.mxu0
      %s1944 = scalar_lea.vmem %s5, 4
      %v1945 = vld [vmem:[%s1944] sm:$0x1]
      %s1946 = scalar_lea.vmem %s6, 4
      %v1947 = vld [vmem:[%s1946] sm:$0x1]
      %v1948 = vadd.f32 %v1938, %v1941
      %v1949 = vrot.slane %v1948, 4
      %v1950 = vadd.f32 %v1948, %v1949
      %v1951 = vrot.slane %v1950, 2
      %v1952 = vadd.f32 %v1950, %v1951
      %v1953 = vrot.slane %v1952, 1
      %v1954 = vadd.f32 %v1952, %v1953
      %v1955 = vmul.f32 %v1954, %v578
      %v1956 = vsub.f32 %v1938, %v1955
      %v1957 = vsub.f32 %v1941, %v1955
      %v1958 = vmul.f32 %v1956, %v1956
      %v1959 = vmul.f32 %v1957, %v1957
      %v1960 = vadd.f32 %v1958, %v1959
      %v1961 = vrot.slane %v1960, 4
      %v1962 = vadd.f32 %v1960, %v1961
      %v1963 = vrot.slane %v1962, 2
      %v1964 = vadd.f32 %v1962, %v1963
      %v1965 = vrot.slane %v1964, 1
      %v1966 = vadd.f32 %v1964, %v1965
      %v1967 = vmul.f32 %v1966, %v578
      %v1968 = vadd.f32 %v1967, 1e-05
      %v1969 = vrsqrt.pop %v1968
      %v1970 = vmul.f32 %v1945, %v1969
      %v1972 = vlaneseq
      %v1973 = vshrl.u32 %v1972, 7
      %v1974 = vsub.s32 0, %v1973
      %v1975 = vrot.slane %v1970, %v1974
      %v1977 = vmul.f32 %v1956, %v1975
      %v1978 = vmul.f32 %v1957, %v1975
      %v1980 = vlaneseq
      %v1981 = vshrl.u32 %v1980, 7
      %v1982 = vsub.s32 0, %v1981
      %v1983 = vrot.slane %v1947, %v1982
      %v1985 = vadd.f32 %v1977, %v1983
      %v1986 = vadd.f32 %v1978, %v1983
      %v1987 = vmax.f32 %v1985, 0.0
      %v1988 = vmax.f32 %v1986, 0.0
      %s1989 = scalar_lea.vmem [#allocation9], 960
      %v1990 = vld [vmem:[%s1989] sm:$0xf]
      %v1991 = vld [vmem:[%s1989 + $0x4] sm:$0xf]
      %v1992 = vld [vmem:[%s1989 + $0x8] sm:$0xf]
      %v1993 = vld [vmem:[%s1989 + $0xc] sm:$0xf]
      %v1994 = vld [vmem:[%s1989 + $0x10] sm:$0xf]
      %v1995 = vld [vmem:[%s1989 + $0x14] sm:$0xf]
      %v1996 = vld [vmem:[%s1989 + $0x18] sm:$0xf]
      %v1997 = vld [vmem:[%s1989 + $0x1c] sm:$0xf]
      %v1998 = vld [vmem:[%s1989 + $0x20] sm:$0xf]
      %v1999 = vld [vmem:[%s1989 + $0x24] sm:$0xf]
      %v2000 = vld [vmem:[%s1989 + $0x28] sm:$0xf]
      %v2001 = vld [vmem:[%s1989 + $0x2c] sm:$0xf]
      %v2002 = vld [vmem:[%s1989 + $0x30] sm:$0xf]
      %v2003 = vld [vmem:[%s1989 + $0x34] sm:$0xf]
      %v2004 = vld [vmem:[%s1989 + $0x38] sm:$0xf]
      %v2005 = vld [vmem:[%s1989 + $0x3c] sm:$0xf]
      %v2006 = vld [vmem:[%s1989 + $0x40] sm:$0xf]
      %v2007 = vld [vmem:[%s1989 + $0x44] sm:$0xf]
      %v2008 = vld [vmem:[%s1989 + $0x48] sm:$0xf]
      %v2009 = vld [vmem:[%s1989 + $0x4c] sm:$0xf]
      %v2010 = vld [vmem:[%s1989 + $0x50] sm:$0xf]
      %v2011 = vld [vmem:[%s1989 + $0x54] sm:$0xf]
      %v2012 = vld [vmem:[%s1989 + $0x58] sm:$0xf]
      %v2013 = vld [vmem:[%s1989 + $0x5c] sm:$0xf]
      %v2014 = vld [vmem:[%s1989 + $0x60] sm:$0xf]
      %v2015 = vld [vmem:[%s1989 + $0x64] sm:$0xf]
      %v2016 = vld [vmem:[%s1989 + $0x68] sm:$0xf]
      %v2017 = vld [vmem:[%s1989 + $0x6c] sm:$0xf]
      %v2018 = vld [vmem:[%s1989 + $0x70] sm:$0xf]
      %v2019 = vld [vmem:[%s1989 + $0x74] sm:$0xf]
      %v2020 = vld [vmem:[%s1989 + $0x78] sm:$0xf]
      %v2021 = vld [vmem:[%s1989 + $0x7c] sm:$0xf]
      %v2022 = vld [vmem:[%s1989 + $0x80] sm:$0xf]
      %v2023 = vld [vmem:[%s1989 + $0x84] sm:$0xf]
      %v2024 = vld [vmem:[%s1989 + $0x88] sm:$0xf]
      %v2025 = vld [vmem:[%s1989 + $0x8c] sm:$0xf]
      %v2026 = vld [vmem:[%s1989 + $0x90] sm:$0xf]
      %v2027 = vld [vmem:[%s1989 + $0x94] sm:$0xf]
      %v2028 = vld [vmem:[%s1989 + $0x98] sm:$0xf]
      %v2029 = vld [vmem:[%s1989 + $0x9c] sm:$0xf]
      %v2030 = vld [vmem:[%s1989 + $0xa0] sm:$0xf]
      %v2031 = vld [vmem:[%s1989 + $0xa4] sm:$0xf]
      %v2032 = vld [vmem:[%s1989 + $0xa8] sm:$0xf]
      %v2033 = vld [vmem:[%s1989 + $0xac] sm:$0xf]
      %v2034 = vld [vmem:[%s1989 + $0xb0] sm:$0xf]
      %v2035 = vld [vmem:[%s1989 + $0xb4] sm:$0xf]
      %v2036 = vld [vmem:[%s1989 + $0xb8] sm:$0xf]
      %v2037 = vld [vmem:[%s1989 + $0xbc] sm:$0xf]
      %s2038 = scalar_lea.vmem %s4, 5
      %v2039 = vld [vmem:[%s2038] sm:$0x1]
      %v2040 = vrot.slane %v1987, 7
      %v2041 = vrot.slane %v1988, 7
      %v2042 = vsel %vm322, %v2040, %v2041
      %v2043 = vsel %vm322, %v2041, %v2040
      %v2044 = vmul.f32 %v2043, %v259
      %v2045 = vmul.f32 %v2042, %v260
      %v2046 = vrot.slane %v1987, 1
      %v2047 = vrot.slane %v1988, 1
      %v2048 = vsel %vm329, %v2046, %v2047
      %v2049 = vsel %vm329, %v2047, %v2046
      %v2050 = vmul.f32 %v2048, %v269
      %v2051 = vmul.f32 %v2049, %v270
      %v2052 = vpack.c.bf16 %v2045, %v2044
      %v2053 = vpack.c.bf16 %v1988, %v1987
      %v2054 = vpack.c.bf16 %v2051, %v2050
      %v2056 = vlaneseq
      %v2057 = vshrl.u32 %v2056, 7
      %v2058 = vsub.s32 0, %v2057
      %v2059 = vrot.slane %v2039, %v2058
      %v2109 = vunpack.c.l.b16 %v1990
      %v2110 = vunpack.c.l.b16 %v1991
      %v2111 = vunpack.c.l.b16 %v1992
      %v2112 = vunpack.c.l.b16 %v1993
      %v2113 = vunpack.c.l.b16 %v1994
      %v2114 = vunpack.c.l.b16 %v1995
      %v2115 = vunpack.c.l.b16 %v1996
      %v2116 = vunpack.c.l.b16 %v1997
      %v2117 = vunpack.c.l.b16 %v1998
      %v2118 = vunpack.c.l.b16 %v1999
      %v2119 = vunpack.c.l.b16 %v2000
      %v2120 = vunpack.c.l.b16 %v2001
      %v2121 = vunpack.c.l.b16 %v2002
      %v2122 = vunpack.c.l.b16 %v2003
      %v2123 = vunpack.c.l.b16 %v2004
      %v2124 = vunpack.c.l.b16 %v2005
      %v2125 = vunpack.c.l.b16 %v2006
      %v2126 = vunpack.c.l.b16 %v2007
      %v2127 = vunpack.c.l.b16 %v2008
      %v2128 = vunpack.c.l.b16 %v2009
      %v2129 = vunpack.c.l.b16 %v2010
      %v2130 = vunpack.c.l.b16 %v2011
      %v2131 = vunpack.c.l.b16 %v2012
      %v2132 = vunpack.c.l.b16 %v2013
      %v2133 = vunpack.c.l.b16 %v2014
      %v2134 = vunpack.c.l.b16 %v2015
      %v2135 = vunpack.c.l.b16 %v2016
      %v2136 = vunpack.c.l.b16 %v2017
      %v2137 = vunpack.c.l.b16 %v2018
      %v2138 = vunpack.c.l.b16 %v2019
      %v2139 = vunpack.c.l.b16 %v2020
      %v2140 = vunpack.c.l.b16 %v2021
      %v2141 = vunpack.c.l.b16 %v2022
      %v2142 = vunpack.c.l.b16 %v2023
      %v2143 = vunpack.c.l.b16 %v2024
      %v2144 = vunpack.c.l.b16 %v2025
      %v2145 = vunpack.c.l.b16 %v2026
      %v2146 = vunpack.c.l.b16 %v2027
      %v2147 = vunpack.c.l.b16 %v2028
      %v2148 = vunpack.c.l.b16 %v2029
      %v2149 = vunpack.c.l.b16 %v2030
      %v2150 = vunpack.c.l.b16 %v2031
      %v2151 = vunpack.c.l.b16 %v2032
      %v2152 = vunpack.c.l.b16 %v2033
      %v2153 = vunpack.c.l.b16 %v2034
      %v2154 = vunpack.c.l.b16 %v2035
      %v2155 = vunpack.c.l.b16 %v2036
      %v2156 = vunpack.c.l.b16 %v2037
      %v2157 = vpack.c.b16 %v2110, %v2109
      %v2158 = vpack.c.b16 %v2112, %v2111
      %v2159 = vpack.c.b16 %v2114, %v2113
      %v2160 = vpack.c.b16 %v2116, %v2115
      %v2161 = vpack.c.b16 %v2118, %v2117
      %v2162 = vpack.c.b16 %v2120, %v2119
      %v2163 = vpack.c.b16 %v2122, %v2121
      %v2164 = vpack.c.b16 %v2124, %v2123
      %v2165 = vpack.c.b16 %v2126, %v2125
      %v2166 = vpack.c.b16 %v2128, %v2127
      %v2167 = vpack.c.b16 %v2130, %v2129
      %v2168 = vpack.c.b16 %v2132, %v2131
      %v2169 = vpack.c.b16 %v2134, %v2133
      %v2170 = vpack.c.b16 %v2136, %v2135
      %v2171 = vpack.c.b16 %v2138, %v2137
      %v2172 = vpack.c.b16 %v2140, %v2139
      %v2173 = vpack.c.b16 %v2142, %v2141
      %v2174 = vpack.c.b16 %v2144, %v2143
      %v2175 = vpack.c.b16 %v2146, %v2145
      %v2176 = vpack.c.b16 %v2148, %v2147
      %v2177 = vpack.c.b16 %v2150, %v2149
      %v2178 = vpack.c.b16 %v2152, %v2151
      %v2179 = vpack.c.b16 %v2154, %v2153
      %v2180 = vpack.c.b16 %v2156, %v2155
      %2205 = vmatprep.subr.bf16.mxu0 0
      %2206 = vmatpush1.bf16.msra.mxu0 %v2157
      %2207 = vmatprep.subr.bf16.mxu0 0
      %2208 = vmatpush1.bf16.msra.mxu0 %v2158
      %2209 = vmatprep.subr.bf16.mxu0 0
      %2210 = vmatpush1.bf16.msra.mxu0 %v2159
      %2211 = vmatprep.subr.bf16.mxu0 0
      %2212 = vmatpush1.bf16.msra.mxu0 %v2160
      %2213 = vmatprep.subr.bf16.mxu0 0
      %2214 = vmatpush1.bf16.msra.mxu0 %v2161
      %2215 = vmatprep.subr.bf16.mxu0 0
      %2216 = vmatpush1.bf16.msra.mxu0 %v2162
      %2217 = vmatprep.subr.bf16.mxu0 0
      %2218 = vmatpush1.bf16.msra.mxu0 %v2163
      %2219 = vmatprep.subr.bf16.mxu0 0
      %2220 = vmatpush1.bf16.msra.mxu0 %v2164
      %2221 = vmatprep.subr.bf16.mxu0 0
      %2222 = vmatpush1.bf16.msra.mxu0 %v2165
      %2223 = vmatprep.subr.bf16.mxu0 0
      %2224 = vmatpush1.bf16.msra.mxu0 %v2166
      %2225 = vmatprep.subr.bf16.mxu0 0
      %2226 = vmatpush1.bf16.msra.mxu0 %v2167
      %2227 = vmatprep.subr.bf16.mxu0 0
      %2228 = vmatpush1.bf16.msra.mxu0 %v2168
      %2229 = vmatprep.subr.bf16.mxu0 0
      %2230 = vmatpush1.bf16.msra.mxu0 %v2169
      %2231 = vmatprep.subr.bf16.mxu0 0
      %2232 = vmatpush1.bf16.msra.mxu0 %v2170
      %2233 = vmatprep.subr.bf16.mxu0 0
      %2234 = vmatpush1.bf16.msra.mxu0 %v2171
      %2235 = vmatprep.subr.bf16.mxu0 0
      %2236 = vmatpush1.bf16.msra.mxu0 %v2172
      %2237 = vmatprep.mubr.bf16.mxu0 %v2053
      %2238 = vmatmul.mubr.bf16.gmra.mrb[0].mxu0 %v2052
      %v2239 = vpop.f32.mrb[0].mxu0
      %v2240 = vadd.f32 %v2059, %v2239
      %v2241 = vpop.f32.mrb[0].mxu0
      %v2242 = vpop.f32.mrb[0].mxu0
      %v2243 = vadd.f32 %v2059, %v2242
      %v2244 = vpop.f32.mrb[0].mxu0
      %2245 = vdwg.mxu0
      %2246 = vmatprep.subr.bf16.mxu0 0
      %2247 = vmatpush1.bf16.msra.mxu0 %v2173
      %2248 = vmatprep.subr.bf16.mxu0 0
      %2249 = vmatpush1.bf16.msra.mxu0 %v2174
      %2250 = vmatprep.subr.bf16.mxu0 0
      %2251 = vmatpush1.bf16.msra.mxu0 %v2175
      %2252 = vmatprep.subr.bf16.mxu0 0
      %2253 = vmatpush1.bf16.msra.mxu0 %v2176
      %2254 = vmatprep.subr.bf16.mxu0 0
      %2255 = vmatpush1.bf16.msra.mxu0 %v2177
      %2256 = vmatprep.subr.bf16.mxu0 0
      %2257 = vmatpush1.bf16.msra.mxu0 %v2178
      %2258 = vmatprep.subr.bf16.mxu0 0
      %2259 = vmatpush1.bf16.msra.mxu0 %v2179
      %2260 = vmatprep.subr.bf16.mxu0 0
      %2261 = vmatpush1.bf16.msra.mxu0 %v2180
      %2262 = vmatprep.subr.bf16.mxu0 0
      %2263 = vmatpush1.bf16.msra.mxu0 0
      %2264 = vmatprep.subr.bf16.mxu0 0
      %2265 = vmatpush1.bf16.msra.mxu0 0
      %2266 = vmatprep.subr.bf16.mxu0 0
      %2267 = vmatpush1.bf16.msra.mxu0 0
      %2268 = vmatprep.subr.bf16.mxu0 0
      %2269 = vmatpush1.bf16.msra.mxu0 0
      %2270 = vmatprep.subr.bf16.mxu0 0
      %2271 = vmatpush1.bf16.msra.mxu0 0
      %2272 = vmatprep.subr.bf16.mxu0 0
      %2273 = vmatpush1.bf16.msra.mxu0 0
      %2274 = vmatprep.subr.bf16.mxu0 0
      %2275 = vmatpush1.bf16.msra.mxu0 0
      %2276 = vmatprep.subr.bf16.mxu0 0
      %2277 = vmatpush1.bf16.msra.mxu0 0
      %2278 = vmatprep.mubr.bf16.mxu0 0
      %2279 = vmatmul.mubr.bf16.gmra.mrb[0].mxu0 %v2054
      %v2280 = vpop.f32.mrb[0].mxu0
      %v2281 = vadd.f32 %v2240, %v2280
      %v2282 = vpop.f32.mrb[0].mxu0
      %v2283 = vpop.f32.mrb[0].mxu0
      %v2284 = vadd.f32 %v2243, %v2283
      %v2285 = vpop.f32.mrb[0].mxu0
      %2286 = vdwg.mxu0
      %s2287 = scalar_lea.vmem %s5, 5
      %v2288 = vld [vmem:[%s2287] sm:$0x1]
      %s2289 = scalar_lea.vmem %s6, 5
      %v2290 = vld [vmem:[%s2289] sm:$0x1]
      %v2291 = vadd.f32 %v2281, %v2284
      %v2292 = vrot.slane %v2291, 4
      %v2293 = vadd.f32 %v2291, %v2292
      %v2294 = vrot.slane %v2293, 2
      %v2295 = vadd.f32 %v2293, %v2294
      %v2296 = vrot.slane %v2295, 1
      %v2297 = vadd.f32 %v2295, %v2296
      %v2298 = vmul.f32 %v2297, %v578
      %v2299 = vsub.f32 %v2281, %v2298
      %v2300 = vsub.f32 %v2284, %v2298
      %v2301 = vmul.f32 %v2299, %v2299
      %v2302 = vmul.f32 %v2300, %v2300
      %v2303 = vadd.f32 %v2301, %v2302
      %v2304 = vrot.slane %v2303, 4
      %v2305 = vadd.f32 %v2303, %v2304
      %v2306 = vrot.slane %v2305, 2
      %v2307 = vadd.f32 %v2305, %v2306
      %v2308 = vrot.slane %v2307, 1
      %v2309 = vadd.f32 %v2307, %v2308
      %v2310 = vmul.f32 %v2309, %v578
      %v2311 = vadd.f32 %v2310, 1e-05
      %v2312 = vrsqrt.pop %v2311
      %v2313 = vmul.f32 %v2288, %v2312
      %v2315 = vlaneseq
      %v2316 = vshrl.u32 %v2315, 7
      %v2317 = vsub.s32 0, %v2316
      %v2318 = vrot.slane %v2313, %v2317
      %v2320 = vmul.f32 %v2299, %v2318
      %v2321 = vmul.f32 %v2300, %v2318
      %v2323 = vlaneseq
      %v2324 = vshrl.u32 %v2323, 7
      %v2325 = vsub.s32 0, %v2324
      %v2326 = vrot.slane %v2290, %v2325
      %v2328 = vadd.f32 %v2320, %v2326
      %v2329 = vadd.f32 %v2321, %v2326
      %v2330 = vadd.f32 %v2328, %v1644
      %v2331 = vadd.f32 %v2329, %v1645
      %v2332 = vmax.f32 %v2330, 0.0
      %v2333 = vmax.f32 %v2331, 0.0
      %v2334 = vpack.c.bf16 %v2333, %v2332
      %2335 = vst [vmem:[#allocation2] sm:$0xff] %v2334
    $region61: #{tpu_custom_call.1} parent=1 // pred_fallthru
      _
    %v2336 = vld [vmem:[#allocation2] sm:$0xff]
    %v2337 = vld [vmem:[#allocation11] sm:$0xf]
    %v2338 = vld [vmem:[#allocation11 + $0x4] sm:$0xf]
    %v2339 = vld [vmem:[#allocation11 + $0x8] sm:$0xf]
    %v2340 = vld [vmem:[#allocation11 + $0xc] sm:$0xf]
    %v2341 = vld [vmem:[#allocation11 + $0x10] sm:$0xf]
    %v2342 = vld [vmem:[#allocation11 + $0x14] sm:$0xf]
    %v2343 = vld [vmem:[#allocation11 + $0x18] sm:$0xf]
    %v2344 = vld [vmem:[#allocation11 + $0x1c] sm:$0xf]
    %v2345 = vld [vmem:[#allocation11 + $0x20] sm:$0xf]
    %v2346 = vld [vmem:[#allocation11 + $0x24] sm:$0xf]
    %v2347 = vld [vmem:[#allocation11 + $0x28] sm:$0xf]
    %v2348 = vld [vmem:[#allocation11 + $0x2c] sm:$0xf]
    %v2349 = vld [vmem:[#allocation11 + $0x30] sm:$0xf]
    %v2350 = vld [vmem:[#allocation11 + $0x34] sm:$0xf]
    %v2351 = vld [vmem:[#allocation11 + $0x38] sm:$0xf]
    %v2352 = vld [vmem:[#allocation11 + $0x3c] sm:$0xf]
    %v2353 = vld [vmem:[%s8] sm:$0x1]
    %v2355 = vlaneseq
    %v2356 = vshrl.u32 %v2355, 7
    %v2357 = vsub.s32 0, %v2356
    %v2358 = vrot.slane %v2353, %v2357
    %v2376 = vunpack.c.l.b16 %v2337
    %v2377 = vunpack.c.l.b16 %v2338
    %v2378 = vunpack.c.l.b16 %v2339
    %v2379 = vunpack.c.l.b16 %v2340
    %v2380 = vunpack.c.l.b16 %v2341
    %v2381 = vunpack.c.l.b16 %v2342
    %v2382 = vunpack.c.l.b16 %v2343
    %v2383 = vunpack.c.l.b16 %v2344
    %v2384 = vunpack.c.l.b16 %v2345
    %v2385 = vunpack.c.l.b16 %v2346
    %v2386 = vunpack.c.l.b16 %v2347
    %v2387 = vunpack.c.l.b16 %v2348
    %v2388 = vunpack.c.l.b16 %v2349
    %v2389 = vunpack.c.l.b16 %v2350
    %v2390 = vunpack.c.l.b16 %v2351
    %v2391 = vunpack.c.l.b16 %v2352
    %v2392 = vpack.c.b16 %v2377, %v2376
    %v2393 = vpack.c.b16 %v2379, %v2378
    %v2394 = vpack.c.b16 %v2381, %v2380
    %v2395 = vpack.c.b16 %v2383, %v2382
    %v2396 = vpack.c.b16 %v2385, %v2384
    %v2397 = vpack.c.b16 %v2387, %v2386
    %v2398 = vpack.c.b16 %v2389, %v2388
    %v2399 = vpack.c.b16 %v2391, %v2390
    %2408 = vmatprep.subr.bf16.mxu0 0
    %2409 = vmatpush1.bf16.msra.mxu0 %v2392
    %2410 = vmatprep.subr.bf16.mxu0 0
    %2411 = vmatpush1.bf16.msra.mxu0 %v2393
    %2412 = vmatprep.subr.bf16.mxu0 0
    %2413 = vmatpush1.bf16.msra.mxu0 %v2394
    %2414 = vmatprep.subr.bf16.mxu0 0
    %2415 = vmatpush1.bf16.msra.mxu0 %v2395
    %2416 = vmatprep.subr.bf16.mxu0 0
    %2417 = vmatpush1.bf16.msra.mxu0 %v2396
    %2418 = vmatprep.subr.bf16.mxu0 0
    %2419 = vmatpush1.bf16.msra.mxu0 %v2397
    %2420 = vmatprep.subr.bf16.mxu0 0
    %2421 = vmatpush1.bf16.msra.mxu0 %v2398
    %2422 = vmatprep.subr.bf16.mxu0 0
    %2423 = vmatpush1.bf16.msra.mxu0 %v2399
    %2424 = vmatprep.subr.bf16.mxu0 0
    %2425 = vmatpush1.bf16.msra.mxu0 0
    %2426 = vmatprep.subr.bf16.mxu0 0
    %2427 = vmatpush1.bf16.msra.mxu0 0
    %2428 = vmatprep.subr.bf16.mxu0 0
    %2429 = vmatpush1.bf16.msra.mxu0 0
    %2430 = vmatprep.subr.bf16.mxu0 0
    %2431 = vmatpush1.bf16.msra.mxu0 0
    %2432 = vmatprep.subr.bf16.mxu0 0
    %2433 = vmatpush1.bf16.msra.mxu0 0
    %2434 = vmatprep.subr.bf16.mxu0 0
    %2435 = vmatpush1.bf16.msra.mxu0 0
    %2436 = vmatprep.subr.bf16.mxu0 0
    %2437 = vmatpush1.bf16.msra.mxu0 0
    %2438 = vmatprep.subr.bf16.mxu0 0
    %2439 = vmatpush1.bf16.msra.mxu0 0
    %2440 = vmatprep.mubr.bf16.mxu0 0
    %2441 = vmatmul.mubr.bf16.gmra.mrb[0].mxu0 %v2336
    %v2442 = vpop.f32.mrb[0].mxu0
    %v2443 = vadd.f32 %v2358, %v2442
    %v2444 = vpop.f32.mrb[0].mxu0
    %v2445 = vpop.f32.mrb[0].mxu0
    %v2446 = vadd.f32 %v2358, %v2445
    %v2447 = vpop.f32.mrb[0].mxu0
    %2448 = vdwg.mxu0
    %2449 = vst [vmem:[#allocation12] sm:$0xff] %v2443
    %2450 = vst [vmem:[#allocation12 + $0x8] sm:$0xff] %v2446
    // Predicated region
    $region62: #{tpu_custom_call.1} parent=1 // pred_check
      _
    $region63: #{tpu_custom_call.1} parent=1 // pred_check_branch
      %2452 = sbr.rel (0) target = $region65
    $region64: #{tpu_custom_call.1} parent=1 // pred_region
      %s2454 = ssub.s32 256, 256
      %2455 = vsyncadd [#allocation5], %s2454
      %s2456 = sshll.u32 [#allocation12], 4
      %s2457 = int_to_ptr.vmem [resolvable:$true] %s2456
      %2462 = dma.vmem_to_hbm [thread:$0]  %s2457, 256, %s9, [#allocation5], 128, 128, 8
    $region65: #{tpu_custom_call.1} parent=1 // pred_fallthru
      _
    // Predicated region
    $region66: #{tpu_custom_call.1} parent=1 // pred_check
      _
    $region67: #{tpu_custom_call.1} parent=1 // pred_check_branch
      %2464 = sbr.rel (0) target = $region69
    $region68: #{tpu_custom_call.1} parent=1 // pred_region
      %2465 = dma.done [#allocation5], 256
    $region69: #{tpu_custom_call.1} parent=1 // pred_fallthru
      _
    %2466 = vsyncpa [#allocation4], 1
    %2467 = vsyncpa [#allocation7], 1
    %2468 = vsyncpa [#allocation10], 1
    %2469 = vsyncpa [#allocation5], 1

</llo_original>
